<compile_context>
chip_gen: v7x
topology: tpu7x:2x2x1
jax: 0.10.0
libtpu: 0.0.40
codegen_flags: <defaults>
</compile_context>

<pallas_src>
import functools

import jax
import jax.numpy as jnp
from jax import lax
from jax.experimental import pallas as pl
from jax.experimental.pallas import tpu as pltpu

_SQRT_2_OVER_PI = 0.7978845608028654
_GELU_C1 = 0.044715


def _gelu_tanh(h, dtype):
    """tanh-approximation GELU computed in `dtype` (EUP tanh, cheap VALU)."""
    hg = h.astype(dtype)
    c0 = jnp.asarray(_SQRT_2_OVER_PI, dtype)
    c1 = jnp.asarray(_GELU_C1, dtype)
    half = jnp.asarray(0.5, dtype)
    one = jnp.asarray(1.0, dtype)
    return half * hg * (one + jnp.tanh(c0 * (hg + c1 * hg * hg * hg)))


def _multitask_head_kernel(x_ref, gamma_ref, beta_ref, w1_ref, b1_ref,
                           w2_ref, b2_ref, o_ref, *, eps, bf16_act):
    # --- LayerNorm over last dim (biased variance, like torch.nn.LayerNorm) ---
    # Note: zero-padded batch rows give var=0 -> rsqrt(eps); finite, and they
    # are sliced away in the wrapper, so this is intentional and safe.
    x = x_ref[...].astype(jnp.float32)                          # (bm, F)
    mean = jnp.mean(x, axis=-1, keepdims=True)
    var = jnp.mean(jnp.square(x - mean), axis=-1, keepdims=True)
    inv = lax.rsqrt(var + eps)                                   # (bm, 1)
    xn = (x - mean) * (inv * gamma_ref[...]) + beta_ref[...]     # (bm, F)

    # --- Dropout(p=0.5): identity in eval mode ---

    # --- Linear(in_features -> 512): bf16 MXU inputs, f32 accumulation ---
    h = jnp.dot(xn.astype(jnp.bfloat16), w1_ref[...],
                preferred_element_type=jnp.float32)
    h = h + b1_ref[...]                                          # (bm, H) f32

    # --- GELU (tanh approx).  bf16 elementwise on v6e/v7x, f32 on v5e. ---
    act_dtype = jnp.bfloat16 if bf16_act else jnp.float32
    g = _gelu_tanh(h, act_dtype)

    # --- Dropout(p=0.3): identity in eval mode ---

    # --- Linear(512 -> C_pad): bf16 MXU inputs, f32 accumulation ---
    out = jnp.dot(g.astype(jnp.bfloat16), w2_ref[...],
                  preferred_element_type=jnp.float32)
    out = out + b2_ref[...]                                      # (bm, C_pad)
    o_ref[...] = out.astype(o_ref.dtype)


def _has_bf16_vpu():
    """True on chips with bf16 VALU/EUP (v6e, v7x). Safe f32 fallback."""
    try:
        kind = jax.devices()[0].device_kind.lower()
    except Exception:
        return False
    # v2/v3/v4 and v5e ("v5 lite") lack bf16 VPU/EUP.
    no_bf16 = ("v2", "v3", "v4", "v5 lite", "v5lite", "v5e")
    return not any(tag in kind for tag in no_bf16)


def _pick_block_m(batch):
    """Largest block_m in {512,256,128} that still yields >= 2 grid steps
    (keeps both v7x TensorCores busy); 128 for tiny batches."""
    for bm in (512, 256, 128):
        if pl.cdiv(batch, bm) >= 2:
            return bm
    return 128


def multitask_head_forward(x, params, *, block_m=None, eps=1e-5, bf16_act=None):
    """x: (B, in_features) float32.  Returns logits (B, num_classes) float32."""
    gamma, beta, w1, b1, w2, b2 = params
    B, F = x.shape
    H = w1.shape[1]
    C = w2.shape[1]

    if block_m is None:
        block_m = _pick_block_m(B)
    if bf16_act is None:
        bf16_act = _has_bf16_vpu()

    # ---- lane-dense output: pad num_classes up to a multiple of 128 ----
    C_pad = pl.cdiv(C, 128) * 128
    if C_pad != C:
        w2 = jnp.pad(w2, ((0, 0), (0, C_pad - C)))
        b2 = jnp.pad(b2, ((0, C_pad - C),))

    # ---- pad batch so it tiles by block_m ----
    B_pad = pl.cdiv(B, block_m) * block_m
    if B_pad != B:
        x = jnp.pad(x, ((0, B_pad - B), (0, 0)))

    # bf16 weights: half the DMA bytes / VMEM residency; f32 accumulation.
    w1_bf = w1.astype(jnp.bfloat16)
    w2_bf = w2.astype(jnp.bfloat16)

    # 2-D parameter views so everything lives happily in VMEM tiles.
    gamma2 = gamma.reshape(1, F).astype(jnp.float32)
    beta2 = beta.reshape(1, F).astype(jnp.float32)
    b1_2 = b1.reshape(1, H).astype(jnp.float32)
    b2_2 = b2.reshape(1, C_pad).astype(jnp.float32)

    grid = (B_pad // block_m,)

    # Grid-invariant operands (constant index_map): single-buffer them.
    const_buf = pl.Buffered(1)

    # Advisory cost estimate: 2 matmuls + LN/GELU elementwise work.
    flops = 2 * B_pad * (F * H + H * C_pad) + 10 * B_pad * (F + H)
    bytes_accessed = (x.size * x.dtype.itemsize
                      + w1_bf.size * 2 + w2_bf.size * 2
                      + (gamma2.size + beta2.size + b1_2.size + b2_2.size) * 4
                      + B_pad * C_pad * 4)
    cost = pl.CostEstimate(flops=flops,
                           transcendentals=B_pad * H,      # one tanh per h elem
                           bytes_accessed=bytes_accessed)

    kernel = functools.partial(_multitask_head_kernel, eps=eps,
                               bf16_act=bf16_act)

    out_pad = pl.pallas_call(
        kernel,
        out_shape=jax.ShapeDtypeStruct((B_pad, C_pad), jnp.float32),
        grid_spec=pltpu.PrefetchScalarGridSpec(
            num_scalar_prefetch=0,
            grid=grid,
            in_specs=[
                pl.BlockSpec((block_m, F), lambda i: (i, 0)),          # x tile
                pl.BlockSpec((1, F), lambda i: (0, 0),
                             pipeline_mode=const_buf),                 # gamma
                pl.BlockSpec((1, F), lambda i: (0, 0),
                             pipeline_mode=const_buf),                 # beta
                pl.BlockSpec((F, H), lambda i: (0, 0),
                             pipeline_mode=const_buf),                 # W1 bf16
                pl.BlockSpec((1, H), lambda i: (0, 0),
                             pipeline_mode=const_buf),                 # b1
                pl.BlockSpec((H, C_pad), lambda i: (0, 0),
                             pipeline_mode=const_buf),                 # W2 bf16
                pl.BlockSpec((1, C_pad), lambda i: (0, 0),
                             pipeline_mode=const_buf),                 # b2
            ],
            out_specs=pl.BlockSpec((block_m, C_pad), lambda i: (i, 0)),
        ),
        compiler_params=pltpu.CompilerParams(
            dimension_semantics=("parallel",)),
        cost_estimate=cost,
    )(x, gamma2, beta2, w1_bf, b1_2, w2_bf, b2_2)

    # Strip batch and class padding outside the kernel.
    return out_pad[:B, :C]


def init_params(key, in_features, hidden, num_classes):
    """Deterministic synthetic parameters matching the module's shapes."""
    k1, k2, k3, k4 = jax.random.split(key, 4)
    gamma = jnp.ones((in_features,), jnp.float32)
    beta = jnp.zeros((in_features,), jnp.float32)
    # nn.Linear default init scale ~ U(-1/sqrt(fan_in), 1/sqrt(fan_in))
    w1 = jax.random.uniform(k1, (in_features, hidden), jnp.float32,
                            -1.0, 1.0) / jnp.sqrt(in_features)
    b1 = jax.random.uniform(k2, (hidden,), jnp.float32,
                            -1.0, 1.0) / jnp.sqrt(in_features)
    w2 = jax.random.uniform(k3, (hidden, num_classes), jnp.float32,
                            -1.0, 1.0) / jnp.sqrt(hidden)
    b2 = jax.random.uniform(k4, (num_classes,), jnp.float32,
                            -1.0, 1.0) / jnp.sqrt(hidden)
    return gamma, beta, w1, b1, w2, b2


def reference_forward(x, params, *, eps=1e-5, bf16_act=False):
    """Pure-JAX reference of the eval-mode forward.

    Mirrors the kernel's precision strategy (bf16 MXU inputs, f32 accumulation,
    tanh GELU, optional bf16 activation path) so the comparison is exact.
    NOTE: this intentionally diverges from the fp32/erf PyTorch module at the
    ~1e-3 logit level (documented precision trade-off).
    """
    gamma, beta, w1, b1, w2, b2 = params
    mean = jnp.mean(x, axis=-1, keepdims=True)
    var = jnp.mean(jnp.square(x - mean), axis=-1, keepdims=True)
    xn = (x - mean) * lax.rsqrt(var + eps) * gamma + beta
    h = jnp.dot(xn.astype(jnp.bfloat16), w1.astype(jnp.bfloat16),
                preferred_element_type=jnp.float32) + b1
    g = _gelu_tanh(h, jnp.bfloat16 if bf16_act else jnp.float32)
    out = jnp.dot(g.astype(jnp.bfloat16), w2.astype(jnp.bfloat16),
                  preferred_element_type=jnp.float32) + b2
    return out


if __name__ == "__main__":
    key = jax.random.PRNGKey(0)
    kx, kp = jax.random.split(key)

    # Demo shapes consistent with the module: hidden=512 is fixed by the
    # module, in_features=256, num_classes=10.  Batch 512 -> block_m=256,
    # grid of 2 "parallel" steps (keeps both v7x TensorCores busy).
    B, IN_FEATURES, HIDDEN, NUM_CLASSES = 512, 256, 512, 10

    x = jax.random.normal(kx, (B, IN_FEATURES), jnp.float32)
    params = init_params(kp, IN_FEATURES, HIDDEN, NUM_CLASSES)

    bf16_act = _has_bf16_vpu()

    out = multitask_head_forward(x, params, bf16_act=bf16_act)
    out = jax.block_until_ready(out)

    ref = reference_forward(x, params, bf16_act=bf16_act)
    assert out.shape == (B, NUM_CLASSES)
    max_err = float(jnp.max(jnp.abs(out - ref)))
    assert jnp.allclose(out, ref, atol=5e-3, rtol=5e-3), (
        f"mismatch vs reference, max|err|={max_err}")

    print("KERNEL_OK")
</pallas_src>

<mosaic_0001>
module attributes {stable_mosaic.version = 11 : i64} {
  func.func @_multitask_head_kernel(%arg0: i32, %arg1: memref<256x256xf32, #tpu.memory_space<vmem>>, %arg2: memref<1x256xf32, #tpu.memory_space<vmem>>, %arg3: memref<1x256xf32, #tpu.memory_space<vmem>>, %arg4: memref<256x512xbf16, #tpu.memory_space<vmem>>, %arg5: memref<1x512xf32, #tpu.memory_space<vmem>>, %arg6: memref<512x128xbf16, #tpu.memory_space<vmem>>, %arg7: memref<1x128xf32, #tpu.memory_space<vmem>>, %arg8: memref<256x128xf32, #tpu.memory_space<vmem>>) attributes {dimension_semantics = [#tpu.dimension_semantics<parallel>], iteration_bounds = array<i64: 2>, scalar_prefetch = 0 : i64, scratch_operands = 0 : i64, tpu.core_type = #tpu.core_type<tc>, window_params = [{transform_indices = @transform_0, window_bounds = array<i64: 256, 256>}, {pipeline_mode = #tpu.pipeline_mode<synchronous>, transform_indices = @transform_1, window_bounds = array<i64: 1, 256>}, {pipeline_mode = #tpu.pipeline_mode<synchronous>, transform_indices = @transform_2, window_bounds = array<i64: 1, 256>}, {pipeline_mode = #tpu.pipeline_mode<synchronous>, transform_indices = @transform_3, window_bounds = array<i64: 256, 512>}, {pipeline_mode = #tpu.pipeline_mode<synchronous>, transform_indices = @transform_4, window_bounds = array<i64: 1, 512>}, {pipeline_mode = #tpu.pipeline_mode<synchronous>, transform_indices = @transform_5, window_bounds = array<i64: 512, 128>}, {pipeline_mode = #tpu.pipeline_mode<synchronous>, transform_indices = @transform_6, window_bounds = array<i64: 1, 128>}, {transform_indices = @transform_7, window_bounds = array<i64: 256, 128>}]} {
    %c0 = arith.constant 0 : index
    %c0_0 = arith.constant 0 : index
    %0 = vector.load %arg1[%c0, %c0_0] : memref<256x256xf32, #tpu.memory_space<vmem>>, vector<256x256xf32>
    %cst = arith.constant dense<0.000000e+00> : vector<256xf32>
    %1 = vector.multi_reduction <add>, %0, %cst [1] : vector<256x256xf32> to vector<256xf32>
    %2 = vector.shape_cast %1 : vector<256xf32> to vector<256x1xf32>
    %cst_1 = arith.constant 2.560000e+02 : f32
    %3 = vector.broadcast %cst_1 : f32 to vector<256x1xf32>
    %4 = arith.divf %2, %3 : vector<256x1xf32>
    %5 = vector.broadcast %4 : vector<256x1xf32> to vector<256x256xf32>
    %6 = arith.subf %0, %5 : vector<256x256xf32>
    %7 = arith.mulf %6, %6 : vector<256x256xf32>
    %cst_2 = arith.constant dense<0.000000e+00> : vector<256xf32>
    %8 = vector.multi_reduction <add>, %7, %cst_2 [1] : vector<256x256xf32> to vector<256xf32>
    %9 = vector.shape_cast %8 : vector<256xf32> to vector<256x1xf32>
    %cst_3 = arith.constant 2.560000e+02 : f32
    %10 = vector.broadcast %cst_3 : f32 to vector<256x1xf32>
    %11 = arith.divf %9, %10 : vector<256x1xf32>
    %cst_4 = arith.constant 9.99999974E-6 : f32
    %12 = vector.broadcast %cst_4 : f32 to vector<256x1xf32>
    %13 = arith.addf %11, %12 : vector<256x1xf32>
    %14 = math.rsqrt %13 : vector<256x1xf32>
    %15 = vector.broadcast %4 : vector<256x1xf32> to vector<256x256xf32>
    %16 = arith.subf %0, %15 : vector<256x256xf32>
    %c0_5 = arith.constant 0 : index
    %c0_6 = arith.constant 0 : index
    %17 = vector.load %arg2[%c0_5, %c0_6] : memref<1x256xf32, #tpu.memory_space<vmem>>, vector<1x256xf32>
    %18 = vector.broadcast %14 : vector<256x1xf32> to vector<256x256xf32>
    %19 = vector.broadcast %17 : vector<1x256xf32> to vector<256x256xf32>
    %20 = arith.mulf %18, %19 : vector<256x256xf32>
    %21 = arith.mulf %16, %20 : vector<256x256xf32>
    %c0_7 = arith.constant 0 : index
    %c0_8 = arith.constant 0 : index
    %22 = vector.load %arg3[%c0_7, %c0_8] : memref<1x256xf32, #tpu.memory_space<vmem>>, vector<1x256xf32>
    %23 = vector.broadcast %22 : vector<1x256xf32> to vector<256x256xf32>
    %24 = arith.addf %21, %23 : vector<256x256xf32>
    %25 = arith.truncf %24 : vector<256x256xf32> to vector<256x256xbf16>
    %c0_9 = arith.constant 0 : index
    %c0_10 = arith.constant 0 : index
    %26 = vector.load %arg4[%c0_9, %c0_10] : memref<256x512xbf16, #tpu.memory_space<vmem>>, vector<256x512xbf16>
    %cst_11 = arith.constant dense<0.000000e+00> : vector<256x512xf32>
    %27 = tpu.matmul %25, %26, %cst_11 {dimension_numbers = #tpu.dot_dimension_numbers<[1], [0], [0], [1], [0, 0, 1, 1], [], []>} : vector<256x256xbf16>, vector<256x512xbf16>, vector<256x512xf32> -> vector<256x512xf32>
    %c0_12 = arith.constant 0 : index
    %c0_13 = arith.constant 0 : index
    %28 = vector.load %arg5[%c0_12, %c0_13] : memref<1x512xf32, #tpu.memory_space<vmem>>, vector<1x512xf32>
    %29 = vector.broadcast %28 : vector<1x512xf32> to vector<256x512xf32>
    %30 = arith.addf %27, %29 : vector<256x512xf32>
    %31 = arith.truncf %30 : vector<256x512xf32> to vector<256x512xbf16>
    %cst_14 = arith.constant 5.000000e-01 : bf16
    %32 = vector.broadcast %cst_14 : bf16 to vector<256x512xbf16>
    %33 = arith.mulf %32, %31 : vector<256x512xbf16>
    %cst_15 = arith.constant 4.467770e-02 : bf16
    %34 = vector.broadcast %cst_15 : bf16 to vector<256x512xbf16>
    %35 = arith.mulf %34, %31 : vector<256x512xbf16>
    %36 = arith.mulf %35, %31 : vector<256x512xbf16>
    %37 = arith.mulf %36, %31 : vector<256x512xbf16>
    %38 = arith.addf %31, %37 : vector<256x512xbf16>
    %cst_16 = arith.constant 7.968750e-01 : bf16
    %39 = vector.broadcast %cst_16 : bf16 to vector<256x512xbf16>
    %40 = arith.mulf %39, %38 : vector<256x512xbf16>
    %41 = math.tanh %40 : vector<256x512xbf16>
    %cst_17 = arith.constant 1.000000e+00 : bf16
    %42 = vector.broadcast %cst_17 : bf16 to vector<256x512xbf16>
    %43 = arith.addf %42, %41 : vector<256x512xbf16>
    %44 = arith.mulf %33, %43 : vector<256x512xbf16>
    %c0_18 = arith.constant 0 : index
    %c0_19 = arith.constant 0 : index
    %45 = vector.load %arg6[%c0_18, %c0_19] : memref<512x128xbf16, #tpu.memory_space<vmem>>, vector<512x128xbf16>
    %cst_20 = arith.constant dense<0.000000e+00> : vector<256x128xf32>
    %46 = tpu.matmul %44, %45, %cst_20 {dimension_numbers = #tpu.dot_dimension_numbers<[1], [0], [0], [1], [0, 0, 1, 1], [], []>} : vector<256x512xbf16>, vector<512x128xbf16>, vector<256x128xf32> -> vector<256x128xf32>
    %c0_21 = arith.constant 0 : index
    %c0_22 = arith.constant 0 : index
    %47 = vector.load %arg7[%c0_21, %c0_22] : memref<1x128xf32, #tpu.memory_space<vmem>>, vector<1x128xf32>
    %48 = vector.broadcast %47 : vector<1x128xf32> to vector<256x128xf32>
    %49 = arith.addf %46, %48 : vector<256x128xf32>
    %c0_23 = arith.constant 0 : index
    %c0_24 = arith.constant 0 : index
    %50 = vector.load %arg8[%c0_23, %c0_24] : memref<256x128xf32, #tpu.memory_space<vmem>>, vector<256x128xf32>
    tpu.vector_store %arg8[%c0_23, %c0_24], %49 {strides = array<i32>} : memref<256x128xf32, #tpu.memory_space<vmem>>, vector<256x128xf32>,
    return
  }
  func.func @transform_0(%arg0: i32) -> (i32, i32) {
    %c0_i32 = arith.constant 0 : i32
    %c0_i32_0 = arith.constant 0 : i32
    return %arg0, %c0_i32 : i32, i32
  }
  func.func @transform_1(%arg0: i32) -> (i32, i32) {
    %c0_i32 = arith.constant 0 : i32
    %c0_i32_0 = arith.constant 0 : i32
    %c0_i32_1 = arith.constant 0 : i32
    return %c0_i32, %c0_i32_0 : i32, i32
  }
  func.func @transform_2(%arg0: i32) -> (i32, i32) {
    %c0_i32 = arith.constant 0 : i32
    %c0_i32_0 = arith.constant 0 : i32
    %c0_i32_1 = arith.constant 0 : i32
    return %c0_i32, %c0_i32_0 : i32, i32
  }
  func.func @transform_3(%arg0: i32) -> (i32, i32) {
    %c0_i32 = arith.constant 0 : i32
    %c0_i32_0 = arith.constant 0 : i32
    %c0_i32_1 = arith.constant 0 : i32
    return %c0_i32, %c0_i32_0 : i32, i32
  }
  func.func @transform_4(%arg0: i32) -> (i32, i32) {
    %c0_i32 = arith.constant 0 : i32
    %c0_i32_0 = arith.constant 0 : i32
    %c0_i32_1 = arith.constant 0 : i32
    return %c0_i32, %c0_i32_0 : i32, i32
  }
  func.func @transform_5(%arg0: i32) -> (i32, i32) {
    %c0_i32 = arith.constant 0 : i32
    %c0_i32_0 = arith.constant 0 : i32
    %c0_i32_1 = arith.constant 0 : i32
    return %c0_i32, %c0_i32_0 : i32, i32
  }
  func.func @transform_6(%arg0: i32) -> (i32, i32) {
    %c0_i32 = arith.constant 0 : i32
    %c0_i32_0 = arith.constant 0 : i32
    %c0_i32_1 = arith.constant 0 : i32
    return %c0_i32, %c0_i32_0 : i32, i32
  }
  func.func @transform_7(%arg0: i32) -> (i32, i32) {
    %c0_i32 = arith.constant 0 : i32
    %c0_i32_0 = arith.constant 0 : i32
    return %arg0, %c0_i32 : i32, i32
  }
}

</mosaic_0001>

<llo_original>
// kernel: tpu_custom_call.1
$region0: #{tpu_custom_call.1}
  #allocation0 [shape = 'u32[]', space=smem, size = 0x4, offset = 0x4, fixed_abs, tag = 'smem constant byte address 0x4 - core index']
  #allocation1 [shape = 'u32[144,128]{1,0:T(1,128)}', space=vmem, size = 0x12000, scoped, tag = 'internal scratch']
  %s0 = inlined_call_operand.hbm [shape: f32[512,256], index: 0, kind: input, shape index: {}]
  %s1 = inlined_call_operand.vmem [shape: f32[1,256], index: 1, kind: input, shape index: {}]
  %s2 = inlined_call_operand.hbm [shape: f32[1,256], index: 2, kind: input, shape index: {}]
  %s3 = inlined_call_operand.hbm [shape: bf16[256,512], index: 3, kind: input, shape index: {}]
  %s4 = inlined_call_operand.vmem [shape: f32[1,512], index: 4, kind: input, shape index: {}]
  %s5 = inlined_call_operand.hbm [shape: bf16[512,128], index: 5, kind: input, shape index: {}]
  %s6 = inlined_call_operand.vmem [shape: f32[1,128], index: 6, kind: input, shape index: {}]
  %s7 = inlined_call_operand.hbm [shape: f32[512,128], index: 7, kind: output, shape index: {}]
  %s8 = sld [smem:[#allocation0]]
  $region77: #{tpu_custom_call.1} parent=0
    _
  %s10 = ssub.s32 1, %s8
  %s11 = scalar_select 0, %s10, %s8
  $region1: #{tpu_custom_call.1} parent=0
    #allocation2 [shape = 'u8[524288]{0}', space=vmem, size = 0x80000, scoped, tag = 'input window, operand 0']
    #allocation3 [shape = 's32[2]{0}', space=sflag, size = 0x8, scoped, tag = 'scoped memory for tpu_custom_call.1']
    #allocation4 [shape = 's32[2]{0}', space=sflag, size = 0x8, scoped, tag = 'scoped memory for tpu_custom_call.1']
    #allocation5 [shape = 'u8[1024]{0}', space=vmem, size = 0x400, scoped, tag = 'input window, operand 2, single buffered']
    #allocation6 [shape = 's32[1]{0}', space=sflag, size = 0x4, scoped, tag = 'scoped memory for tpu_custom_call.1']
    #allocation7 [shape = 'u8[262144]{0}', space=vmem, size = 0x40000, scoped, tag = 'input window, operand 3, single buffered']
    #allocation8 [shape = 'u8[131072]{0}', space=vmem, size = 0x20000, scoped, tag = 'input window, operand 5, single buffered']
    #allocation9 [shape = 's32[1]{0}', space=sflag, size = 0x4, scoped, tag = 'scoped memory for tpu_custom_call.1']
    #allocation10 [shape = 'u8[262144]{0}', space=vmem, size = 0x40000, scoped, tag = 'output window, operand 0']
    %12 = vsyncpa [#allocation3], 0
    %s13 = scalar_lea.sflag [#allocation3], 1
    %14 = vsyncpa %s13, 0
    %15 = vsyncpa [#allocation6], 0
    %16 = vsyncpa [#allocation9], 0
    %17 = vsyncpa [#allocation4], 0
    %s18 = scalar_lea.sflag [#allocation4], 1
    %19 = vsyncpa %s18, 0
    loop: start=0, step=1, limit=4
    $region2: #{tpu_custom_call.1} parent=1 // loop_pre_header
      _
    $region3: #{tpu_custom_call.1} parent=1 // loop_header
      %s21 = sphi 0, %s25
      %p22 = scmp.ge.s32.totalorder %s21, 4
      %s31 = sphi 0, %s33
      %s34 = sphi 0, %s31
      %s35 = sphi 0, %s34
      %s51 = sphi 0, %s35
      %s55 = sphi 0, %s55
      %s57 = sphi 0, %s55
      %s58 = sphi 0, %s57
      %s72 = sphi 0, %s58
      %s76 = sphi 0, %s76
      %s78 = sphi 0, %s76
      %s79 = sphi 0, %s78
      %s93 = sphi 0, %s79
      %s97 = sphi 0, %s97
      %s99 = sphi 0, %s97
      %s100 = sphi 0, %s99
      %s114 = sphi 0, %s100
      %s118 = sphi 0, %s118
      %s120 = sphi 0, %s118
      %s121 = sphi 0, %s120
      %s135 = sphi 0, %s121
      %s139 = sphi 0, %s139
      %s141 = sphi 0, %s139
      %s142 = sphi 0, %s141
      %s156 = sphi 0, %s142
      %s160 = sphi 0, %s160
      %s162 = sphi 0, %s160
      %s163 = sphi 0, %s162
      %s177 = sphi 0, %s163
      %s183 = sphi 0, %s185
      %s186 = sphi 0, %s183
      %s187 = sphi 0, %s186
      %s203 = sphi 0, %s187
    $region4: #{tpu_custom_call.1} parent=1 // loop_header_branch
      %24 = sbr.rel (%p22) target = $region8
    $region5: #{tpu_custom_call.1} parent=1 // loop_body
      %s26 = ssub.s32 %s21, 1
      %s27 = ssub.s32 %s21, 2
      %s28 = sadd.s32 %s21, 1
      %s29 = ssub.s32 %s21, %s28
      %p30 = scmp.eq.s32.totalorder %s29, 0
      %s32 = sadd.s32 %s31, 1
      %s33 = scalar_select %p30, %s31, %s32
      %p36 = pneg %p30
      %p37 = scmp.eq.s32.totalorder %s21, 1
      %p38 = por %p36, %p37
      %p39 = scmp.ne.s32.totalorder %s31, %s34
      %p40 = scmp.eq.s32.totalorder %s21, 0
      %p41 = por %p39, %p40
      %p42 = scmp.ne.s32.totalorder %s31, %s34
      %p43 = scmp.eq.s32.totalorder %s26, 1
      %p44 = por %p42, %p43
      %p45 = scmp.ne.s32.totalorder %s34, %s35
      %p46 = scmp.eq.s32.totalorder %s26, 0
      %p47 = por %p45, %p46
      %p48 = scmp.ne.s32.totalorder %s34, %s35
      %p49 = scmp.eq.s32.totalorder %s27, 1
      %p50 = por %p48, %p49
      %p52 = scmp.ne.s32.totalorder %s35, %s51
      %p53 = scmp.eq.s32.totalorder %s27, 0
      %p54 = por %p52, %p53
      %s56 = sadd.s32 %s55, 1
      %p59 = scmp.eq.s32.totalorder %s21, 1
      %p60 = scmp.ne.s32.totalorder %s55, %s57
      %p61 = scmp.eq.s32.totalorder %s21, 0
      %p62 = por %p60, %p61
      %p63 = scmp.ne.s32.totalorder %s55, %s57
      %p64 = scmp.eq.s32.totalorder %s26, 1
      %p65 = por %p63, %p64
      %p66 = scmp.ne.s32.totalorder %s57, %s58
      %p67 = scmp.eq.s32.totalorder %s26, 0
      %p68 = por %p66, %p67
      %p69 = scmp.ne.s32.totalorder %s57, %s58
      %p70 = scmp.eq.s32.totalorder %s27, 1
      %p71 = por %p69, %p70
      %p73 = scmp.ne.s32.totalorder %s58, %s72
      %p74 = scmp.eq.s32.totalorder %s27, 0
      %p75 = por %p73, %p74
      %s77 = sadd.s32 %s76, 1
      %p80 = scmp.eq.s32.totalorder %s21, 1
      %p81 = scmp.ne.s32.totalorder %s76, %s78
      %p82 = scmp.eq.s32.totalorder %s21, 0
      %p83 = por %p81, %p82
      %p84 = scmp.ne.s32.totalorder %s76, %s78
      %p85 = scmp.eq.s32.totalorder %s26, 1
      %p86 = por %p84, %p85
      %p87 = scmp.ne.s32.totalorder %s78, %s79
      %p88 = scmp.eq.s32.totalorder %s26, 0
      %p89 = por %p87, %p88
      %p90 = scmp.ne.s32.totalorder %s78, %s79
      %p91 = scmp.eq.s32.totalorder %s27, 1
      %p92 = por %p90, %p91
      %p94 = scmp.ne.s32.totalorder %s79, %s93
      %p95 = scmp.eq.s32.totalorder %s27, 0
      %p96 = por %p94, %p95
      %s98 = sadd.s32 %s97, 1
      %p101 = scmp.eq.s32.totalorder %s21, 1
      %p102 = scmp.ne.s32.totalorder %s97, %s99
      %p103 = scmp.eq.s32.totalorder %s21, 0
      %p104 = por %p102, %p103
      %p105 = scmp.ne.s32.totalorder %s97, %s99
      %p106 = scmp.eq.s32.totalorder %s26, 1
      %p107 = por %p105, %p106
      %p108 = scmp.ne.s32.totalorder %s99, %s100
      %p109 = scmp.eq.s32.totalorder %s26, 0
      %p110 = por %p108, %p109
      %p111 = scmp.ne.s32.totalorder %s99, %s100
      %p112 = scmp.eq.s32.totalorder %s27, 1
      %p113 = por %p111, %p112
      %p115 = scmp.ne.s32.totalorder %s100, %s114
      %p116 = scmp.eq.s32.totalorder %s27, 0
      %p117 = por %p115, %p116
      %s119 = sadd.s32 %s118, 1
      %p122 = scmp.eq.s32.totalorder %s21, 1
      %p123 = scmp.ne.s32.totalorder %s118, %s120
      %p124 = scmp.eq.s32.totalorder %s21, 0
      %p125 = por %p123, %p124
      %p126 = scmp.ne.s32.totalorder %s118, %s120
      %p127 = scmp.eq.s32.totalorder %s26, 1
      %p128 = por %p126, %p127
      %p129 = scmp.ne.s32.totalorder %s120, %s121
      %p130 = scmp.eq.s32.totalorder %s26, 0
      %p131 = por %p129, %p130
      %p132 = scmp.ne.s32.totalorder %s120, %s121
      %p133 = scmp.eq.s32.totalorder %s27, 1
      %p134 = por %p132, %p133
      %p136 = scmp.ne.s32.totalorder %s121, %s135
      %p137 = scmp.eq.s32.totalorder %s27, 0
      %p138 = por %p136, %p137
      %s140 = sadd.s32 %s139, 1
      %p143 = scmp.eq.s32.totalorder %s21, 1
      %p144 = scmp.ne.s32.totalorder %s139, %s141
      %p145 = scmp.eq.s32.totalorder %s21, 0
      %p146 = por %p144, %p145
      %p147 = scmp.ne.s32.totalorder %s139, %s141
      %p148 = scmp.eq.s32.totalorder %s26, 1
      %p149 = por %p147, %p148
      %p150 = scmp.ne.s32.totalorder %s141, %s142
      %p151 = scmp.eq.s32.totalorder %s26, 0
      %p152 = por %p150, %p151
      %p153 = scmp.ne.s32.totalorder %s141, %s142
      %p154 = scmp.eq.s32.totalorder %s27, 1
      %p155 = por %p153, %p154
      %p157 = scmp.ne.s32.totalorder %s142, %s156
      %p158 = scmp.eq.s32.totalorder %s27, 0
      %p159 = por %p157, %p158
      %s161 = sadd.s32 %s160, 1
      %p164 = scmp.eq.s32.totalorder %s21, 1
      %p165 = scmp.ne.s32.totalorder %s160, %s162
      %p166 = scmp.eq.s32.totalorder %s21, 0
      %p167 = por %p165, %p166
      %p168 = scmp.ne.s32.totalorder %s160, %s162
      %p169 = scmp.eq.s32.totalorder %s26, 1
      %p170 = por %p168, %p169
      %p171 = scmp.ne.s32.totalorder %s162, %s163
      %p172 = scmp.eq.s32.totalorder %s26, 0
      %p173 = por %p171, %p172
      %p174 = scmp.ne.s32.totalorder %s162, %s163
      %p175 = scmp.eq.s32.totalorder %s27, 1
      %p176 = por %p174, %p175
      %p178 = scmp.ne.s32.totalorder %s163, %s177
      %p179 = scmp.eq.s32.totalorder %s27, 0
      %p180 = por %p178, %p179
      %s181 = ssub.s32 %s21, %s28
      %p182 = scmp.eq.s32.totalorder %s181, 0
      %s184 = sadd.s32 %s183, 1
      %s185 = scalar_select %p182, %s183, %s184
      %p188 = pneg %p182
      %p189 = scmp.eq.s32.totalorder %s21, 1
      %p190 = por %p188, %p189
      %p191 = scmp.ne.s32.totalorder %s183, %s186
      %p192 = scmp.eq.s32.totalorder %s21, 0
      %p193 = por %p191, %p192
      %p194 = scmp.ne.s32.totalorder %s183, %s186
      %p195 = scmp.eq.s32.totalorder %s26, 1
      %p196 = por %p194, %p195
      %p197 = scmp.ne.s32.totalorder %s186, %s187
      %p198 = scmp.eq.s32.totalorder %s26, 0
      %p199 = por %p197, %p198
      %p200 = scmp.ne.s32.totalorder %s186, %s187
      %p201 = scmp.eq.s32.totalorder %s27, 1
      %p202 = por %p200, %p201
      %p204 = scmp.ne.s32.totalorder %s187, %s203
      %p205 = scmp.eq.s32.totalorder %s27, 0
      %p206 = por %p204, %p205
      %p207 = scmp.le.s32.totalorder 1, %s21
      %p208 = scmp.lt.s32.totalorder %s21, 3
      %p209 = pnand %p207, %p208
      %p210 = pneg %p209
      // Predicated region
      $region9: #{tpu_custom_call.1} parent=5 // pred_check
        _
      $region10: #{tpu_custom_call.1} parent=5 // pred_check_branch
        %212 = sbr.rel (%p209) target = $region12
      $region11: #{tpu_custom_call.1} parent=5 // pred_region
        %s213 = ssub.s32 %s21, 1
        // Predicated region
        $region13: #{tpu_custom_call.1} parent=11 // pred_check
          %p214 = pneg %p68
        $region14: #{tpu_custom_call.1} parent=11 // pred_check_branch
          %216 = sbr.rel (%p214) target = $region16
        $region15: #{tpu_custom_call.1} parent=11 // pred_region
          _
        $region16: #{tpu_custom_call.1} parent=11 // pred_fallthru
          _
        // Predicated region
        $region17: #{tpu_custom_call.1} parent=11 // pred_check
          %p217 = pneg %p89
        $region18: #{tpu_custom_call.1} parent=11 // pred_check_branch
          %219 = sbr.rel (%p217) target = $region20
        $region19: #{tpu_custom_call.1} parent=11 // pred_region
          %s221 = ssub.s32 32, 32
          %222 = vsyncadd [#allocation6], %s221
          %s224 = sshll.u32 [#allocation5], 4
          %s225 = int_to_ptr.vmem [resolvable:$true] %s224
          %227 = dma.hbm_to_vmem [thread:$0]  %s2, 32, %s225, [#allocation6]
        $region20: #{tpu_custom_call.1} parent=11 // pred_fallthru
          _
        // Predicated region
        $region21: #{tpu_custom_call.1} parent=11 // pred_check
          %p228 = pneg %p110
        $region22: #{tpu_custom_call.1} parent=11 // pred_check_branch
          %230 = sbr.rel (%p228) target = $region24
        $region23: #{tpu_custom_call.1} parent=11 // pred_region
          %s232 = ssub.s32 8192, 8192
          %233 = vsyncadd [#allocation6], %s232
          %s234 = sshll.u32 [#allocation7], 4
          %s235 = int_to_ptr.vmem [resolvable:$true] %s234
          %240 = dma.hbm_to_vmem [thread:$0]  %s3, 8192, %s235, [#allocation6], 256, 256, 16
        $region24: #{tpu_custom_call.1} parent=11 // pred_fallthru
          _
        // Predicated region
        $region25: #{tpu_custom_call.1} parent=11 // pred_check
          %p241 = pneg %p131
        $region26: #{tpu_custom_call.1} parent=11 // pred_check_branch
          %243 = sbr.rel (%p241) target = $region28
        $region27: #{tpu_custom_call.1} parent=11 // pred_region
          _
        $region28: #{tpu_custom_call.1} parent=11 // pred_fallthru
          _
        // Predicated region
        $region29: #{tpu_custom_call.1} parent=11 // pred_check
          %p244 = pneg %p152
        $region30: #{tpu_custom_call.1} parent=11 // pred_check_branch
          %246 = sbr.rel (%p244) target = $region32
        $region31: #{tpu_custom_call.1} parent=11 // pred_region
          %s248 = ssub.s32 4096, 4096
          %249 = vsyncadd [#allocation9], %s248
          %s250 = sshll.u32 [#allocation8], 4
          %s251 = int_to_ptr.vmem [resolvable:$true] %s250
          %256 = dma.hbm_to_vmem [thread:$0]  %s5, 4096, %s251, [#allocation9], 64, 64, 4
        $region32: #{tpu_custom_call.1} parent=11 // pred_fallthru
          _
        // Predicated region
        $region33: #{tpu_custom_call.1} parent=11 // pred_check
          %p257 = pneg %p173
        $region34: #{tpu_custom_call.1} parent=11 // pred_check_branch
          %259 = sbr.rel (%p257) target = $region36
        $region35: #{tpu_custom_call.1} parent=11 // pred_region
          _
        $region36: #{tpu_custom_call.1} parent=11 // pred_fallthru
          _
      $region12: #{tpu_custom_call.1} parent=5 // pred_fallthru
        _
      %p260 = scmp.lt.s32.totalorder %s21, 2
      // Predicated region
      $region37: #{tpu_custom_call.1} parent=5 // pred_check
        %p261 = pneg %p260
      $region38: #{tpu_custom_call.1} parent=5 // pred_check_branch
        %263 = sbr.rel (%p261) target = $region40
      $region39: #{tpu_custom_call.1} parent=5 // pred_region
        // Predicated region
        $region41: #{tpu_custom_call.1} parent=39 // pred_check
          %p264 = pneg %p41
        $region42: #{tpu_custom_call.1} parent=39 // pred_check_branch
          %266 = sbr.rel (%p264) target = $region44
        $region43: #{tpu_custom_call.1} parent=39 // pred_region
          %s267 = sand.u32 %s31, 1
          %s268 = scalar_lea.sflag [#allocation3], %s267
          %s269 = sand.u32 %s31, 1
          %s270 = smul.addr %s269, 512
          %s271 = scalar_lea.vmem [#allocation2], %s270
          %s272 = smul.u32 32, %s21
          %s274 = ssub.s32 8192, 8192
          %275 = vsyncadd %s268, %s274
          %s276 = smul.addr %s272, 2
          %s277 = smul.addr %s276, 128
          %s278 = scalar_lea.hbm %s0, %s277
          %s279 = sshll.u32 %s271, 4
          %s280 = int_to_ptr.vmem [resolvable:$true] %s279
          %285 = dma.hbm_to_vmem [thread:$0]  %s278, 8192, %s280, %s268, 256, 256, 16
        $region44: #{tpu_custom_call.1} parent=39 // pred_fallthru
          _
      $region40: #{tpu_custom_call.1} parent=5 // pred_fallthru
        _
      %p286 = scmp.le.s32.totalorder 1, %s21
      %p287 = scmp.lt.s32.totalorder %s21, 3
      %p288 = pnand %p286, %p287
      %p289 = pneg %p288
      // Predicated region
      $region45: #{tpu_custom_call.1} parent=5 // pred_check
        _
      $region46: #{tpu_custom_call.1} parent=5 // pred_check_branch
        %291 = sbr.rel (%p288) target = $region48
      $region47: #{tpu_custom_call.1} parent=5 // pred_region
        %s292 = ssub.s32 %s21, 1
        %s293 = sand.u32 %s34, 1
        %s294 = scalar_lea.sflag [#allocation3], %s293
        %s295 = sand.u32 %s34, 1
        %s296 = smul.addr %s295, 512
        %s297 = scalar_lea.vmem [#allocation2], %s296
        // Predicated region
        $region49: #{tpu_custom_call.1} parent=47 // pred_check
          %p298 = pneg %p47
        $region50: #{tpu_custom_call.1} parent=47 // pred_check_branch
          %300 = sbr.rel (%p298) target = $region52
        $region51: #{tpu_custom_call.1} parent=47 // pred_region
          %301 = dma.done %s294, 8192
        $region52: #{tpu_custom_call.1} parent=47 // pred_fallthru
          _
        // Predicated region
        $region53: #{tpu_custom_call.1} parent=47 // pred_check
          %p302 = pneg %p89
        $region54: #{tpu_custom_call.1} parent=47 // pred_check_branch
          %304 = sbr.rel (%p302) target = $region56
        $region55: #{tpu_custom_call.1} parent=47 // pred_region
          %305 = dma.done [#allocation6], 32
        $region56: #{tpu_custom_call.1} parent=47 // pred_fallthru
          _
        // Predicated region
        $region57: #{tpu_custom_call.1} parent=47 // pred_check
          %p306 = pneg %p110
        $region58: #{tpu_custom_call.1} parent=47 // pred_check_branch
          %308 = sbr.rel (%p306) target = $region60
        $region59: #{tpu_custom_call.1} parent=47 // pred_region
          %309 = dma.done [#allocation6], 8192
        $region60: #{tpu_custom_call.1} parent=47 // pred_fallthru
          _
        // Predicated region
        $region61: #{tpu_custom_call.1} parent=47 // pred_check
          %p310 = pneg %p152
        $region62: #{tpu_custom_call.1} parent=47 // pred_check_branch
          %312 = sbr.rel (%p310) target = $region64
        $region63: #{tpu_custom_call.1} parent=47 // pred_region
          %313 = dma.done [#allocation9], 4096
        $region64: #{tpu_custom_call.1} parent=47 // pred_fallthru
          _
        %s314 = sand.u32 %s34, 1
        %s315 = scalar_lea.sflag [#allocation3], %s314
        %s316 = sand.u32 %s34, 1
        %s317 = smul.addr %s316, 512
        %s318 = scalar_lea.vmem [#allocation2], %s317
        %p319 = pneg %p47
        %p320 = pneg %p44
        %p321 = pneg %p68
        %p322 = pneg %p65
        %p323 = pneg %p89
        %p324 = pneg %p86
        %p325 = pneg %p110
        %p326 = pneg %p107
        %p327 = pneg %p131
        %p328 = pneg %p128
        %p329 = pneg %p152
        %p330 = pneg %p149
        %p331 = pneg %p173
        %p332 = pneg %p170
        %p333 = pneg %p199
        %p334 = pneg %p196
        %s335 = sand.u32 %s186, 1
        %s336 = scalar_lea.sflag [#allocation4], %s335
        %s337 = sand.u32 %s186, 1
        %s338 = smul.addr %s337, 256
        %s339 = scalar_lea.vmem [#allocation10], %s338
        %s340 = smul.u32 32, %s26
        %s341 = smul.u32 32, %s26
        %v347 = vld [vmem:[%s297] sm:$0xff]
        %v348 = vld [vmem:[%s297 + $0x8] sm:$0xff]
        %v349 = vld [vmem:[%s297 + $0x10] sm:$0xff]
        %v350 = vld [vmem:[%s297 + $0x18] sm:$0xff]
        %v351 = vld [vmem:[%s297 + $0x20] sm:$0xff]
        %v352 = vld [vmem:[%s297 + $0x28] sm:$0xff]
        %v353 = vld [vmem:[%s297 + $0x30] sm:$0xff]
        %v354 = vld [vmem:[%s297 + $0x38] sm:$0xff]
        %v355 = vld [vmem:[%s297 + $0x40] sm:$0xff]
        %v356 = vld [vmem:[%s297 + $0x48] sm:$0xff]
        %v357 = vld [vmem:[%s297 + $0x50] sm:$0xff]
        %v358 = vld [vmem:[%s297 + $0x58] sm:$0xff]
        %v359 = vld [vmem:[%s297 + $0x60] sm:$0xff]
        %v360 = vld [vmem:[%s297 + $0x68] sm:$0xff]
        %v361 = vld [vmem:[%s297 + $0x70] sm:$0xff]
        %v362 = vld [vmem:[%s297 + $0x78] sm:$0xff]
        %v363 = vld [vmem:[%s297 + $0x80] sm:$0xff]
        %v364 = vld [vmem:[%s297 + $0x88] sm:$0xff]
        %v365 = vld [vmem:[%s297 + $0x90] sm:$0xff]
        %v366 = vld [vmem:[%s297 + $0x98] sm:$0xff]
        %v367 = vld [vmem:[%s297 + $0xa0] sm:$0xff]
        %v368 = vld [vmem:[%s297 + $0xa8] sm:$0xff]
        %v369 = vld [vmem:[%s297 + $0xb0] sm:$0xff]
        %v370 = vld [vmem:[%s297 + $0xb8] sm:$0xff]
        %v371 = vld [vmem:[%s297 + $0xc0] sm:$0xff]
        %v372 = vld [vmem:[%s297 + $0xc8] sm:$0xff]
        %v373 = vld [vmem:[%s297 + $0xd0] sm:$0xff]
        %v374 = vld [vmem:[%s297 + $0xd8] sm:$0xff]
        %v375 = vld [vmem:[%s297 + $0xe0] sm:$0xff]
        %v376 = vld [vmem:[%s297 + $0xe8] sm:$0xff]
        %v377 = vld [vmem:[%s297 + $0xf0] sm:$0xff]
        %v378 = vld [vmem:[%s297 + $0xf8] sm:$0xff]
        %v379 = vld [vmem:[%s297 + $0x100] sm:$0xff]
        %v380 = vld [vmem:[%s297 + $0x108] sm:$0xff]
        %v381 = vld [vmem:[%s297 + $0x110] sm:$0xff]
        %v382 = vld [vmem:[%s297 + $0x118] sm:$0xff]
        %v383 = vld [vmem:[%s297 + $0x120] sm:$0xff]
        %v384 = vld [vmem:[%s297 + $0x128] sm:$0xff]
        %v385 = vld [vmem:[%s297 + $0x130] sm:$0xff]
        %v386 = vld [vmem:[%s297 + $0x138] sm:$0xff]
        %v387 = vld [vmem:[%s297 + $0x140] sm:$0xff]
        %v388 = vld [vmem:[%s297 + $0x148] sm:$0xff]
        %v389 = vld [vmem:[%s297 + $0x150] sm:$0xff]
        %v390 = vld [vmem:[%s297 + $0x158] sm:$0xff]
        %v391 = vld [vmem:[%s297 + $0x160] sm:$0xff]
        %v392 = vld [vmem:[%s297 + $0x168] sm:$0xff]
        %v393 = vld [vmem:[%s297 + $0x170] sm:$0xff]
        %v394 = vld [vmem:[%s297 + $0x178] sm:$0xff]
        %v395 = vld [vmem:[%s297 + $0x180] sm:$0xff]
        %v396 = vld [vmem:[%s297 + $0x188] sm:$0xff]
        %v397 = vld [vmem:[%s297 + $0x190] sm:$0xff]
        %v398 = vld [vmem:[%s297 + $0x198] sm:$0xff]
        %v399 = vld [vmem:[%s297 + $0x1a0] sm:$0xff]
        %v400 = vld [vmem:[%s297 + $0x1a8] sm:$0xff]
        %v401 = vld [vmem:[%s297 + $0x1b0] sm:$0xff]
        %v402 = vld [vmem:[%s297 + $0x1b8] sm:$0xff]
        %v403 = vld [vmem:[%s297 + $0x1c0] sm:$0xff]
        %v404 = vld [vmem:[%s297 + $0x1c8] sm:$0xff]
        %v405 = vld [vmem:[%s297 + $0x1d0] sm:$0xff]
        %v406 = vld [vmem:[%s297 + $0x1d8] sm:$0xff]
        %v407 = vld [vmem:[%s297 + $0x1e0] sm:$0xff]
        %v408 = vld [vmem:[%s297 + $0x1e8] sm:$0xff]
        %v409 = vld [vmem:[%s297 + $0x1f0] sm:$0xff]
        %v410 = vld [vmem:[%s297 + $0x1f8] sm:$0xff]
        %v411 = vadd.f32 %v347, %v348
        %412 = vadd.xlane.f32.xlu0 %v411
        %v413 = vpop.xlane.xlu0 %412
        %v414 = vadd.f32 %v349, %v350
        %415 = vadd.xlane.f32.xlu0 %v414
        %v416 = vpop.xlane.xlu0 %415
        %v417 = vadd.f32 %v351, %v352
        %418 = vadd.xlane.f32.xlu0 %v417
        %v419 = vpop.xlane.xlu0 %418
        %v420 = vadd.f32 %v353, %v354
        %421 = vadd.xlane.f32.xlu0 %v420
        %v422 = vpop.xlane.xlu0 %421
        %v423 = vadd.f32 %v355, %v356
        %424 = vadd.xlane.f32.xlu0 %v423
        %v425 = vpop.xlane.xlu0 %424
        %v426 = vadd.f32 %v357, %v358
        %427 = vadd.xlane.f32.xlu0 %v426
        %v428 = vpop.xlane.xlu0 %427
        %v429 = vadd.f32 %v359, %v360
        %430 = vadd.xlane.f32.xlu0 %v429
        %v431 = vpop.xlane.xlu0 %430
        %v432 = vadd.f32 %v361, %v362
        %433 = vadd.xlane.f32.xlu0 %v432
        %v434 = vpop.xlane.xlu0 %433
        %v435 = vadd.f32 %v363, %v364
        %436 = vadd.xlane.f32.xlu0 %v435
        %v437 = vpop.xlane.xlu0 %436
        %v438 = vadd.f32 %v365, %v366
        %439 = vadd.xlane.f32.xlu0 %v438
        %v440 = vpop.xlane.xlu0 %439
        %v441 = vadd.f32 %v367, %v368
        %442 = vadd.xlane.f32.xlu0 %v441
        %v443 = vpop.xlane.xlu0 %442
        %v444 = vadd.f32 %v369, %v370
        %445 = vadd.xlane.f32.xlu0 %v444
        %v446 = vpop.xlane.xlu0 %445
        %v447 = vadd.f32 %v371, %v372
        %448 = vadd.xlane.f32.xlu0 %v447
        %v449 = vpop.xlane.xlu0 %448
        %v450 = vadd.f32 %v373, %v374
        %451 = vadd.xlane.f32.xlu0 %v450
        %v452 = vpop.xlane.xlu0 %451
        %v453 = vadd.f32 %v375, %v376
        %454 = vadd.xlane.f32.xlu0 %v453
        %v455 = vpop.xlane.xlu0 %454
        %v456 = vadd.f32 %v377, %v378
        %457 = vadd.xlane.f32.xlu0 %v456
        %v458 = vpop.xlane.xlu0 %457
        %v459 = vadd.f32 %v379, %v380
        %460 = vadd.xlane.f32.xlu0 %v459
        %v461 = vpop.xlane.xlu0 %460
        %v462 = vadd.f32 %v381, %v382
        %463 = vadd.xlane.f32.xlu0 %v462
        %v464 = vpop.xlane.xlu0 %463
        %v465 = vadd.f32 %v383, %v384
        %466 = vadd.xlane.f32.xlu0 %v465
        %v467 = vpop.xlane.xlu0 %466
        %v468 = vadd.f32 %v385, %v386
        %469 = vadd.xlane.f32.xlu0 %v468
        %v470 = vpop.xlane.xlu0 %469
        %v471 = vadd.f32 %v387, %v388
        %472 = vadd.xlane.f32.xlu0 %v471
        %v473 = vpop.xlane.xlu0 %472
        %v474 = vadd.f32 %v389, %v390
        %475 = vadd.xlane.f32.xlu0 %v474
        %v476 = vpop.xlane.xlu0 %475
        %v477 = vadd.f32 %v391, %v392
        %478 = vadd.xlane.f32.xlu0 %v477
        %v479 = vpop.xlane.xlu0 %478
        %v480 = vadd.f32 %v393, %v394
        %481 = vadd.xlane.f32.xlu0 %v480
        %v482 = vpop.xlane.xlu0 %481
        %v483 = vadd.f32 %v395, %v396
        %484 = vadd.xlane.f32.xlu0 %v483
        %v485 = vpop.xlane.xlu0 %484
        %v486 = vadd.f32 %v397, %v398
        %487 = vadd.xlane.f32.xlu0 %v486
        %v488 = vpop.xlane.xlu0 %487
        %v489 = vadd.f32 %v399, %v400
        %490 = vadd.xlane.f32.xlu0 %v489
        %v491 = vpop.xlane.xlu0 %490
        %v492 = vadd.f32 %v401, %v402
        %493 = vadd.xlane.f32.xlu0 %v492
        %v494 = vpop.xlane.xlu0 %493
        %v495 = vadd.f32 %v403, %v404
        %496 = vadd.xlane.f32.xlu0 %v495
        %v497 = vpop.xlane.xlu0 %496
        %v498 = vadd.f32 %v405, %v406
        %499 = vadd.xlane.f32.xlu0 %v498
        %v500 = vpop.xlane.xlu0 %499
        %v501 = vadd.f32 %v407, %v408
        %502 = vadd.xlane.f32.xlu0 %v501
        %v503 = vpop.xlane.xlu0 %502
        %v504 = vadd.f32 %v409, %v410
        %505 = vadd.xlane.f32.xlu0 %v504
        %v506 = vpop.xlane.xlu0 %505
        %v507 = vrcp.pop 256.0
        %v508 = vmul.f32 %v413, %v507
        %v509 = vmul.f32 %v416, %v507
        %v510 = vmul.f32 %v419, %v507
        %v511 = vmul.f32 %v422, %v507
        %v512 = vmul.f32 %v425, %v507
        %v513 = vmul.f32 %v428, %v507
        %v514 = vmul.f32 %v431, %v507
        %v515 = vmul.f32 %v434, %v507
        %v516 = vmul.f32 %v437, %v507
        %v517 = vmul.f32 %v440, %v507
        %v518 = vmul.f32 %v443, %v507
        %v519 = vmul.f32 %v446, %v507
        %v520 = vmul.f32 %v449, %v507
        %v521 = vmul.f32 %v452, %v507
        %v522 = vmul.f32 %v455, %v507
        %v523 = vmul.f32 %v458, %v507
        %v524 = vmul.f32 %v461, %v507
        %v525 = vmul.f32 %v464, %v507
        %v526 = vmul.f32 %v467, %v507
        %v527 = vmul.f32 %v470, %v507
        %v528 = vmul.f32 %v473, %v507
        %v529 = vmul.f32 %v476, %v507
        %v530 = vmul.f32 %v479, %v507
        %v531 = vmul.f32 %v482, %v507
        %v532 = vmul.f32 %v485, %v507
        %v533 = vmul.f32 %v488, %v507
        %v534 = vmul.f32 %v491, %v507
        %v535 = vmul.f32 %v494, %v507
        %v536 = vmul.f32 %v497, %v507
        %v537 = vmul.f32 %v500, %v507
        %v538 = vmul.f32 %v503, %v507
        %v539 = vmul.f32 %v506, %v507
        %v540 = vsub.f32 %v347, %v508
        %v541 = vsub.f32 %v348, %v508
        %v542 = vsub.f32 %v349, %v509
        %v543 = vsub.f32 %v350, %v509
        %v544 = vsub.f32 %v351, %v510
        %v545 = vsub.f32 %v352, %v510
        %v546 = vsub.f32 %v353, %v511
        %v547 = vsub.f32 %v354, %v511
        %v548 = vsub.f32 %v355, %v512
        %v549 = vsub.f32 %v356, %v512
        %v550 = vsub.f32 %v357, %v513
        %v551 = vsub.f32 %v358, %v513
        %v552 = vsub.f32 %v359, %v514
        %v553 = vsub.f32 %v360, %v514
        %v554 = vsub.f32 %v361, %v515
        %v555 = vsub.f32 %v362, %v515
        %v556 = vsub.f32 %v363, %v516
        %v557 = vsub.f32 %v364, %v516
        %v558 = vsub.f32 %v365, %v517
        %v559 = vsub.f32 %v366, %v517
        %v560 = vsub.f32 %v367, %v518
        %v561 = vsub.f32 %v368, %v518
        %v562 = vsub.f32 %v369, %v519
        %v563 = vsub.f32 %v370, %v519
        %v564 = vsub.f32 %v371, %v520
        %v565 = vsub.f32 %v372, %v520
        %v566 = vsub.f32 %v373, %v521
        %v567 = vsub.f32 %v374, %v521
        %v568 = vsub.f32 %v375, %v522
        %v569 = vsub.f32 %v376, %v522
        %v570 = vsub.f32 %v377, %v523
        %v571 = vsub.f32 %v378, %v523
        %v572 = vsub.f32 %v379, %v524
        %v573 = vsub.f32 %v380, %v524
        %v574 = vsub.f32 %v381, %v525
        %v575 = vsub.f32 %v382, %v525
        %v576 = vsub.f32 %v383, %v526
        %v577 = vsub.f32 %v384, %v526
        %v578 = vsub.f32 %v385, %v527
        %v579 = vsub.f32 %v386, %v527
        %v580 = vsub.f32 %v387, %v528
        %v581 = vsub.f32 %v388, %v528
        %v582 = vsub.f32 %v389, %v529
        %v583 = vsub.f32 %v390, %v529
        %v584 = vsub.f32 %v391, %v530
        %v585 = vsub.f32 %v392, %v530
        %v586 = vsub.f32 %v393, %v531
        %v587 = vsub.f32 %v394, %v531
        %v588 = vsub.f32 %v395, %v532
        %v589 = vsub.f32 %v396, %v532
        %v590 = vsub.f32 %v397, %v533
        %v591 = vsub.f32 %v398, %v533
        %v592 = vsub.f32 %v399, %v534
        %v593 = vsub.f32 %v400, %v534
        %v594 = vsub.f32 %v401, %v535
        %v595 = vsub.f32 %v402, %v535
        %v596 = vsub.f32 %v403, %v536
        %v597 = vsub.f32 %v404, %v536
        %v598 = vsub.f32 %v405, %v537
        %v599 = vsub.f32 %v406, %v537
        %v600 = vsub.f32 %v407, %v538
        %v601 = vsub.f32 %v408, %v538
        %v602 = vsub.f32 %v409, %v539
        %v603 = vsub.f32 %v410, %v539
        %v604 = vmul.f32 %v540, %v540
        %v605 = vmul.f32 %v541, %v541
        %v606 = vmul.f32 %v542, %v542
        %v607 = vmul.f32 %v543, %v543
        %v608 = vmul.f32 %v544, %v544
        %v609 = vmul.f32 %v545, %v545
        %v610 = vmul.f32 %v546, %v546
        %v611 = vmul.f32 %v547, %v547
        %v612 = vmul.f32 %v548, %v548
        %v613 = vmul.f32 %v549, %v549
        %v614 = vmul.f32 %v550, %v550
        %v615 = vmul.f32 %v551, %v551
        %v616 = vmul.f32 %v552, %v552
        %v617 = vmul.f32 %v553, %v553
        %v618 = vmul.f32 %v554, %v554
        %v619 = vmul.f32 %v555, %v555
        %v620 = vmul.f32 %v556, %v556
        %v621 = vmul.f32 %v557, %v557
        %v622 = vmul.f32 %v558, %v558
        %v623 = vmul.f32 %v559, %v559
        %v624 = vmul.f32 %v560, %v560
        %v625 = vmul.f32 %v561, %v561
        %v626 = vmul.f32 %v562, %v562
        %v627 = vmul.f32 %v563, %v563
        %v628 = vmul.f32 %v564, %v564
        %v629 = vmul.f32 %v565, %v565
        %v630 = vmul.f32 %v566, %v566
        %v631 = vmul.f32 %v567, %v567
        %v632 = vmul.f32 %v568, %v568
        %v633 = vmul.f32 %v569, %v569
        %v634 = vmul.f32 %v570, %v570
        %v635 = vmul.f32 %v571, %v571
        %v636 = vmul.f32 %v572, %v572
        %v637 = vmul.f32 %v573, %v573
        %v638 = vmul.f32 %v574, %v574
        %v639 = vmul.f32 %v575, %v575
        %v640 = vmul.f32 %v576, %v576
        %v641 = vmul.f32 %v577, %v577
        %v642 = vmul.f32 %v578, %v578
        %v643 = vmul.f32 %v579, %v579
        %v644 = vmul.f32 %v580, %v580
        %v645 = vmul.f32 %v581, %v581
        %v646 = vmul.f32 %v582, %v582
        %v647 = vmul.f32 %v583, %v583
        %v648 = vmul.f32 %v584, %v584
        %v649 = vmul.f32 %v585, %v585
        %v650 = vmul.f32 %v586, %v586
        %v651 = vmul.f32 %v587, %v587
        %v652 = vmul.f32 %v588, %v588
        %v653 = vmul.f32 %v589, %v589
        %v654 = vmul.f32 %v590, %v590
        %v655 = vmul.f32 %v591, %v591
        %v656 = vmul.f32 %v592, %v592
        %v657 = vmul.f32 %v593, %v593
        %v658 = vmul.f32 %v594, %v594
        %v659 = vmul.f32 %v595, %v595
        %v660 = vmul.f32 %v596, %v596
        %v661 = vmul.f32 %v597, %v597
        %v662 = vmul.f32 %v598, %v598
        %v663 = vmul.f32 %v599, %v599
        %v664 = vmul.f32 %v600, %v600
        %v665 = vmul.f32 %v601, %v601
        %v666 = vmul.f32 %v602, %v602
        %v667 = vmul.f32 %v603, %v603
        %v668 = vadd.f32 %v604, %v605
        %669 = vadd.xlane.f32.xlu0 %v668
        %v670 = vpop.xlane.xlu0 %669
        %v671 = vadd.f32 %v606, %v607
        %672 = vadd.xlane.f32.xlu0 %v671
        %v673 = vpop.xlane.xlu0 %672
        %v674 = vadd.f32 %v608, %v609
        %675 = vadd.xlane.f32.xlu0 %v674
        %v676 = vpop.xlane.xlu0 %675
        %v677 = vadd.f32 %v610, %v611
        %678 = vadd.xlane.f32.xlu0 %v677
        %v679 = vpop.xlane.xlu0 %678
        %v680 = vadd.f32 %v612, %v613
        %681 = vadd.xlane.f32.xlu0 %v680
        %v682 = vpop.xlane.xlu0 %681
        %v683 = vadd.f32 %v614, %v615
        %684 = vadd.xlane.f32.xlu0 %v683
        %v685 = vpop.xlane.xlu0 %684
        %v686 = vadd.f32 %v616, %v617
        %687 = vadd.xlane.f32.xlu0 %v686
        %v688 = vpop.xlane.xlu0 %687
        %v689 = vadd.f32 %v618, %v619
        %690 = vadd.xlane.f32.xlu0 %v689
        %v691 = vpop.xlane.xlu0 %690
        %v692 = vadd.f32 %v620, %v621
        %693 = vadd.xlane.f32.xlu0 %v692
        %v694 = vpop.xlane.xlu0 %693
        %v695 = vadd.f32 %v622, %v623
        %696 = vadd.xlane.f32.xlu0 %v695
        %v697 = vpop.xlane.xlu0 %696
        %v698 = vadd.f32 %v624, %v625
        %699 = vadd.xlane.f32.xlu0 %v698
        %v700 = vpop.xlane.xlu0 %699
        %v701 = vadd.f32 %v626, %v627
        %702 = vadd.xlane.f32.xlu0 %v701
        %v703 = vpop.xlane.xlu0 %702
        %v704 = vadd.f32 %v628, %v629
        %705 = vadd.xlane.f32.xlu0 %v704
        %v706 = vpop.xlane.xlu0 %705
        %v707 = vadd.f32 %v630, %v631
        %708 = vadd.xlane.f32.xlu0 %v707
        %v709 = vpop.xlane.xlu0 %708
        %v710 = vadd.f32 %v632, %v633
        %711 = vadd.xlane.f32.xlu0 %v710
        %v712 = vpop.xlane.xlu0 %711
        %v713 = vadd.f32 %v634, %v635
        %714 = vadd.xlane.f32.xlu0 %v713
        %v715 = vpop.xlane.xlu0 %714
        %v716 = vadd.f32 %v636, %v637
        %717 = vadd.xlane.f32.xlu0 %v716
        %v718 = vpop.xlane.xlu0 %717
        %v719 = vadd.f32 %v638, %v639
        %720 = vadd.xlane.f32.xlu0 %v719
        %v721 = vpop.xlane.xlu0 %720
        %v722 = vadd.f32 %v640, %v641
        %723 = vadd.xlane.f32.xlu0 %v722
        %v724 = vpop.xlane.xlu0 %723
        %v725 = vadd.f32 %v642, %v643
        %726 = vadd.xlane.f32.xlu0 %v725
        %v727 = vpop.xlane.xlu0 %726
        %v728 = vadd.f32 %v644, %v645
        %729 = vadd.xlane.f32.xlu0 %v728
        %v730 = vpop.xlane.xlu0 %729
        %v731 = vadd.f32 %v646, %v647
        %732 = vadd.xlane.f32.xlu0 %v731
        %v733 = vpop.xlane.xlu0 %732
        %v734 = vadd.f32 %v648, %v649
        %735 = vadd.xlane.f32.xlu0 %v734
        %v736 = vpop.xlane.xlu0 %735
        %v737 = vadd.f32 %v650, %v651
        %738 = vadd.xlane.f32.xlu0 %v737
        %v739 = vpop.xlane.xlu0 %738
        %v740 = vadd.f32 %v652, %v653
        %741 = vadd.xlane.f32.xlu0 %v740
        %v742 = vpop.xlane.xlu0 %741
        %v743 = vadd.f32 %v654, %v655
        %744 = vadd.xlane.f32.xlu0 %v743
        %v745 = vpop.xlane.xlu0 %744
        %v746 = vadd.f32 %v656, %v657
        %747 = vadd.xlane.f32.xlu0 %v746
        %v748 = vpop.xlane.xlu0 %747
        %v749 = vadd.f32 %v658, %v659
        %750 = vadd.xlane.f32.xlu0 %v749
        %v751 = vpop.xlane.xlu0 %750
        %v752 = vadd.f32 %v660, %v661
        %753 = vadd.xlane.f32.xlu0 %v752
        %v754 = vpop.xlane.xlu0 %753
        %v755 = vadd.f32 %v662, %v663
        %756 = vadd.xlane.f32.xlu0 %v755
        %v757 = vpop.xlane.xlu0 %756
        %v758 = vadd.f32 %v664, %v665
        %759 = vadd.xlane.f32.xlu0 %v758
        %v760 = vpop.xlane.xlu0 %759
        %v761 = vadd.f32 %v666, %v667
        %762 = vadd.xlane.f32.xlu0 %v761
        %v763 = vpop.xlane.xlu0 %762
        %v764 = vmul.f32 %v670, %v507
        %v765 = vmul.f32 %v673, %v507
        %v766 = vmul.f32 %v676, %v507
        %v767 = vmul.f32 %v679, %v507
        %v768 = vmul.f32 %v682, %v507
        %v769 = vmul.f32 %v685, %v507
        %v770 = vmul.f32 %v688, %v507
        %v771 = vmul.f32 %v691, %v507
        %v772 = vmul.f32 %v694, %v507
        %v773 = vmul.f32 %v697, %v507
        %v774 = vmul.f32 %v700, %v507
        %v775 = vmul.f32 %v703, %v507
        %v776 = vmul.f32 %v706, %v507
        %v777 = vmul.f32 %v709, %v507
        %v778 = vmul.f32 %v712, %v507
        %v779 = vmul.f32 %v715, %v507
        %v780 = vmul.f32 %v718, %v507
        %v781 = vmul.f32 %v721, %v507
        %v782 = vmul.f32 %v724, %v507
        %v783 = vmul.f32 %v727, %v507
        %v784 = vmul.f32 %v730, %v507
        %v785 = vmul.f32 %v733, %v507
        %v786 = vmul.f32 %v736, %v507
        %v787 = vmul.f32 %v739, %v507
        %v788 = vmul.f32 %v742, %v507
        %v789 = vmul.f32 %v745, %v507
        %v790 = vmul.f32 %v748, %v507
        %v791 = vmul.f32 %v751, %v507
        %v792 = vmul.f32 %v754, %v507
        %v793 = vmul.f32 %v757, %v507
        %v794 = vmul.f32 %v760, %v507
        %v795 = vmul.f32 %v763, %v507
        %v796 = vadd.f32 %v764, 1e-05
        %v797 = vadd.f32 %v765, 1e-05
        %v798 = vadd.f32 %v766, 1e-05
        %v799 = vadd.f32 %v767, 1e-05
        %v800 = vadd.f32 %v768, 1e-05
        %v801 = vadd.f32 %v769, 1e-05
        %v802 = vadd.f32 %v770, 1e-05
        %v803 = vadd.f32 %v771, 1e-05
        %v804 = vadd.f32 %v772, 1e-05
        %v805 = vadd.f32 %v773, 1e-05
        %v806 = vadd.f32 %v774, 1e-05
        %v807 = vadd.f32 %v775, 1e-05
        %v808 = vadd.f32 %v776, 1e-05
        %v809 = vadd.f32 %v777, 1e-05
        %v810 = vadd.f32 %v778, 1e-05
        %v811 = vadd.f32 %v779, 1e-05
        %v812 = vadd.f32 %v780, 1e-05
        %v813 = vadd.f32 %v781, 1e-05
        %v814 = vadd.f32 %v782, 1e-05
        %v815 = vadd.f32 %v783, 1e-05
        %v816 = vadd.f32 %v784, 1e-05
        %v817 = vadd.f32 %v785, 1e-05
        %v818 = vadd.f32 %v786, 1e-05
        %v819 = vadd.f32 %v787, 1e-05
        %v820 = vadd.f32 %v788, 1e-05
        %v821 = vadd.f32 %v789, 1e-05
        %v822 = vadd.f32 %v790, 1e-05
        %v823 = vadd.f32 %v791, 1e-05
        %v824 = vadd.f32 %v792, 1e-05
        %v825 = vadd.f32 %v793, 1e-05
        %v826 = vadd.f32 %v794, 1e-05
        %v827 = vadd.f32 %v795, 1e-05
        %v828 = vrsqrt.pop %v796
        %v829 = vrsqrt.pop %v797
        %v830 = vrsqrt.pop %v798
        %v831 = vrsqrt.pop %v799
        %v832 = vrsqrt.pop %v800
        %v833 = vrsqrt.pop %v801
        %v834 = vrsqrt.pop %v802
        %v835 = vrsqrt.pop %v803
        %v836 = vrsqrt.pop %v804
        %v837 = vrsqrt.pop %v805
        %v838 = vrsqrt.pop %v806
        %v839 = vrsqrt.pop %v807
        %v840 = vrsqrt.pop %v808
        %v841 = vrsqrt.pop %v809
        %v842 = vrsqrt.pop %v810
        %v843 = vrsqrt.pop %v811
        %v844 = vrsqrt.pop %v812
        %v845 = vrsqrt.pop %v813
        %v846 = vrsqrt.pop %v814
        %v847 = vrsqrt.pop %v815
        %v848 = vrsqrt.pop %v816
        %v849 = vrsqrt.pop %v817
        %v850 = vrsqrt.pop %v818
        %v851 = vrsqrt.pop %v819
        %v852 = vrsqrt.pop %v820
        %v853 = vrsqrt.pop %v821
        %v854 = vrsqrt.pop %v822
        %v855 = vrsqrt.pop %v823
        %v856 = vrsqrt.pop %v824
        %v857 = vrsqrt.pop %v825
        %v858 = vrsqrt.pop %v826
        %v859 = vrsqrt.pop %v827
        %v860 = vld [vmem:[%s1] sm:$0x3]
        %v862 = vlaneseq
        %v863 = vshrl.u32 %v862, 7
        %v864 = vsub.s32 0, %v863
        %v865 = vrot.slane %v860, %v864
        %v866 = vlaneseq
        %v867 = vshrl.u32 %v866, 7
        %v868 = vsub.s32 1, %v867
        %v869 = vrot.slane %v860, %v868
        %v872 = vmul.f32 %v828, %v865
        %v873 = vmul.f32 %v828, %v869
        %v874 = vmul.f32 %v829, %v865
        %v875 = vmul.f32 %v829, %v869
        %v876 = vmul.f32 %v830, %v865
        %v877 = vmul.f32 %v830, %v869
        %v878 = vmul.f32 %v831, %v865
        %v879 = vmul.f32 %v831, %v869
        %v880 = vmul.f32 %v832, %v865
        %v881 = vmul.f32 %v832, %v869
        %v882 = vmul.f32 %v833, %v865
        %v883 = vmul.f32 %v833, %v869
        %v884 = vmul.f32 %v834, %v865
        %v885 = vmul.f32 %v834, %v869
        %v886 = vmul.f32 %v835, %v865
        %v887 = vmul.f32 %v835, %v869
        %v888 = vmul.f32 %v836, %v865
        %v889 = vmul.f32 %v836, %v869
        %v890 = vmul.f32 %v837, %v865
        %v891 = vmul.f32 %v837, %v869
        %v892 = vmul.f32 %v838, %v865
        %v893 = vmul.f32 %v838, %v869
        %v894 = vmul.f32 %v839, %v865
        %v895 = vmul.f32 %v839, %v869
        %v896 = vmul.f32 %v840, %v865
        %v897 = vmul.f32 %v840, %v869
        %v898 = vmul.f32 %v841, %v865
        %v899 = vmul.f32 %v841, %v869
        %v900 = vmul.f32 %v842, %v865
        %v901 = vmul.f32 %v842, %v869
        %v902 = vmul.f32 %v843, %v865
        %v903 = vmul.f32 %v843, %v869
        %v904 = vmul.f32 %v844, %v865
        %v905 = vmul.f32 %v844, %v869
        %v906 = vmul.f32 %v845, %v865
        %v907 = vmul.f32 %v845, %v869
        %v908 = vmul.f32 %v846, %v865
        %v909 = vmul.f32 %v846, %v869
        %v910 = vmul.f32 %v847, %v865
        %v911 = vmul.f32 %v847, %v869
        %v912 = vmul.f32 %v848, %v865
        %v913 = vmul.f32 %v848, %v869
        %v914 = vmul.f32 %v849, %v865
        %v915 = vmul.f32 %v849, %v869
        %v916 = vmul.f32 %v850, %v865
        %v917 = vmul.f32 %v850, %v869
        %v918 = vmul.f32 %v851, %v865
        %v919 = vmul.f32 %v851, %v869
        %v920 = vmul.f32 %v852, %v865
        %v921 = vmul.f32 %v852, %v869
        %v922 = vmul.f32 %v853, %v865
        %v923 = vmul.f32 %v853, %v869
        %v924 = vmul.f32 %v854, %v865
        %v925 = vmul.f32 %v854, %v869
        %v926 = vmul.f32 %v855, %v865
        %v927 = vmul.f32 %v855, %v869
        %v928 = vmul.f32 %v856, %v865
        %v929 = vmul.f32 %v856, %v869
        %v930 = vmul.f32 %v857, %v865
        %v931 = vmul.f32 %v857, %v869
        %v932 = vmul.f32 %v858, %v865
        %v933 = vmul.f32 %v858, %v869
        %v934 = vmul.f32 %v859, %v865
        %v935 = vmul.f32 %v859, %v869
        %v936 = vmul.f32 %v540, %v872
        %v937 = vmul.f32 %v541, %v873
        %v938 = vmul.f32 %v542, %v874
        %v939 = vmul.f32 %v543, %v875
        %v940 = vmul.f32 %v544, %v876
        %v941 = vmul.f32 %v545, %v877
        %v942 = vmul.f32 %v546, %v878
        %v943 = vmul.f32 %v547, %v879
        %v944 = vmul.f32 %v548, %v880
        %v945 = vmul.f32 %v549, %v881
        %v946 = vmul.f32 %v550, %v882
        %v947 = vmul.f32 %v551, %v883
        %v948 = vmul.f32 %v552, %v884
        %v949 = vmul.f32 %v553, %v885
        %v950 = vmul.f32 %v554, %v886
        %v951 = vmul.f32 %v555, %v887
        %v952 = vmul.f32 %v556, %v888
        %v953 = vmul.f32 %v557, %v889
        %v954 = vmul.f32 %v558, %v890
        %v955 = vmul.f32 %v559, %v891
        %v956 = vmul.f32 %v560, %v892
        %v957 = vmul.f32 %v561, %v893
        %v958 = vmul.f32 %v562, %v894
        %v959 = vmul.f32 %v563, %v895
        %v960 = vmul.f32 %v564, %v896
        %v961 = vmul.f32 %v565, %v897
        %v962 = vmul.f32 %v566, %v898
        %v963 = vmul.f32 %v567, %v899
        %v964 = vmul.f32 %v568, %v900
        %v965 = vmul.f32 %v569, %v901
        %v966 = vmul.f32 %v570, %v902
        %v967 = vmul.f32 %v571, %v903
        %v968 = vmul.f32 %v572, %v904
        %v969 = vmul.f32 %v573, %v905
        %v970 = vmul.f32 %v574, %v906
        %v971 = vmul.f32 %v575, %v907
        %v972 = vmul.f32 %v576, %v908
        %v973 = vmul.f32 %v577, %v909
        %v974 = vmul.f32 %v578, %v910
        %v975 = vmul.f32 %v579, %v911
        %v976 = vmul.f32 %v580, %v912
        %v977 = vmul.f32 %v581, %v913
        %v978 = vmul.f32 %v582, %v914
        %v979 = vmul.f32 %v583, %v915
        %v980 = vmul.f32 %v584, %v916
        %v981 = vmul.f32 %v585, %v917
        %v982 = vmul.f32 %v586, %v918
        %v983 = vmul.f32 %v587, %v919
        %v984 = vmul.f32 %v588, %v920
        %v985 = vmul.f32 %v589, %v921
        %v986 = vmul.f32 %v590, %v922
        %v987 = vmul.f32 %v591, %v923
        %v988 = vmul.f32 %v592, %v924
        %v989 = vmul.f32 %v593, %v925
        %v990 = vmul.f32 %v594, %v926
        %v991 = vmul.f32 %v595, %v927
        %v992 = vmul.f32 %v596, %v928
        %v993 = vmul.f32 %v597, %v929
        %v994 = vmul.f32 %v598, %v930
        %v995 = vmul.f32 %v599, %v931
        %v996 = vmul.f32 %v600, %v932
        %v997 = vmul.f32 %v601, %v933
        %v998 = vmul.f32 %v602, %v934
        %v999 = vmul.f32 %v603, %v935
        %v1000 = vld [vmem:[#allocation5] sm:$0x3]
        %v1002 = vlaneseq
        %v1003 = vshrl.u32 %v1002, 7
        %v1004 = vsub.s32 0, %v1003
        %v1005 = vrot.slane %v1000, %v1004
        %v1006 = vlaneseq
        %v1007 = vshrl.u32 %v1006, 7
        %v1008 = vsub.s32 1, %v1007
        %v1009 = vrot.slane %v1000, %v1008
        %v1012 = vadd.f32 %v936, %v1005
        %v1013 = vadd.f32 %v937, %v1009
        %v1014 = vadd.f32 %v938, %v1005
        %v1015 = vadd.f32 %v939, %v1009
        %v1016 = vadd.f32 %v940, %v1005
        %v1017 = vadd.f32 %v941, %v1009
        %v1018 = vadd.f32 %v942, %v1005
        %v1019 = vadd.f32 %v943, %v1009
        %v1020 = vadd.f32 %v944, %v1005
        %v1021 = vadd.f32 %v945, %v1009
        %v1022 = vadd.f32 %v946, %v1005
        %v1023 = vadd.f32 %v947, %v1009
        %v1024 = vadd.f32 %v948, %v1005
        %v1025 = vadd.f32 %v949, %v1009
        %v1026 = vadd.f32 %v950, %v1005
        %v1027 = vadd.f32 %v951, %v1009
        %v1028 = vadd.f32 %v952, %v1005
        %v1029 = vadd.f32 %v953, %v1009
        %v1030 = vadd.f32 %v954, %v1005
        %v1031 = vadd.f32 %v955, %v1009
        %v1032 = vadd.f32 %v956, %v1005
        %v1033 = vadd.f32 %v957, %v1009
        %v1034 = vadd.f32 %v958, %v1005
        %v1035 = vadd.f32 %v959, %v1009
        %v1036 = vadd.f32 %v960, %v1005
        %v1037 = vadd.f32 %v961, %v1009
        %v1038 = vadd.f32 %v962, %v1005
        %v1039 = vadd.f32 %v963, %v1009
        %v1040 = vadd.f32 %v964, %v1005
        %v1041 = vadd.f32 %v965, %v1009
        %v1042 = vadd.f32 %v966, %v1005
        %v1043 = vadd.f32 %v967, %v1009
        %v1044 = vadd.f32 %v968, %v1005
        %v1045 = vadd.f32 %v969, %v1009
        %v1046 = vadd.f32 %v970, %v1005
        %v1047 = vadd.f32 %v971, %v1009
        %v1048 = vadd.f32 %v972, %v1005
        %v1049 = vadd.f32 %v973, %v1009
        %v1050 = vadd.f32 %v974, %v1005
        %v1051 = vadd.f32 %v975, %v1009
        %v1052 = vadd.f32 %v976, %v1005
        %v1053 = vadd.f32 %v977, %v1009
        %v1054 = vadd.f32 %v978, %v1005
        %v1055 = vadd.f32 %v979, %v1009
        %v1056 = vadd.f32 %v980, %v1005
        %v1057 = vadd.f32 %v981, %v1009
        %v1058 = vadd.f32 %v982, %v1005
        %v1059 = vadd.f32 %v983, %v1009
        %v1060 = vadd.f32 %v984, %v1005
        %v1061 = vadd.f32 %v985, %v1009
        %v1062 = vadd.f32 %v986, %v1005
        %v1063 = vadd.f32 %v987, %v1009
        %v1064 = vadd.f32 %v988, %v1005
        %v1065 = vadd.f32 %v989, %v1009
        %v1066 = vadd.f32 %v990, %v1005
        %v1067 = vadd.f32 %v991, %v1009
        %v1068 = vadd.f32 %v992, %v1005
        %v1069 = vadd.f32 %v993, %v1009
        %v1070 = vadd.f32 %v994, %v1005
        %v1071 = vadd.f32 %v995, %v1009
        %v1072 = vadd.f32 %v996, %v1005
        %v1073 = vadd.f32 %v997, %v1009
        %v1074 = vadd.f32 %v998, %v1005
        %v1075 = vadd.f32 %v999, %v1009
        %v1076 = vpack.c.bf16 %v1014, %v1012
        %v1077 = vpack.c.bf16 %v1015, %v1013
        %v1078 = vpack.c.bf16 %v1018, %v1016
        %v1079 = vpack.c.bf16 %v1019, %v1017
        %v1080 = vpack.c.bf16 %v1022, %v1020
        %v1081 = vpack.c.bf16 %v1023, %v1021
        %v1082 = vpack.c.bf16 %v1026, %v1024
        %v1083 = vpack.c.bf16 %v1027, %v1025
        %v1084 = vpack.c.bf16 %v1030, %v1028
        %v1085 = vpack.c.bf16 %v1031, %v1029
        %v1086 = vpack.c.bf16 %v1034, %v1032
        %v1087 = vpack.c.bf16 %v1035, %v1033
        %v1088 = vpack.c.bf16 %v1038, %v1036
        %v1089 = vpack.c.bf16 %v1039, %v1037
        %v1090 = vpack.c.bf16 %v1042, %v1040
        %v1091 = vpack.c.bf16 %v1043, %v1041
        %v1092 = vpack.c.bf16 %v1046, %v1044
        %v1093 = vpack.c.bf16 %v1047, %v1045
        %v1094 = vpack.c.bf16 %v1050, %v1048
        %v1095 = vpack.c.bf16 %v1051, %v1049
        %v1096 = vpack.c.bf16 %v1054, %v1052
        %v1097 = vpack.c.bf16 %v1055, %v1053
        %v1098 = vpack.c.bf16 %v1058, %v1056
        %v1099 = vpack.c.bf16 %v1059, %v1057
        %v1100 = vpack.c.bf16 %v1062, %v1060
        %v1101 = vpack.c.bf16 %v1063, %v1061
        %v1102 = vpack.c.bf16 %v1066, %v1064
        %v1103 = vpack.c.bf16 %v1067, %v1065
        %v1104 = vpack.c.bf16 %v1070, %v1068
        %v1105 = vpack.c.bf16 %v1071, %v1069
        %v1106 = vpack.c.bf16 %v1074, %v1072
        %v1107 = vpack.c.bf16 %v1075, %v1073
        %v1108 = vld [vmem:[#allocation7] sm:$0xff]
        %v1109 = vld [vmem:[#allocation7 + $0x8] sm:$0xff]
        %v1110 = vld [vmem:[#allocation7 + $0x10] sm:$0xff]
        %v1111 = vld [vmem:[#allocation7 + $0x18] sm:$0xff]
        %v1112 = vld [vmem:[#allocation7 + $0x20] sm:$0xff]
        %v1113 = vld [vmem:[#allocation7 + $0x28] sm:$0xff]
        %v1114 = vld [vmem:[#allocation7 + $0x30] sm:$0xff]
        %v1115 = vld [vmem:[#allocation7 + $0x38] sm:$0xff]
        %v1116 = vld [vmem:[#allocation7 + $0x40] sm:$0xff]
        %v1117 = vld [vmem:[#allocation7 + $0x48] sm:$0xff]
        %v1118 = vld [vmem:[#allocation7 + $0x50] sm:$0xff]
        %v1119 = vld [vmem:[#allocation7 + $0x58] sm:$0xff]
        %v1120 = vld [vmem:[#allocation7 + $0x60] sm:$0xff]
        %v1121 = vld [vmem:[#allocation7 + $0x68] sm:$0xff]
        %v1122 = vld [vmem:[#allocation7 + $0x70] sm:$0xff]
        %v1123 = vld [vmem:[#allocation7 + $0x78] sm:$0xff]
        %v1124 = vld [vmem:[#allocation7 + $0x80] sm:$0xff]
        %v1125 = vld [vmem:[#allocation7 + $0x88] sm:$0xff]
        %v1126 = vld [vmem:[#allocation7 + $0x90] sm:$0xff]
        %v1127 = vld [vmem:[#allocation7 + $0x98] sm:$0xff]
        %v1128 = vld [vmem:[#allocation7 + $0xa0] sm:$0xff]
        %v1129 = vld [vmem:[#allocation7 + $0xa8] sm:$0xff]
        %v1130 = vld [vmem:[#allocation7 + $0xb0] sm:$0xff]
        %v1131 = vld [vmem:[#allocation7 + $0xb8] sm:$0xff]
        %v1132 = vld [vmem:[#allocation7 + $0xc0] sm:$0xff]
        %v1133 = vld [vmem:[#allocation7 + $0xc8] sm:$0xff]
        %v1134 = vld [vmem:[#allocation7 + $0xd0] sm:$0xff]
        %v1135 = vld [vmem:[#allocation7 + $0xd8] sm:$0xff]
        %v1136 = vld [vmem:[#allocation7 + $0xe0] sm:$0xff]
        %v1137 = vld [vmem:[#allocation7 + $0xe8] sm:$0xff]
        %v1138 = vld [vmem:[#allocation7 + $0xf0] sm:$0xff]
        %v1139 = vld [vmem:[#allocation7 + $0xf8] sm:$0xff]
        %v1140 = vld [vmem:[#allocation7 + $0x100] sm:$0xff]
        %v1141 = vld [vmem:[#allocation7 + $0x108] sm:$0xff]
        %v1142 = vld [vmem:[#allocation7 + $0x110] sm:$0xff]
        %v1143 = vld [vmem:[#allocation7 + $0x118] sm:$0xff]
        %v1144 = vld [vmem:[#allocation7 + $0x120] sm:$0xff]
        %v1145 = vld [vmem:[#allocation7 + $0x128] sm:$0xff]
        %v1146 = vld [vmem:[#allocation7 + $0x130] sm:$0xff]
        %v1147 = vld [vmem:[#allocation7 + $0x138] sm:$0xff]
        %v1148 = vld [vmem:[#allocation7 + $0x140] sm:$0xff]
        %v1149 = vld [vmem:[#allocation7 + $0x148] sm:$0xff]
        %v1150 = vld [vmem:[#allocation7 + $0x150] sm:$0xff]
        %v1151 = vld [vmem:[#allocation7 + $0x158] sm:$0xff]
        %v1152 = vld [vmem:[#allocation7 + $0x160] sm:$0xff]
        %v1153 = vld [vmem:[#allocation7 + $0x168] sm:$0xff]
        %v1154 = vld [vmem:[#allocation7 + $0x170] sm:$0xff]
        %v1155 = vld [vmem:[#allocation7 + $0x178] sm:$0xff]
        %v1156 = vld [vmem:[#allocation7 + $0x180] sm:$0xff]
        %v1157 = vld [vmem:[#allocation7 + $0x188] sm:$0xff]
        %v1158 = vld [vmem:[#allocation7 + $0x190] sm:$0xff]
        %v1159 = vld [vmem:[#allocation7 + $0x198] sm:$0xff]
        %v1160 = vld [vmem:[#allocation7 + $0x1a0] sm:$0xff]
        %v1161 = vld [vmem:[#allocation7 + $0x1a8] sm:$0xff]
        %v1162 = vld [vmem:[#allocation7 + $0x1b0] sm:$0xff]
        %v1163 = vld [vmem:[#allocation7 + $0x1b8] sm:$0xff]
        %v1164 = vld [vmem:[#allocation7 + $0x1c0] sm:$0xff]
        %v1165 = vld [vmem:[#allocation7 + $0x1c8] sm:$0xff]
        %v1166 = vld [vmem:[#allocation7 + $0x1d0] sm:$0xff]
        %v1167 = vld [vmem:[#allocation7 + $0x1d8] sm:$0xff]
        %v1168 = vld [vmem:[#allocation7 + $0x1e0] sm:$0xff]
        %v1169 = vld [vmem:[#allocation7 + $0x1e8] sm:$0xff]
        %v1170 = vld [vmem:[#allocation7 + $0x1f0] sm:$0xff]
        %v1171 = vld [vmem:[#allocation7 + $0x1f8] sm:$0xff]
        %v1172 = vld [vmem:[%s4] sm:$0xf]
        %v1174 = vlaneseq
        %v1175 = vshrl.u32 %v1174, 7
        %v1176 = vsub.s32 0, %v1175
        %v1177 = vrot.slane %v1172, %v1176
        %v1178 = vlaneseq
        %v1179 = vshrl.u32 %v1178, 7
        %v1180 = vsub.s32 1, %v1179
        %v1181 = vrot.slane %v1172, %v1180
        %v1182 = vlaneseq
        %v1183 = vshrl.u32 %v1182, 7
        %v1184 = vsub.s32 2, %v1183
        %v1185 = vrot.slane %v1172, %v1184
        %v1186 = vlaneseq
        %v1187 = vshrl.u32 %v1186, 7
        %v1188 = vsub.s32 3, %v1187
        %v1189 = vrot.slane %v1172, %v1188
        %v1258 = vunpack.c.l.b16 %v1108
        %v1259 = vunpack.c.h.b16 %v1108
        %v1260 = vunpack.c.l.b16 %v1109
        %v1261 = vunpack.c.h.b16 %v1109
        %v1262 = vunpack.c.l.b16 %v1110
        %v1263 = vunpack.c.h.b16 %v1110
        %v1264 = vunpack.c.l.b16 %v1111
        %v1265 = vunpack.c.h.b16 %v1111
        %v1266 = vunpack.c.l.b16 %v1112
        %v1267 = vunpack.c.h.b16 %v1112
        %v1268 = vunpack.c.l.b16 %v1113
        %v1269 = vunpack.c.h.b16 %v1113
        %v1270 = vunpack.c.l.b16 %v1114
        %v1271 = vunpack.c.h.b16 %v1114
        %v1272 = vunpack.c.l.b16 %v1115
        %v1273 = vunpack.c.h.b16 %v1115
        %v1274 = vunpack.c.l.b16 %v1116
        %v1275 = vunpack.c.h.b16 %v1116
        %v1276 = vunpack.c.l.b16 %v1117
        %v1277 = vunpack.c.h.b16 %v1117
        %v1278 = vunpack.c.l.b16 %v1118
        %v1279 = vunpack.c.h.b16 %v1118
        %v1280 = vunpack.c.l.b16 %v1119
        %v1281 = vunpack.c.h.b16 %v1119
        %v1282 = vunpack.c.l.b16 %v1120
        %v1283 = vunpack.c.h.b16 %v1120
        %v1284 = vunpack.c.l.b16 %v1121
        %v1285 = vunpack.c.h.b16 %v1121
        %v1286 = vunpack.c.l.b16 %v1122
        %v1287 = vunpack.c.h.b16 %v1122
        %v1288 = vunpack.c.l.b16 %v1123
        %v1289 = vunpack.c.h.b16 %v1123
        %v1290 = vunpack.c.l.b16 %v1124
        %v1291 = vunpack.c.h.b16 %v1124
        %v1292 = vunpack.c.l.b16 %v1125
        %v1293 = vunpack.c.h.b16 %v1125
        %v1294 = vunpack.c.l.b16 %v1126
        %v1295 = vunpack.c.h.b16 %v1126
        %v1296 = vunpack.c.l.b16 %v1127
        %v1297 = vunpack.c.h.b16 %v1127
        %v1298 = vunpack.c.l.b16 %v1128
        %v1299 = vunpack.c.h.b16 %v1128
        %v1300 = vunpack.c.l.b16 %v1129
        %v1301 = vunpack.c.h.b16 %v1129
        %v1302 = vunpack.c.l.b16 %v1130
        %v1303 = vunpack.c.h.b16 %v1130
        %v1304 = vunpack.c.l.b16 %v1131
        %v1305 = vunpack.c.h.b16 %v1131
        %v1306 = vunpack.c.l.b16 %v1132
        %v1307 = vunpack.c.h.b16 %v1132
        %v1308 = vunpack.c.l.b16 %v1133
        %v1309 = vunpack.c.h.b16 %v1133
        %v1310 = vunpack.c.l.b16 %v1134
        %v1311 = vunpack.c.h.b16 %v1134
        %v1312 = vunpack.c.l.b16 %v1135
        %v1313 = vunpack.c.h.b16 %v1135
        %v1314 = vunpack.c.l.b16 %v1136
        %v1315 = vunpack.c.h.b16 %v1136
        %v1316 = vunpack.c.l.b16 %v1137
        %v1317 = vunpack.c.h.b16 %v1137
        %v1318 = vunpack.c.l.b16 %v1138
        %v1319 = vunpack.c.h.b16 %v1138
        %v1320 = vunpack.c.l.b16 %v1139
        %v1321 = vunpack.c.h.b16 %v1139
        %v1322 = vunpack.c.l.b16 %v1140
        %v1323 = vunpack.c.h.b16 %v1140
        %v1324 = vunpack.c.l.b16 %v1141
        %v1325 = vunpack.c.h.b16 %v1141
        %v1326 = vunpack.c.l.b16 %v1142
        %v1327 = vunpack.c.h.b16 %v1142
        %v1328 = vunpack.c.l.b16 %v1143
        %v1329 = vunpack.c.h.b16 %v1143
        %v1330 = vunpack.c.l.b16 %v1144
        %v1331 = vunpack.c.h.b16 %v1144
        %v1332 = vunpack.c.l.b16 %v1145
        %v1333 = vunpack.c.h.b16 %v1145
        %v1334 = vunpack.c.l.b16 %v1146
        %v1335 = vunpack.c.h.b16 %v1146
        %v1336 = vunpack.c.l.b16 %v1147
        %v1337 = vunpack.c.h.b16 %v1147
        %v1338 = vunpack.c.l.b16 %v1148
        %v1339 = vunpack.c.h.b16 %v1148
        %v1340 = vunpack.c.l.b16 %v1149
        %v1341 = vunpack.c.h.b16 %v1149
        %v1342 = vunpack.c.l.b16 %v1150
        %v1343 = vunpack.c.h.b16 %v1150
        %v1344 = vunpack.c.l.b16 %v1151
        %v1345 = vunpack.c.h.b16 %v1151
        %v1346 = vunpack.c.l.b16 %v1152
        %v1347 = vunpack.c.h.b16 %v1152
        %v1348 = vunpack.c.l.b16 %v1153
        %v1349 = vunpack.c.h.b16 %v1153
        %v1350 = vunpack.c.l.b16 %v1154
        %v1351 = vunpack.c.h.b16 %v1154
        %v1352 = vunpack.c.l.b16 %v1155
        %v1353 = vunpack.c.h.b16 %v1155
        %v1354 = vunpack.c.l.b16 %v1156
        %v1355 = vunpack.c.h.b16 %v1156
        %v1356 = vunpack.c.l.b16 %v1157
        %v1357 = vunpack.c.h.b16 %v1157
        %v1358 = vunpack.c.l.b16 %v1158
        %v1359 = vunpack.c.h.b16 %v1158
        %v1360 = vunpack.c.l.b16 %v1159
        %v1361 = vunpack.c.h.b16 %v1159
        %v1362 = vunpack.c.l.b16 %v1160
        %v1363 = vunpack.c.h.b16 %v1160
        %v1364 = vunpack.c.l.b16 %v1161
        %v1365 = vunpack.c.h.b16 %v1161
        %v1366 = vunpack.c.l.b16 %v1162
        %v1367 = vunpack.c.h.b16 %v1162
        %v1368 = vunpack.c.l.b16 %v1163
        %v1369 = vunpack.c.h.b16 %v1163
        %v1370 = vunpack.c.l.b16 %v1164
        %v1371 = vunpack.c.h.b16 %v1164
        %v1372 = vunpack.c.l.b16 %v1165
        %v1373 = vunpack.c.h.b16 %v1165
        %v1374 = vunpack.c.l.b16 %v1166
        %v1375 = vunpack.c.h.b16 %v1166
        %v1376 = vunpack.c.l.b16 %v1167
        %v1377 = vunpack.c.h.b16 %v1167
        %v1378 = vunpack.c.l.b16 %v1168
        %v1379 = vunpack.c.h.b16 %v1168
        %v1380 = vunpack.c.l.b16 %v1169
        %v1381 = vunpack.c.h.b16 %v1169
        %v1382 = vunpack.c.l.b16 %v1170
        %v1383 = vunpack.c.h.b16 %v1170
        %v1384 = vunpack.c.l.b16 %v1171
        %v1385 = vunpack.c.h.b16 %v1171
        %v1386 = vpack.c.b16 %v1262, %v1258
        %v1387 = vpack.c.b16 %v1263, %v1259
        %v1388 = vpack.c.b16 %v1264, %v1260
        %v1389 = vpack.c.b16 %v1265, %v1261
        %v1390 = vpack.c.b16 %v1270, %v1266
        %v1391 = vpack.c.b16 %v1271, %v1267
        %v1392 = vpack.c.b16 %v1272, %v1268
        %v1393 = vpack.c.b16 %v1273, %v1269
        %v1394 = vpack.c.b16 %v1278, %v1274
        %v1395 = vpack.c.b16 %v1279, %v1275
        %v1396 = vpack.c.b16 %v1280, %v1276
        %v1397 = vpack.c.b16 %v1281, %v1277
        %v1398 = vpack.c.b16 %v1286, %v1282
        %v1399 = vpack.c.b16 %v1287, %v1283
        %v1400 = vpack.c.b16 %v1288, %v1284
        %v1401 = vpack.c.b16 %v1289, %v1285
        %v1402 = vpack.c.b16 %v1294, %v1290
        %v1403 = vpack.c.b16 %v1295, %v1291
        %v1404 = vpack.c.b16 %v1296, %v1292
        %v1405 = vpack.c.b16 %v1297, %v1293
        %v1406 = vpack.c.b16 %v1302, %v1298
        %v1407 = vpack.c.b16 %v1303, %v1299
        %v1408 = vpack.c.b16 %v1304, %v1300
        %v1409 = vpack.c.b16 %v1305, %v1301
        %v1410 = vpack.c.b16 %v1310, %v1306
        %v1411 = vpack.c.b16 %v1311, %v1307
        %v1412 = vpack.c.b16 %v1312, %v1308
        %v1413 = vpack.c.b16 %v1313, %v1309
        %v1414 = vpack.c.b16 %v1318, %v1314
        %v1415 = vpack.c.b16 %v1319, %v1315
        %v1416 = vpack.c.b16 %v1320, %v1316
        %v1417 = vpack.c.b16 %v1321, %v1317
        %v1418 = vpack.c.b16 %v1326, %v1322
        %v1419 = vpack.c.b16 %v1327, %v1323
        %v1420 = vpack.c.b16 %v1328, %v1324
        %v1421 = vpack.c.b16 %v1329, %v1325
        %v1422 = vpack.c.b16 %v1334, %v1330
        %v1423 = vpack.c.b16 %v1335, %v1331
        %v1424 = vpack.c.b16 %v1336, %v1332
        %v1425 = vpack.c.b16 %v1337, %v1333
        %v1426 = vpack.c.b16 %v1342, %v1338
        %v1427 = vpack.c.b16 %v1343, %v1339
        %v1428 = vpack.c.b16 %v1344, %v1340
        %v1429 = vpack.c.b16 %v1345, %v1341
        %v1430 = vpack.c.b16 %v1350, %v1346
        %v1431 = vpack.c.b16 %v1351, %v1347
        %v1432 = vpack.c.b16 %v1352, %v1348
        %v1433 = vpack.c.b16 %v1353, %v1349
        %v1434 = vpack.c.b16 %v1358, %v1354
        %v1435 = vpack.c.b16 %v1359, %v1355
        %v1436 = vpack.c.b16 %v1360, %v1356
        %v1437 = vpack.c.b16 %v1361, %v1357
        %v1438 = vpack.c.b16 %v1366, %v1362
        %v1439 = vpack.c.b16 %v1367, %v1363
        %v1440 = vpack.c.b16 %v1368, %v1364
        %v1441 = vpack.c.b16 %v1369, %v1365
        %v1442 = vpack.c.b16 %v1374, %v1370
        %v1443 = vpack.c.b16 %v1375, %v1371
        %v1444 = vpack.c.b16 %v1376, %v1372
        %v1445 = vpack.c.b16 %v1377, %v1373
        %v1446 = vpack.c.b16 %v1382, %v1378
        %v1447 = vpack.c.b16 %v1383, %v1379
        %v1448 = vpack.c.b16 %v1384, %v1380
        %v1449 = vpack.c.b16 %v1385, %v1381
        %1514 = vmatprep.subr.bf16.mxu0 %v1387
        %1515 = vmatpush1.bf16.msra.mxu0 %v1386
        %1516 = vmatprep.subr.bf16.mxu0 %v1391
        %1517 = vmatpush1.bf16.msra.mxu0 %v1390
        %1518 = vmatprep.subr.bf16.mxu0 %v1395
        %1519 = vmatpush1.bf16.msra.mxu0 %v1394
        %1520 = vmatprep.subr.bf16.mxu0 %v1399
        %1521 = vmatpush1.bf16.msra.mxu0 %v1398
        %1522 = vmatprep.subr.bf16.mxu0 %v1403
        %1523 = vmatpush1.bf16.msra.mxu0 %v1402
        %1524 = vmatprep.subr.bf16.mxu0 %v1407
        %1525 = vmatpush1.bf16.msra.mxu0 %v1406
        %1526 = vmatprep.subr.bf16.mxu0 %v1411
        %1527 = vmatpush1.bf16.msra.mxu0 %v1410
        %1528 = vmatprep.subr.bf16.mxu0 %v1415
        %1529 = vmatpush1.bf16.msra.mxu0 %v1414
        %1530 = vmatprep.subr.bf16.mxu0 %v1419
        %1531 = vmatpush1.bf16.msra.mxu0 %v1418
        %1532 = vmatprep.subr.bf16.mxu0 %v1423
        %1533 = vmatpush1.bf16.msra.mxu0 %v1422
        %1534 = vmatprep.subr.bf16.mxu0 %v1427
        %1535 = vmatpush1.bf16.msra.mxu0 %v1426
        %1536 = vmatprep.subr.bf16.mxu0 %v1431
        %1537 = vmatpush1.bf16.msra.mxu0 %v1430
        %1538 = vmatprep.subr.bf16.mxu0 %v1435
        %1539 = vmatpush1.bf16.msra.mxu0 %v1434
        %1540 = vmatprep.subr.bf16.mxu0 %v1439
        %1541 = vmatpush1.bf16.msra.mxu0 %v1438
        %1542 = vmatprep.subr.bf16.mxu0 %v1443
        %1543 = vmatpush1.bf16.msra.mxu0 %v1442
        %1544 = vmatprep.subr.bf16.mxu0 %v1447
        %1545 = vmatpush1.bf16.msra.mxu0 %v1446
        %1546 = vmatprep.mubr.bf16.mxu0 %v1077
        %1547 = vmatmul.mubr.bf16.gmra.mrb[0].mxu0 %v1076
        %v1548 = vpop.f32.mrb[0].mxu0
        %v1549 = vadd.f32 %v1177, %v1548
        %v1550 = vpop.f32.mrb[0].mxu0
        %v1551 = vadd.f32 %v1181, %v1550
        %v1552 = vpop.f32.mrb[0].mxu0
        %v1553 = vadd.f32 %v1177, %v1552
        %v1554 = vpop.f32.mrb[0].mxu0
        %v1555 = vadd.f32 %v1181, %v1554
        %1556 = vmatprep.mubr.bf16.mxu0 %v1079
        %1557 = vmatmul.mubr.bf16.gmra.mrb[0].mxu0 %v1078
        %v1558 = vpop.f32.mrb[0].mxu0
        %v1559 = vadd.f32 %v1177, %v1558
        %v1560 = vpop.f32.mrb[0].mxu0
        %v1561 = vadd.f32 %v1181, %v1560
        %v1562 = vpop.f32.mrb[0].mxu0
        %v1563 = vadd.f32 %v1177, %v1562
        %v1564 = vpop.f32.mrb[0].mxu0
        %v1565 = vadd.f32 %v1181, %v1564
        %1566 = vmatprep.mubr.bf16.mxu0 %v1081
        %1567 = vmatmul.mubr.bf16.gmra.mrb[0].mxu0 %v1080
        %v1568 = vpop.f32.mrb[0].mxu0
        %v1569 = vadd.f32 %v1177, %v1568
        %v1570 = vpop.f32.mrb[0].mxu0
        %v1571 = vadd.f32 %v1181, %v1570
        %v1572 = vpop.f32.mrb[0].mxu0
        %v1573 = vadd.f32 %v1177, %v1572
        %v1574 = vpop.f32.mrb[0].mxu0
        %v1575 = vadd.f32 %v1181, %v1574
        %1576 = vmatprep.mubr.bf16.mxu0 %v1083
        %1577 = vmatmul.mubr.bf16.gmra.mrb[0].mxu0 %v1082
        %v1578 = vpop.f32.mrb[0].mxu0
        %v1579 = vadd.f32 %v1177, %v1578
        %v1580 = vpop.f32.mrb[0].mxu0
        %v1581 = vadd.f32 %v1181, %v1580
        %v1582 = vpop.f32.mrb[0].mxu0
        %v1583 = vadd.f32 %v1177, %v1582
        %v1584 = vpop.f32.mrb[0].mxu0
        %v1585 = vadd.f32 %v1181, %v1584
        %1586 = vmatprep.mubr.bf16.mxu0 %v1085
        %1587 = vmatmul.mubr.bf16.gmra.mrb[0].mxu0 %v1084
        %v1588 = vpop.f32.mrb[0].mxu0
        %v1589 = vadd.f32 %v1177, %v1588
        %v1590 = vpop.f32.mrb[0].mxu0
        %v1591 = vadd.f32 %v1181, %v1590
        %v1592 = vpop.f32.mrb[0].mxu0
        %v1593 = vadd.f32 %v1177, %v1592
        %v1594 = vpop.f32.mrb[0].mxu0
        %v1595 = vadd.f32 %v1181, %v1594
        %1596 = vmatprep.mubr.bf16.mxu0 %v1087
        %1597 = vmatmul.mubr.bf16.gmra.mrb[0].mxu0 %v1086
        %v1598 = vpop.f32.mrb[0].mxu0
        %v1599 = vadd.f32 %v1177, %v1598
        %v1600 = vpop.f32.mrb[0].mxu0
        %v1601 = vadd.f32 %v1181, %v1600
        %v1602 = vpop.f32.mrb[0].mxu0
        %v1603 = vadd.f32 %v1177, %v1602
        %v1604 = vpop.f32.mrb[0].mxu0
        %v1605 = vadd.f32 %v1181, %v1604
        %1606 = vmatprep.mubr.bf16.mxu0 %v1089
        %1607 = vmatmul.mubr.bf16.gmra.mrb[0].mxu0 %v1088
        %v1608 = vpop.f32.mrb[0].mxu0
        %v1609 = vadd.f32 %v1177, %v1608
        %v1610 = vpop.f32.mrb[0].mxu0
        %v1611 = vadd.f32 %v1181, %v1610
        %v1612 = vpop.f32.mrb[0].mxu0
        %v1613 = vadd.f32 %v1177, %v1612
        %v1614 = vpop.f32.mrb[0].mxu0
        %v1615 = vadd.f32 %v1181, %v1614
        %1616 = vmatprep.mubr.bf16.mxu0 %v1091
        %1617 = vmatmul.mubr.bf16.gmra.mrb[0].mxu0 %v1090
        %v1618 = vpop.f32.mrb[0].mxu0
        %v1619 = vadd.f32 %v1177, %v1618
        %v1620 = vpop.f32.mrb[0].mxu0
        %v1621 = vadd.f32 %v1181, %v1620
        %v1622 = vpop.f32.mrb[0].mxu0
        %v1623 = vadd.f32 %v1177, %v1622
        %v1624 = vpop.f32.mrb[0].mxu0
        %v1625 = vadd.f32 %v1181, %v1624
        %1626 = vmatprep.mubr.bf16.mxu0 %v1093
        %1627 = vmatmul.mubr.bf16.gmra.mrb[0].mxu0 %v1092
        %v1628 = vpop.f32.mrb[0].mxu0
        %v1629 = vadd.f32 %v1177, %v1628
        %v1630 = vpop.f32.mrb[0].mxu0
        %v1631 = vadd.f32 %v1181, %v1630
        %v1632 = vpop.f32.mrb[0].mxu0
        %v1633 = vadd.f32 %v1177, %v1632
        %v1634 = vpop.f32.mrb[0].mxu0
        %v1635 = vadd.f32 %v1181, %v1634
        %1636 = vmatprep.mubr.bf16.mxu0 %v1095
        %1637 = vmatmul.mubr.bf16.gmra.mrb[0].mxu0 %v1094
        %v1638 = vpop.f32.mrb[0].mxu0
        %v1639 = vadd.f32 %v1177, %v1638
        %v1640 = vpop.f32.mrb[0].mxu0
        %v1641 = vadd.f32 %v1181, %v1640
        %v1642 = vpop.f32.mrb[0].mxu0
        %v1643 = vadd.f32 %v1177, %v1642
        %v1644 = vpop.f32.mrb[0].mxu0
        %v1645 = vadd.f32 %v1181, %v1644
        %1646 = vmatprep.mubr.bf16.mxu0 %v1097
        %1647 = vmatmul.mubr.bf16.gmra.mrb[0].mxu0 %v1096
        %v1648 = vpop.f32.mrb[0].mxu0
        %v1649 = vadd.f32 %v1177, %v1648
        %v1650 = vpop.f32.mrb[0].mxu0
        %v1651 = vadd.f32 %v1181, %v1650
        %v1652 = vpop.f32.mrb[0].mxu0
        %v1653 = vadd.f32 %v1177, %v1652
        %v1654 = vpop.f32.mrb[0].mxu0
        %v1655 = vadd.f32 %v1181, %v1654
        %1656 = vmatprep.mubr.bf16.mxu0 %v1099
        %1657 = vmatmul.mubr.bf16.gmra.mrb[0].mxu0 %v1098
        %v1658 = vpop.f32.mrb[0].mxu0
        %v1659 = vadd.f32 %v1177, %v1658
        %v1660 = vpop.f32.mrb[0].mxu0
        %v1661 = vadd.f32 %v1181, %v1660
        %v1662 = vpop.f32.mrb[0].mxu0
        %v1663 = vadd.f32 %v1177, %v1662
        %v1664 = vpop.f32.mrb[0].mxu0
        %v1665 = vadd.f32 %v1181, %v1664
        %1666 = vmatprep.mubr.bf16.mxu0 %v1101
        %1667 = vmatmul.mubr.bf16.gmra.mrb[0].mxu0 %v1100
        %v1668 = vpop.f32.mrb[0].mxu0
        %v1669 = vadd.f32 %v1177, %v1668
        %v1670 = vpop.f32.mrb[0].mxu0
        %v1671 = vadd.f32 %v1181, %v1670
        %v1672 = vpop.f32.mrb[0].mxu0
        %v1673 = vadd.f32 %v1177, %v1672
        %v1674 = vpop.f32.mrb[0].mxu0
        %v1675 = vadd.f32 %v1181, %v1674
        %1676 = vmatprep.mubr.bf16.mxu0 %v1103
        %1677 = vmatmul.mubr.bf16.gmra.mrb[0].mxu0 %v1102
        %v1678 = vpop.f32.mrb[0].mxu0
        %v1679 = vadd.f32 %v1177, %v1678
        %v1680 = vpop.f32.mrb[0].mxu0
        %v1681 = vadd.f32 %v1181, %v1680
        %v1682 = vpop.f32.mrb[0].mxu0
        %v1683 = vadd.f32 %v1177, %v1682
        %v1684 = vpop.f32.mrb[0].mxu0
        %v1685 = vadd.f32 %v1181, %v1684
        %1686 = vmatprep.mubr.bf16.mxu0 %v1105
        %1687 = vmatmul.mubr.bf16.gmra.mrb[0].mxu0 %v1104
        %v1688 = vpop.f32.mrb[0].mxu0
        %v1689 = vadd.f32 %v1177, %v1688
        %v1690 = vpop.f32.mrb[0].mxu0
        %v1691 = vadd.f32 %v1181, %v1690
        %v1692 = vpop.f32.mrb[0].mxu0
        %v1693 = vadd.f32 %v1177, %v1692
        %v1694 = vpop.f32.mrb[0].mxu0
        %v1695 = vadd.f32 %v1181, %v1694
        %1696 = vmatprep.mubr.bf16.mxu0 %v1107
        %1697 = vmatmul.mubr.bf16.gmra.mrb[0].mxu0 %v1106
        %v1698 = vpop.f32.mrb[0].mxu0
        %v1699 = vadd.f32 %v1177, %v1698
        %v1700 = vpop.f32.mrb[0].mxu0
        %v1701 = vadd.f32 %v1181, %v1700
        %v1702 = vpop.f32.mrb[0].mxu0
        %v1703 = vadd.f32 %v1177, %v1702
        %v1704 = vpop.f32.mrb[0].mxu0
        %v1705 = vadd.f32 %v1181, %v1704
        %1706 = vdwg.mxu0
        %1707 = vmatprep.subr.bf16.mxu0 %v1389
        %1708 = vmatpush1.bf16.msra.mxu0 %v1388
        %1709 = vmatprep.subr.bf16.mxu0 %v1393
        %1710 = vmatpush1.bf16.msra.mxu0 %v1392
        %1711 = vmatprep.subr.bf16.mxu0 %v1397
        %1712 = vmatpush1.bf16.msra.mxu0 %v1396
        %1713 = vmatprep.subr.bf16.mxu0 %v1401
        %1714 = vmatpush1.bf16.msra.mxu0 %v1400
        %1715 = vmatprep.subr.bf16.mxu0 %v1405
        %1716 = vmatpush1.bf16.msra.mxu0 %v1404
        %1717 = vmatprep.subr.bf16.mxu0 %v1409
        %1718 = vmatpush1.bf16.msra.mxu0 %v1408
        %1719 = vmatprep.subr.bf16.mxu0 %v1413
        %1720 = vmatpush1.bf16.msra.mxu0 %v1412
        %1721 = vmatprep.subr.bf16.mxu0 %v1417
        %1722 = vmatpush1.bf16.msra.mxu0 %v1416
        %1723 = vmatprep.subr.bf16.mxu0 %v1421
        %1724 = vmatpush1.bf16.msra.mxu0 %v1420
        %1725 = vmatprep.subr.bf16.mxu0 %v1425
        %1726 = vmatpush1.bf16.msra.mxu0 %v1424
        %1727 = vmatprep.subr.bf16.mxu0 %v1429
        %1728 = vmatpush1.bf16.msra.mxu0 %v1428
        %1729 = vmatprep.subr.bf16.mxu0 %v1433
        %1730 = vmatpush1.bf16.msra.mxu0 %v1432
        %1731 = vmatprep.subr.bf16.mxu0 %v1437
        %1732 = vmatpush1.bf16.msra.mxu0 %v1436
        %1733 = vmatprep.subr.bf16.mxu0 %v1441
        %1734 = vmatpush1.bf16.msra.mxu0 %v1440
        %1735 = vmatprep.subr.bf16.mxu0 %v1445
        %1736 = vmatpush1.bf16.msra.mxu0 %v1444
        %1737 = vmatprep.subr.bf16.mxu0 %v1449
        %1738 = vmatpush1.bf16.msra.mxu0 %v1448
        %1739 = vmatprep.mubr.bf16.mxu0 %v1077
        %1740 = vmatmul.mubr.bf16.gmra.mrb[0].mxu0 %v1076
        %v1741 = vpop.f32.mrb[0].mxu0
        %v1742 = vadd.f32 %v1185, %v1741
        %v1743 = vpop.f32.mrb[0].mxu0
        %v1744 = vadd.f32 %v1189, %v1743
        %v1745 = vpop.f32.mrb[0].mxu0
        %v1746 = vadd.f32 %v1185, %v1745
        %v1747 = vpop.f32.mrb[0].mxu0
        %v1748 = vadd.f32 %v1189, %v1747
        %1749 = vmatprep.mubr.bf16.mxu0 %v1079
        %1750 = vmatmul.mubr.bf16.gmra.mrb[0].mxu0 %v1078
        %v1751 = vpop.f32.mrb[0].mxu0
        %v1752 = vadd.f32 %v1185, %v1751
        %v1753 = vpop.f32.mrb[0].mxu0
        %v1754 = vadd.f32 %v1189, %v1753
        %v1755 = vpop.f32.mrb[0].mxu0
        %v1756 = vadd.f32 %v1185, %v1755
        %v1757 = vpop.f32.mrb[0].mxu0
        %v1758 = vadd.f32 %v1189, %v1757
        %1759 = vmatprep.mubr.bf16.mxu0 %v1081
        %1760 = vmatmul.mubr.bf16.gmra.mrb[0].mxu0 %v1080
        %v1761 = vpop.f32.mrb[0].mxu0
        %v1762 = vadd.f32 %v1185, %v1761
        %v1763 = vpop.f32.mrb[0].mxu0
        %v1764 = vadd.f32 %v1189, %v1763
        %v1765 = vpop.f32.mrb[0].mxu0
        %v1766 = vadd.f32 %v1185, %v1765
        %v1767 = vpop.f32.mrb[0].mxu0
        %v1768 = vadd.f32 %v1189, %v1767
        %1769 = vmatprep.mubr.bf16.mxu0 %v1083
        %1770 = vmatmul.mubr.bf16.gmra.mrb[0].mxu0 %v1082
        %v1771 = vpop.f32.mrb[0].mxu0
        %v1772 = vadd.f32 %v1185, %v1771
        %v1773 = vpop.f32.mrb[0].mxu0
        %v1774 = vadd.f32 %v1189, %v1773
        %v1775 = vpop.f32.mrb[0].mxu0
        %v1776 = vadd.f32 %v1185, %v1775
        %v1777 = vpop.f32.mrb[0].mxu0
        %v1778 = vadd.f32 %v1189, %v1777
        %1779 = vmatprep.mubr.bf16.mxu0 %v1085
        %1780 = vmatmul.mubr.bf16.gmra.mrb[0].mxu0 %v1084
        %v1781 = vpop.f32.mrb[0].mxu0
        %v1782 = vadd.f32 %v1185, %v1781
        %v1783 = vpop.f32.mrb[0].mxu0
        %v1784 = vadd.f32 %v1189, %v1783
        %v1785 = vpop.f32.mrb[0].mxu0
        %v1786 = vadd.f32 %v1185, %v1785
        %v1787 = vpop.f32.mrb[0].mxu0
        %v1788 = vadd.f32 %v1189, %v1787
        %1789 = vmatprep.mubr.bf16.mxu0 %v1087
        %1790 = vmatmul.mubr.bf16.gmra.mrb[0].mxu0 %v1086
        %v1791 = vpop.f32.mrb[0].mxu0
        %v1792 = vadd.f32 %v1185, %v1791
        %v1793 = vpop.f32.mrb[0].mxu0
        %v1794 = vadd.f32 %v1189, %v1793
        %v1795 = vpop.f32.mrb[0].mxu0
        %v1796 = vadd.f32 %v1185, %v1795
        %v1797 = vpop.f32.mrb[0].mxu0
        %v1798 = vadd.f32 %v1189, %v1797
        %1799 = vmatprep.mubr.bf16.mxu0 %v1089
        %1800 = vmatmul.mubr.bf16.gmra.mrb[0].mxu0 %v1088
        %v1801 = vpop.f32.mrb[0].mxu0
        %v1802 = vadd.f32 %v1185, %v1801
        %v1803 = vpop.f32.mrb[0].mxu0
        %v1804 = vadd.f32 %v1189, %v1803
        %v1805 = vpop.f32.mrb[0].mxu0
        %v1806 = vadd.f32 %v1185, %v1805
        %v1807 = vpop.f32.mrb[0].mxu0
        %v1808 = vadd.f32 %v1189, %v1807
        %1809 = vmatprep.mubr.bf16.mxu0 %v1091
        %1810 = vmatmul.mubr.bf16.gmra.mrb[0].mxu0 %v1090
        %v1811 = vpop.f32.mrb[0].mxu0
        %v1812 = vadd.f32 %v1185, %v1811
        %v1813 = vpop.f32.mrb[0].mxu0
        %v1814 = vadd.f32 %v1189, %v1813
        %v1815 = vpop.f32.mrb[0].mxu0
        %v1816 = vadd.f32 %v1185, %v1815
        %v1817 = vpop.f32.mrb[0].mxu0
        %v1818 = vadd.f32 %v1189, %v1817
        %1819 = vmatprep.mubr.bf16.mxu0 %v1093
        %1820 = vmatmul.mubr.bf16.gmra.mrb[0].mxu0 %v1092
        %v1821 = vpop.f32.mrb[0].mxu0
        %v1822 = vadd.f32 %v1185, %v1821
        %v1823 = vpop.f32.mrb[0].mxu0
        %v1824 = vadd.f32 %v1189, %v1823
        %v1825 = vpop.f32.mrb[0].mxu0
        %v1826 = vadd.f32 %v1185, %v1825
        %v1827 = vpop.f32.mrb[0].mxu0
        %v1828 = vadd.f32 %v1189, %v1827
        %1829 = vmatprep.mubr.bf16.mxu0 %v1095
        %1830 = vmatmul.mubr.bf16.gmra.mrb[0].mxu0 %v1094
        %v1831 = vpop.f32.mrb[0].mxu0
        %v1832 = vadd.f32 %v1185, %v1831
        %v1833 = vpop.f32.mrb[0].mxu0
        %v1834 = vadd.f32 %v1189, %v1833
        %v1835 = vpop.f32.mrb[0].mxu0
        %v1836 = vadd.f32 %v1185, %v1835
        %v1837 = vpop.f32.mrb[0].mxu0
        %v1838 = vadd.f32 %v1189, %v1837
        %1839 = vmatprep.mubr.bf16.mxu0 %v1097
        %1840 = vmatmul.mubr.bf16.gmra.mrb[0].mxu0 %v1096
        %v1841 = vpop.f32.mrb[0].mxu0
        %v1842 = vadd.f32 %v1185, %v1841
        %v1843 = vpop.f32.mrb[0].mxu0
        %v1844 = vadd.f32 %v1189, %v1843
        %v1845 = vpop.f32.mrb[0].mxu0
        %v1846 = vadd.f32 %v1185, %v1845
        %v1847 = vpop.f32.mrb[0].mxu0
        %v1848 = vadd.f32 %v1189, %v1847
        %1849 = vmatprep.mubr.bf16.mxu0 %v1099
        %1850 = vmatmul.mubr.bf16.gmra.mrb[0].mxu0 %v1098
        %v1851 = vpop.f32.mrb[0].mxu0
        %v1852 = vadd.f32 %v1185, %v1851
        %v1853 = vpop.f32.mrb[0].mxu0
        %v1854 = vadd.f32 %v1189, %v1853
        %v1855 = vpop.f32.mrb[0].mxu0
        %v1856 = vadd.f32 %v1185, %v1855
        %v1857 = vpop.f32.mrb[0].mxu0
        %v1858 = vadd.f32 %v1189, %v1857
        %1859 = vmatprep.mubr.bf16.mxu0 %v1101
        %1860 = vmatmul.mubr.bf16.gmra.mrb[0].mxu0 %v1100
        %v1861 = vpop.f32.mrb[0].mxu0
        %v1862 = vadd.f32 %v1185, %v1861
        %v1863 = vpop.f32.mrb[0].mxu0
        %v1864 = vadd.f32 %v1189, %v1863
        %v1865 = vpop.f32.mrb[0].mxu0
        %v1866 = vadd.f32 %v1185, %v1865
        %v1867 = vpop.f32.mrb[0].mxu0
        %v1868 = vadd.f32 %v1189, %v1867
        %1869 = vmatprep.mubr.bf16.mxu0 %v1103
        %1870 = vmatmul.mubr.bf16.gmra.mrb[0].mxu0 %v1102
        %v1871 = vpop.f32.mrb[0].mxu0
        %v1872 = vadd.f32 %v1185, %v1871
        %v1873 = vpop.f32.mrb[0].mxu0
        %v1874 = vadd.f32 %v1189, %v1873
        %v1875 = vpop.f32.mrb[0].mxu0
        %v1876 = vadd.f32 %v1185, %v1875
        %v1877 = vpop.f32.mrb[0].mxu0
        %v1878 = vadd.f32 %v1189, %v1877
        %1879 = vmatprep.mubr.bf16.mxu0 %v1105
        %1880 = vmatmul.mubr.bf16.gmra.mrb[0].mxu0 %v1104
        %v1881 = vpop.f32.mrb[0].mxu0
        %v1882 = vadd.f32 %v1185, %v1881
        %v1883 = vpop.f32.mrb[0].mxu0
        %v1884 = vadd.f32 %v1189, %v1883
        %v1885 = vpop.f32.mrb[0].mxu0
        %v1886 = vadd.f32 %v1185, %v1885
        %v1887 = vpop.f32.mrb[0].mxu0
        %v1888 = vadd.f32 %v1189, %v1887
        %1889 = vmatprep.mubr.bf16.mxu0 %v1107
        %1890 = vmatmul.mubr.bf16.gmra.mrb[0].mxu0 %v1106
        %v1891 = vpop.f32.mrb[0].mxu0
        %v1892 = vadd.f32 %v1185, %v1891
        %v1893 = vpop.f32.mrb[0].mxu0
        %v1894 = vadd.f32 %v1189, %v1893
        %v1895 = vpop.f32.mrb[0].mxu0
        %v1896 = vadd.f32 %v1185, %v1895
        %v1897 = vpop.f32.mrb[0].mxu0
        %v1898 = vadd.f32 %v1189, %v1897
        %1899 = vdwg.mxu0
        %v1900 = vpack.c.bf16 %v1553, %v1549
        %v1901 = vpack.c.bf16 %v1555, %v1551
        %v1902 = vpack.c.bf16 %v1746, %v1742
        %v1903 = vpack.c.bf16 %v1748, %v1744
        %v1904 = vpack.c.bf16 %v1563, %v1559
        %v1905 = vpack.c.bf16 %v1565, %v1561
        %v1906 = vpack.c.bf16 %v1756, %v1752
        %v1907 = vpack.c.bf16 %v1758, %v1754
        %v1908 = vpack.c.bf16 %v1573, %v1569
        %v1909 = vpack.c.bf16 %v1575, %v1571
        %v1910 = vpack.c.bf16 %v1766, %v1762
        %v1911 = vpack.c.bf16 %v1768, %v1764
        %v1912 = vpack.c.bf16 %v1583, %v1579
        %v1913 = vpack.c.bf16 %v1585, %v1581
        %v1914 = vpack.c.bf16 %v1776, %v1772
        %v1915 = vpack.c.bf16 %v1778, %v1774
        %v1916 = vpack.c.bf16 %v1593, %v1589
        %v1917 = vpack.c.bf16 %v1595, %v1591
        %v1918 = vpack.c.bf16 %v1786, %v1782
        %v1919 = vpack.c.bf16 %v1788, %v1784
        %v1920 = vpack.c.bf16 %v1603, %v1599
        %v1921 = vpack.c.bf16 %v1605, %v1601
        %v1922 = vpack.c.bf16 %v1796, %v1792
        %v1923 = vpack.c.bf16 %v1798, %v1794
        %v1924 = vpack.c.bf16 %v1613, %v1609
        %v1925 = vpack.c.bf16 %v1615, %v1611
        %v1926 = vpack.c.bf16 %v1806, %v1802
        %v1927 = vpack.c.bf16 %v1808, %v1804
        %v1928 = vpack.c.bf16 %v1623, %v1619
        %v1929 = vpack.c.bf16 %v1625, %v1621
        %v1930 = vpack.c.bf16 %v1816, %v1812
        %v1931 = vpack.c.bf16 %v1818, %v1814
        %v1932 = vpack.c.bf16 %v1633, %v1629
        %v1933 = vpack.c.bf16 %v1635, %v1631
        %v1934 = vpack.c.bf16 %v1826, %v1822
        %v1935 = vpack.c.bf16 %v1828, %v1824
        %v1936 = vpack.c.bf16 %v1643, %v1639
        %v1937 = vpack.c.bf16 %v1645, %v1641
        %v1938 = vpack.c.bf16 %v1836, %v1832
        %v1939 = vpack.c.bf16 %v1838, %v1834
        %v1940 = vpack.c.bf16 %v1653, %v1649
        %v1941 = vpack.c.bf16 %v1655, %v1651
        %v1942 = vpack.c.bf16 %v1846, %v1842
        %v1943 = vpack.c.bf16 %v1848, %v1844
        %v1944 = vpack.c.bf16 %v1663, %v1659
        %v1945 = vpack.c.bf16 %v1665, %v1661
        %v1946 = vpack.c.bf16 %v1856, %v1852
        %v1947 = vpack.c.bf16 %v1858, %v1854
        %v1948 = vpack.c.bf16 %v1673, %v1669
        %v1949 = vpack.c.bf16 %v1675, %v1671
        %v1950 = vpack.c.bf16 %v1866, %v1862
        %v1951 = vpack.c.bf16 %v1868, %v1864
        %v1952 = vpack.c.bf16 %v1683, %v1679
        %v1953 = vpack.c.bf16 %v1685, %v1681
        %v1954 = vpack.c.bf16 %v1876, %v1872
        %v1955 = vpack.c.bf16 %v1878, %v1874
        %v1956 = vpack.c.bf16 %v1693, %v1689
        %v1957 = vpack.c.bf16 %v1695, %v1691
        %v1958 = vpack.c.bf16 %v1886, %v1882
        %v1959 = vpack.c.bf16 %v1888, %v1884
        %v1960 = vpack.c.bf16 %v1703, %v1699
        %v1961 = vpack.c.bf16 %v1705, %v1701
        %v1962 = vpack.c.bf16 %v1896, %v1892
        %v1963 = vpack.c.bf16 %v1898, %v1894
        %v1964 = vmul.bf16 %v1900, 1056980736
        %v1965 = vmul.bf16 %v1901, 1056980736
        %v1966 = vmul.bf16 %v1902, 1056980736
        %v1967 = vmul.bf16 %v1903, 1056980736
        %v1968 = vmul.bf16 %v1904, 1056980736
        %v1969 = vmul.bf16 %v1905, 1056980736
        %v1970 = vmul.bf16 %v1906, 1056980736
        %v1971 = vmul.bf16 %v1907, 1056980736
        %v1972 = vmul.bf16 %v1908, 1056980736
        %v1973 = vmul.bf16 %v1909, 1056980736
        %v1974 = vmul.bf16 %v1910, 1056980736
        %v1975 = vmul.bf16 %v1911, 1056980736
        %v1976 = vmul.bf16 %v1912, 1056980736
        %v1977 = vmul.bf16 %v1913, 1056980736
        %v1978 = vmul.bf16 %v1914, 1056980736
        %v1979 = vmul.bf16 %v1915, 1056980736
        %v1980 = vmul.bf16 %v1916, 1056980736
        %v1981 = vmul.bf16 %v1917, 1056980736
        %v1982 = vmul.bf16 %v1918, 1056980736
        %v1983 = vmul.bf16 %v1919, 1056980736
        %v1984 = vmul.bf16 %v1920, 1056980736
        %v1985 = vmul.bf16 %v1921, 1056980736
        %v1986 = vmul.bf16 %v1922, 1056980736
        %v1987 = vmul.bf16 %v1923, 1056980736
        %v1988 = vmul.bf16 %v1924, 1056980736
        %v1989 = vmul.bf16 %v1925, 1056980736
        %v1990 = vmul.bf16 %v1926, 1056980736
        %v1991 = vmul.bf16 %v1927, 1056980736
        %v1992 = vmul.bf16 %v1928, 1056980736
        %v1993 = vmul.bf16 %v1929, 1056980736
        %v1994 = vmul.bf16 %v1930, 1056980736
        %v1995 = vmul.bf16 %v1931, 1056980736
        %v1996 = vmul.bf16 %v1932, 1056980736
        %v1997 = vmul.bf16 %v1933, 1056980736
        %v1998 = vmul.bf16 %v1934, 1056980736
        %v1999 = vmul.bf16 %v1935, 1056980736
        %v2000 = vmul.bf16 %v1936, 1056980736
        %v2001 = vmul.bf16 %v1937, 1056980736
        %v2002 = vmul.bf16 %v1938, 1056980736
        %v2003 = vmul.bf16 %v1939, 1056980736
        %v2004 = vmul.bf16 %v1940, 1056980736
        %v2005 = vmul.bf16 %v1941, 1056980736
        %v2006 = vmul.bf16 %v1942, 1056980736
        %v2007 = vmul.bf16 %v1943, 1056980736
        %v2008 = vmul.bf16 %v1944, 1056980736
        %v2009 = vmul.bf16 %v1945, 1056980736
        %v2010 = vmul.bf16 %v1946, 1056980736
        %v2011 = vmul.bf16 %v1947, 1056980736
        %v2012 = vmul.bf16 %v1948, 1056980736
        %v2013 = vmul.bf16 %v1949, 1056980736
        %v2014 = vmul.bf16 %v1950, 1056980736
        %v2015 = vmul.bf16 %v1951, 1056980736
        %v2016 = vmul.bf16 %v1952, 1056980736
        %v2017 = vmul.bf16 %v1953, 1056980736
        %v2018 = vmul.bf16 %v1954, 1056980736
        %v2019 = vmul.bf16 %v1955, 1056980736
        %v2020 = vmul.bf16 %v1956, 1056980736
        %v2021 = vmul.bf16 %v1957, 1056980736
        %v2022 = vmul.bf16 %v1958, 1056980736
        %v2023 = vmul.bf16 %v1959, 1056980736
        %v2024 = vmul.bf16 %v1960, 1056980736
        %v2025 = vmul.bf16 %v1961, 1056980736
        %v2026 = vmul.bf16 %v1962, 1056980736
        %v2027 = vmul.bf16 %v1963, 1056980736
        %v2028 = vmul.bf16 %v1900, 1027030327
        %v2029 = vmul.bf16 %v1901, 1027030327
        %v2030 = vmul.bf16 %v1902, 1027030327
        %v2031 = vmul.bf16 %v1903, 1027030327
        %v2032 = vmul.bf16 %v1904, 1027030327
        %v2033 = vmul.bf16 %v1905, 1027030327
        %v2034 = vmul.bf16 %v1906, 1027030327
        %v2035 = vmul.bf16 %v1907, 1027030327
        %v2036 = vmul.bf16 %v1908, 1027030327
        %v2037 = vmul.bf16 %v1909, 1027030327
        %v2038 = vmul.bf16 %v1910, 1027030327
        %v2039 = vmul.bf16 %v1911, 1027030327
        %v2040 = vmul.bf16 %v1912, 1027030327
        %v2041 = vmul.bf16 %v1913, 1027030327
        %v2042 = vmul.bf16 %v1914, 1027030327
        %v2043 = vmul.bf16 %v1915, 1027030327
        %v2044 = vmul.bf16 %v1916, 1027030327
        %v2045 = vmul.bf16 %v1917, 1027030327
        %v2046 = vmul.bf16 %v1918, 1027030327
        %v2047 = vmul.bf16 %v1919, 1027030327
        %v2048 = vmul.bf16 %v1920, 1027030327
        %v2049 = vmul.bf16 %v1921, 1027030327
        %v2050 = vmul.bf16 %v1922, 1027030327
        %v2051 = vmul.bf16 %v1923, 1027030327
        %v2052 = vmul.bf16 %v1924, 1027030327
        %v2053 = vmul.bf16 %v1925, 1027030327
        %v2054 = vmul.bf16 %v1926, 1027030327
        %v2055 = vmul.bf16 %v1927, 1027030327
        %v2056 = vmul.bf16 %v1928, 1027030327
        %v2057 = vmul.bf16 %v1929, 1027030327
        %v2058 = vmul.bf16 %v1930, 1027030327
        %v2059 = vmul.bf16 %v1931, 1027030327
        %v2060 = vmul.bf16 %v1932, 1027030327
        %v2061 = vmul.bf16 %v1933, 1027030327
        %v2062 = vmul.bf16 %v1934, 1027030327
        %v2063 = vmul.bf16 %v1935, 1027030327
        %v2064 = vmul.bf16 %v1936, 1027030327
        %v2065 = vmul.bf16 %v1937, 1027030327
        %v2066 = vmul.bf16 %v1938, 1027030327
        %v2067 = vmul.bf16 %v1939, 1027030327
        %v2068 = vmul.bf16 %v1940, 1027030327
        %v2069 = vmul.bf16 %v1941, 1027030327
        %v2070 = vmul.bf16 %v1942, 1027030327
        %v2071 = vmul.bf16 %v1943, 1027030327
        %v2072 = vmul.bf16 %v1944, 1027030327
        %v2073 = vmul.bf16 %v1945, 1027030327
        %v2074 = vmul.bf16 %v1946, 1027030327
        %v2075 = vmul.bf16 %v1947, 1027030327
        %v2076 = vmul.bf16 %v1948, 1027030327
        %v2077 = vmul.bf16 %v1949, 1027030327
        %v2078 = vmul.bf16 %v1950, 1027030327
        %v2079 = vmul.bf16 %v1951, 1027030327
        %v2080 = vmul.bf16 %v1952, 1027030327
        %v2081 = vmul.bf16 %v1953, 1027030327
        %v2082 = vmul.bf16 %v1954, 1027030327
        %v2083 = vmul.bf16 %v1955, 1027030327
        %v2084 = vmul.bf16 %v1956, 1027030327
        %v2085 = vmul.bf16 %v1957, 1027030327
        %v2086 = vmul.bf16 %v1958, 1027030327
        %v2087 = vmul.bf16 %v1959, 1027030327
        %v2088 = vmul.bf16 %v1960, 1027030327
        %v2089 = vmul.bf16 %v1961, 1027030327
        %v2090 = vmul.bf16 %v1962, 1027030327
        %v2091 = vmul.bf16 %v1963, 1027030327
        %v2092 = vmul.bf16 %v2028, %v1900
        %v2093 = vmul.bf16 %v2029, %v1901
        %v2094 = vmul.bf16 %v2030, %v1902
        %v2095 = vmul.bf16 %v2031, %v1903
        %v2096 = vmul.bf16 %v2032, %v1904
        %v2097 = vmul.bf16 %v2033, %v1905
        %v2098 = vmul.bf16 %v2034, %v1906
        %v2099 = vmul.bf16 %v2035, %v1907
        %v2100 = vmul.bf16 %v2036, %v1908
        %v2101 = vmul.bf16 %v2037, %v1909
        %v2102 = vmul.bf16 %v2038, %v1910
        %v2103 = vmul.bf16 %v2039, %v1911
        %v2104 = vmul.bf16 %v2040, %v1912
        %v2105 = vmul.bf16 %v2041, %v1913
        %v2106 = vmul.bf16 %v2042, %v1914
        %v2107 = vmul.bf16 %v2043, %v1915
        %v2108 = vmul.bf16 %v2044, %v1916
        %v2109 = vmul.bf16 %v2045, %v1917
        %v2110 = vmul.bf16 %v2046, %v1918
        %v2111 = vmul.bf16 %v2047, %v1919
        %v2112 = vmul.bf16 %v2048, %v1920
        %v2113 = vmul.bf16 %v2049, %v1921
        %v2114 = vmul.bf16 %v2050, %v1922
        %v2115 = vmul.bf16 %v2051, %v1923
        %v2116 = vmul.bf16 %v2052, %v1924
        %v2117 = vmul.bf16 %v2053, %v1925
        %v2118 = vmul.bf16 %v2054, %v1926
        %v2119 = vmul.bf16 %v2055, %v1927
        %v2120 = vmul.bf16 %v2056, %v1928
        %v2121 = vmul.bf16 %v2057, %v1929
        %v2122 = vmul.bf16 %v2058, %v1930
        %v2123 = vmul.bf16 %v2059, %v1931
        %v2124 = vmul.bf16 %v2060, %v1932
        %v2125 = vmul.bf16 %v2061, %v1933
        %v2126 = vmul.bf16 %v2062, %v1934
        %v2127 = vmul.bf16 %v2063, %v1935
        %v2128 = vmul.bf16 %v2064, %v1936
        %v2129 = vmul.bf16 %v2065, %v1937
        %v2130 = vmul.bf16 %v2066, %v1938
        %v2131 = vmul.bf16 %v2067, %v1939
        %v2132 = vmul.bf16 %v2068, %v1940
        %v2133 = vmul.bf16 %v2069, %v1941
        %v2134 = vmul.bf16 %v2070, %v1942
        %v2135 = vmul.bf16 %v2071, %v1943
        %v2136 = vmul.bf16 %v2072, %v1944
        %v2137 = vmul.bf16 %v2073, %v1945
        %v2138 = vmul.bf16 %v2074, %v1946
        %v2139 = vmul.bf16 %v2075, %v1947
        %v2140 = vmul.bf16 %v2076, %v1948
        %v2141 = vmul.bf16 %v2077, %v1949
        %v2142 = vmul.bf16 %v2078, %v1950
        %v2143 = vmul.bf16 %v2079, %v1951
        %v2144 = vmul.bf16 %v2080, %v1952
        %v2145 = vmul.bf16 %v2081, %v1953
        %v2146 = vmul.bf16 %v2082, %v1954
        %v2147 = vmul.bf16 %v2083, %v1955
        %v2148 = vmul.bf16 %v2084, %v1956
        %v2149 = vmul.bf16 %v2085, %v1957
        %v2150 = vmul.bf16 %v2086, %v1958
        %v2151 = vmul.bf16 %v2087, %v1959
        %v2152 = vmul.bf16 %v2088, %v1960
        %v2153 = vmul.bf16 %v2089, %v1961
        %v2154 = vmul.bf16 %v2090, %v1962
        %v2155 = vmul.bf16 %v2091, %v1963
        %v2156 = vmul.bf16 %v2092, %v1900
        %v2157 = vmul.bf16 %v2093, %v1901
        %v2158 = vmul.bf16 %v2094, %v1902
        %v2159 = vmul.bf16 %v2095, %v1903
        %v2160 = vmul.bf16 %v2096, %v1904
        %v2161 = vmul.bf16 %v2097, %v1905
        %v2162 = vmul.bf16 %v2098, %v1906
        %v2163 = vmul.bf16 %v2099, %v1907
        %v2164 = vmul.bf16 %v2100, %v1908
        %v2165 = vmul.bf16 %v2101, %v1909
        %v2166 = vmul.bf16 %v2102, %v1910
        %v2167 = vmul.bf16 %v2103, %v1911
        %v2168 = vmul.bf16 %v2104, %v1912
        %v2169 = vmul.bf16 %v2105, %v1913
        %v2170 = vmul.bf16 %v2106, %v1914
        %v2171 = vmul.bf16 %v2107, %v1915
        %v2172 = vmul.bf16 %v2108, %v1916
        %v2173 = vmul.bf16 %v2109, %v1917
        %v2174 = vmul.bf16 %v2110, %v1918
        %v2175 = vmul.bf16 %v2111, %v1919
        %v2176 = vmul.bf16 %v2112, %v1920
        %v2177 = vmul.bf16 %v2113, %v1921
        %v2178 = vmul.bf16 %v2114, %v1922
        %v2179 = vmul.bf16 %v2115, %v1923
        %v2180 = vmul.bf16 %v2116, %v1924
        %v2181 = vmul.bf16 %v2117, %v1925
        %v2182 = vmul.bf16 %v2118, %v1926
        %v2183 = vmul.bf16 %v2119, %v1927
        %v2184 = vmul.bf16 %v2120, %v1928
        %v2185 = vmul.bf16 %v2121, %v1929
        %v2186 = vmul.bf16 %v2122, %v1930
        %v2187 = vmul.bf16 %v2123, %v1931
        %v2188 = vmul.bf16 %v2124, %v1932
        %v2189 = vmul.bf16 %v2125, %v1933
        %v2190 = vmul.bf16 %v2126, %v1934
        %v2191 = vmul.bf16 %v2127, %v1935
        %v2192 = vmul.bf16 %v2128, %v1936
        %v2193 = vmul.bf16 %v2129, %v1937
        %v2194 = vmul.bf16 %v2130, %v1938
        %v2195 = vmul.bf16 %v2131, %v1939
        %v2196 = vmul.bf16 %v2132, %v1940
        %v2197 = vmul.bf16 %v2133, %v1941
        %v2198 = vmul.bf16 %v2134, %v1942
        %v2199 = vmul.bf16 %v2135, %v1943
        %v2200 = vmul.bf16 %v2136, %v1944
        %v2201 = vmul.bf16 %v2137, %v1945
        %v2202 = vmul.bf16 %v2138, %v1946
        %v2203 = vmul.bf16 %v2139, %v1947
        %v2204 = vmul.bf16 %v2140, %v1948
        %v2205 = vmul.bf16 %v2141, %v1949
        %v2206 = vmul.bf16 %v2142, %v1950
        %v2207 = vmul.bf16 %v2143, %v1951
        %v2208 = vmul.bf16 %v2144, %v1952
        %v2209 = vmul.bf16 %v2145, %v1953
        %v2210 = vmul.bf16 %v2146, %v1954
        %v2211 = vmul.bf16 %v2147, %v1955
        %v2212 = vmul.bf16 %v2148, %v1956
        %v2213 = vmul.bf16 %v2149, %v1957
        %v2214 = vmul.bf16 %v2150, %v1958
        %v2215 = vmul.bf16 %v2151, %v1959
        %v2216 = vmul.bf16 %v2152, %v1960
        %v2217 = vmul.bf16 %v2153, %v1961
        %v2218 = vmul.bf16 %v2154, %v1962
        %v2219 = vmul.bf16 %v2155, %v1963
        %v2220 = vadd.bf16 %v1900, %v2156
        %v2221 = vadd.bf16 %v1901, %v2157
        %v2222 = vadd.bf16 %v1902, %v2158
        %v2223 = vadd.bf16 %v1903, %v2159
        %v2224 = vadd.bf16 %v1904, %v2160
        %v2225 = vadd.bf16 %v1905, %v2161
        %v2226 = vadd.bf16 %v1906, %v2162
        %v2227 = vadd.bf16 %v1907, %v2163
        %v2228 = vadd.bf16 %v1908, %v2164
        %v2229 = vadd.bf16 %v1909, %v2165
        %v2230 = vadd.bf16 %v1910, %v2166
        %v2231 = vadd.bf16 %v1911, %v2167
        %v2232 = vadd.bf16 %v1912, %v2168
        %v2233 = vadd.bf16 %v1913, %v2169
        %v2234 = vadd.bf16 %v1914, %v2170
        %v2235 = vadd.bf16 %v1915, %v2171
        %v2236 = vadd.bf16 %v1916, %v2172
        %v2237 = vadd.bf16 %v1917, %v2173
        %v2238 = vadd.bf16 %v1918, %v2174
        %v2239 = vadd.bf16 %v1919, %v2175
        %v2240 = vadd.bf16 %v1920, %v2176
        %v2241 = vadd.bf16 %v1921, %v2177
        %v2242 = vadd.bf16 %v1922, %v2178
        %v2243 = vadd.bf16 %v1923, %v2179
        %v2244 = vadd.bf16 %v1924, %v2180
        %v2245 = vadd.bf16 %v1925, %v2181
        %v2246 = vadd.bf16 %v1926, %v2182
        %v2247 = vadd.bf16 %v1927, %v2183
        %v2248 = vadd.bf16 %v1928, %v2184
        %v2249 = vadd.bf16 %v1929, %v2185
        %v2250 = vadd.bf16 %v1930, %v2186
        %v2251 = vadd.bf16 %v1931, %v2187
        %v2252 = vadd.bf16 %v1932, %v2188
        %v2253 = vadd.bf16 %v1933, %v2189
        %v2254 = vadd.bf16 %v1934, %v2190
        %v2255 = vadd.bf16 %v1935, %v2191
        %v2256 = vadd.bf16 %v1936, %v2192
        %v2257 = vadd.bf16 %v1937, %v2193
        %v2258 = vadd.bf16 %v1938, %v2194
        %v2259 = vadd.bf16 %v1939, %v2195
        %v2260 = vadd.bf16 %v1940, %v2196
        %v2261 = vadd.bf16 %v1941, %v2197
        %v2262 = vadd.bf16 %v1942, %v2198
        %v2263 = vadd.bf16 %v1943, %v2199
        %v2264 = vadd.bf16 %v1944, %v2200
        %v2265 = vadd.bf16 %v1945, %v2201
        %v2266 = vadd.bf16 %v1946, %v2202
        %v2267 = vadd.bf16 %v1947, %v2203
        %v2268 = vadd.bf16 %v1948, %v2204
        %v2269 = vadd.bf16 %v1949, %v2205
        %v2270 = vadd.bf16 %v1950, %v2206
        %v2271 = vadd.bf16 %v1951, %v2207
        %v2272 = vadd.bf16 %v1952, %v2208
        %v2273 = vadd.bf16 %v1953, %v2209
        %v2274 = vadd.bf16 %v1954, %v2210
        %v2275 = vadd.bf16 %v1955, %v2211
        %v2276 = vadd.bf16 %v1956, %v2212
        %v2277 = vadd.bf16 %v1957, %v2213
        %v2278 = vadd.bf16 %v1958, %v2214
        %v2279 = vadd.bf16 %v1959, %v2215
        %v2280 = vadd.bf16 %v1960, %v2216
        %v2281 = vadd.bf16 %v1961, %v2217
        %v2282 = vadd.bf16 %v1962, %v2218
        %v2283 = vadd.bf16 %v1963, %v2219
        %v2284 = vmul.bf16 %v2220, 1061961548
        %v2285 = vmul.bf16 %v2221, 1061961548
        %v2286 = vmul.bf16 %v2222, 1061961548
        %v2287 = vmul.bf16 %v2223, 1061961548
        %v2288 = vmul.bf16 %v2224, 1061961548
        %v2289 = vmul.bf16 %v2225, 1061961548
        %v2290 = vmul.bf16 %v2226, 1061961548
        %v2291 = vmul.bf16 %v2227, 1061961548
        %v2292 = vmul.bf16 %v2228, 1061961548
        %v2293 = vmul.bf16 %v2229, 1061961548
        %v2294 = vmul.bf16 %v2230, 1061961548
        %v2295 = vmul.bf16 %v2231, 1061961548
        %v2296 = vmul.bf16 %v2232, 1061961548
        %v2297 = vmul.bf16 %v2233, 1061961548
        %v2298 = vmul.bf16 %v2234, 1061961548
        %v2299 = vmul.bf16 %v2235, 1061961548
        %v2300 = vmul.bf16 %v2236, 1061961548
        %v2301 = vmul.bf16 %v2237, 1061961548
        %v2302 = vmul.bf16 %v2238, 1061961548
        %v2303 = vmul.bf16 %v2239, 1061961548
        %v2304 = vmul.bf16 %v2240, 1061961548
        %v2305 = vmul.bf16 %v2241, 1061961548
        %v2306 = vmul.bf16 %v2242, 1061961548
        %v2307 = vmul.bf16 %v2243, 1061961548
        %v2308 = vmul.bf16 %v2244, 1061961548
        %v2309 = vmul.bf16 %v2245, 1061961548
        %v2310 = vmul.bf16 %v2246, 1061961548
        %v2311 = vmul.bf16 %v2247, 1061961548
        %v2312 = vmul.bf16 %v2248, 1061961548
        %v2313 = vmul.bf16 %v2249, 1061961548
        %v2314 = vmul.bf16 %v2250, 1061961548
        %v2315 = vmul.bf16 %v2251, 1061961548
        %v2316 = vmul.bf16 %v2252, 1061961548
        %v2317 = vmul.bf16 %v2253, 1061961548
        %v2318 = vmul.bf16 %v2254, 1061961548
        %v2319 = vmul.bf16 %v2255, 1061961548
        %v2320 = vmul.bf16 %v2256, 1061961548
        %v2321 = vmul.bf16 %v2257, 1061961548
        %v2322 = vmul.bf16 %v2258, 1061961548
        %v2323 = vmul.bf16 %v2259, 1061961548
        %v2324 = vmul.bf16 %v2260, 1061961548
        %v2325 = vmul.bf16 %v2261, 1061961548
        %v2326 = vmul.bf16 %v2262, 1061961548
        %v2327 = vmul.bf16 %v2263, 1061961548
        %v2328 = vmul.bf16 %v2264, 1061961548
        %v2329 = vmul.bf16 %v2265, 1061961548
        %v2330 = vmul.bf16 %v2266, 1061961548
        %v2331 = vmul.bf16 %v2267, 1061961548
        %v2332 = vmul.bf16 %v2268, 1061961548
        %v2333 = vmul.bf16 %v2269, 1061961548
        %v2334 = vmul.bf16 %v2270, 1061961548
        %v2335 = vmul.bf16 %v2271, 1061961548
        %v2336 = vmul.bf16 %v2272, 1061961548
        %v2337 = vmul.bf16 %v2273, 1061961548
        %v2338 = vmul.bf16 %v2274, 1061961548
        %v2339 = vmul.bf16 %v2275, 1061961548
        %v2340 = vmul.bf16 %v2276, 1061961548
        %v2341 = vmul.bf16 %v2277, 1061961548
        %v2342 = vmul.bf16 %v2278, 1061961548
        %v2343 = vmul.bf16 %v2279, 1061961548
        %v2344 = vmul.bf16 %v2280, 1061961548
        %v2345 = vmul.bf16 %v2281, 1061961548
        %v2346 = vmul.bf16 %v2282, 1061961548
        %v2347 = vmul.bf16 %v2283, 1061961548
        %v2348 = vtanh.bf16.pop %v2284
        %v2349 = vtanh.bf16.pop %v2285
        %v2350 = vtanh.bf16.pop %v2286
        %v2351 = vtanh.bf16.pop %v2287
        %v2352 = vtanh.bf16.pop %v2288
        %v2353 = vtanh.bf16.pop %v2289
        %v2354 = vtanh.bf16.pop %v2290
        %v2355 = vtanh.bf16.pop %v2291
        %v2356 = vtanh.bf16.pop %v2292
        %v2357 = vtanh.bf16.pop %v2293
        %v2358 = vtanh.bf16.pop %v2294
        %v2359 = vtanh.bf16.pop %v2295
        %v2360 = vtanh.bf16.pop %v2296
        %v2361 = vtanh.bf16.pop %v2297
        %v2362 = vtanh.bf16.pop %v2298
        %v2363 = vtanh.bf16.pop %v2299
        %v2364 = vtanh.bf16.pop %v2300
        %v2365 = vtanh.bf16.pop %v2301
        %v2366 = vtanh.bf16.pop %v2302
        %v2367 = vtanh.bf16.pop %v2303
        %v2368 = vtanh.bf16.pop %v2304
        %v2369 = vtanh.bf16.pop %v2305
        %v2370 = vtanh.bf16.pop %v2306
        %v2371 = vtanh.bf16.pop %v2307
        %v2372 = vtanh.bf16.pop %v2308
        %v2373 = vtanh.bf16.pop %v2309
        %v2374 = vtanh.bf16.pop %v2310
        %v2375 = vtanh.bf16.pop %v2311
        %v2376 = vtanh.bf16.pop %v2312
        %v2377 = vtanh.bf16.pop %v2313
        %v2378 = vtanh.bf16.pop %v2314
        %v2379 = vtanh.bf16.pop %v2315
        %v2380 = vtanh.bf16.pop %v2316
        %v2381 = vtanh.bf16.pop %v2317
        %v2382 = vtanh.bf16.pop %v2318
        %v2383 = vtanh.bf16.pop %v2319
        %v2384 = vtanh.bf16.pop %v2320
        %v2385 = vtanh.bf16.pop %v2321
        %v2386 = vtanh.bf16.pop %v2322
        %v2387 = vtanh.bf16.pop %v2323
        %v2388 = vtanh.bf16.pop %v2324
        %v2389 = vtanh.bf16.pop %v2325
        %v2390 = vtanh.bf16.pop %v2326
        %v2391 = vtanh.bf16.pop %v2327
        %v2392 = vtanh.bf16.pop %v2328
        %v2393 = vtanh.bf16.pop %v2329
        %v2394 = vtanh.bf16.pop %v2330
        %v2395 = vtanh.bf16.pop %v2331
        %v2396 = vtanh.bf16.pop %v2332
        %v2397 = vtanh.bf16.pop %v2333
        %v2398 = vtanh.bf16.pop %v2334
        %v2399 = vtanh.bf16.pop %v2335
        %v2400 = vtanh.bf16.pop %v2336
        %v2401 = vtanh.bf16.pop %v2337
        %v2402 = vtanh.bf16.pop %v2338
        %v2403 = vtanh.bf16.pop %v2339
        %v2404 = vtanh.bf16.pop %v2340
        %v2405 = vtanh.bf16.pop %v2341
        %v2406 = vtanh.bf16.pop %v2342
        %v2407 = vtanh.bf16.pop %v2343
        %v2408 = vtanh.bf16.pop %v2344
        %v2409 = vtanh.bf16.pop %v2345
        %v2410 = vtanh.bf16.pop %v2346
        %v2411 = vtanh.bf16.pop %v2347
        %v2412 = vadd.bf16 %v2348, 1065369472
        %v2413 = vadd.bf16 %v2349, 1065369472
        %v2414 = vadd.bf16 %v2350, 1065369472
        %v2415 = vadd.bf16 %v2351, 1065369472
        %v2416 = vadd.bf16 %v2352, 1065369472
        %v2417 = vadd.bf16 %v2353, 1065369472
        %v2418 = vadd.bf16 %v2354, 1065369472
        %v2419 = vadd.bf16 %v2355, 1065369472
        %v2420 = vadd.bf16 %v2356, 1065369472
        %v2421 = vadd.bf16 %v2357, 1065369472
        %v2422 = vadd.bf16 %v2358, 1065369472
        %v2423 = vadd.bf16 %v2359, 1065369472
        %v2424 = vadd.bf16 %v2360, 1065369472
        %v2425 = vadd.bf16 %v2361, 1065369472
        %v2426 = vadd.bf16 %v2362, 1065369472
        %v2427 = vadd.bf16 %v2363, 1065369472
        %v2428 = vadd.bf16 %v2364, 1065369472
        %v2429 = vadd.bf16 %v2365, 1065369472
        %v2430 = vadd.bf16 %v2366, 1065369472
        %v2431 = vadd.bf16 %v2367, 1065369472
        %v2432 = vadd.bf16 %v2368, 1065369472
        %v2433 = vadd.bf16 %v2369, 1065369472
        %v2434 = vadd.bf16 %v2370, 1065369472
        %v2435 = vadd.bf16 %v2371, 1065369472
        %v2436 = vadd.bf16 %v2372, 1065369472
        %v2437 = vadd.bf16 %v2373, 1065369472
        %v2438 = vadd.bf16 %v2374, 1065369472
        %v2439 = vadd.bf16 %v2375, 1065369472
        %v2440 = vadd.bf16 %v2376, 1065369472
        %v2441 = vadd.bf16 %v2377, 1065369472
        %v2442 = vadd.bf16 %v2378, 1065369472
        %v2443 = vadd.bf16 %v2379, 1065369472
        %v2444 = vadd.bf16 %v2380, 1065369472
        %v2445 = vadd.bf16 %v2381, 1065369472
        %v2446 = vadd.bf16 %v2382, 1065369472
        %v2447 = vadd.bf16 %v2383, 1065369472
        %v2448 = vadd.bf16 %v2384, 1065369472
        %v2449 = vadd.bf16 %v2385, 1065369472
        %v2450 = vadd.bf16 %v2386, 1065369472
        %v2451 = vadd.bf16 %v2387, 1065369472
        %v2452 = vadd.bf16 %v2388, 1065369472
        %v2453 = vadd.bf16 %v2389, 1065369472
        %v2454 = vadd.bf16 %v2390, 1065369472
        %v2455 = vadd.bf16 %v2391, 1065369472
        %v2456 = vadd.bf16 %v2392, 1065369472
        %v2457 = vadd.bf16 %v2393, 1065369472
        %v2458 = vadd.bf16 %v2394, 1065369472
        %v2459 = vadd.bf16 %v2395, 1065369472
        %v2460 = vadd.bf16 %v2396, 1065369472
        %v2461 = vadd.bf16 %v2397, 1065369472
        %v2462 = vadd.bf16 %v2398, 1065369472
        %v2463 = vadd.bf16 %v2399, 1065369472
        %v2464 = vadd.bf16 %v2400, 1065369472
        %v2465 = vadd.bf16 %v2401, 1065369472
        %v2466 = vadd.bf16 %v2402, 1065369472
        %v2467 = vadd.bf16 %v2403, 1065369472
        %v2468 = vadd.bf16 %v2404, 1065369472
        %v2469 = vadd.bf16 %v2405, 1065369472
        %v2470 = vadd.bf16 %v2406, 1065369472
        %v2471 = vadd.bf16 %v2407, 1065369472
        %v2472 = vadd.bf16 %v2408, 1065369472
        %v2473 = vadd.bf16 %v2409, 1065369472
        %v2474 = vadd.bf16 %v2410, 1065369472
        %v2475 = vadd.bf16 %v2411, 1065369472
        %v2476 = vmul.bf16 %v1964, %v2412
        %v2477 = vmul.bf16 %v1965, %v2413
        %v2478 = vmul.bf16 %v1966, %v2414
        %v2479 = vmul.bf16 %v1967, %v2415
        %v2480 = vmul.bf16 %v1968, %v2416
        %v2481 = vmul.bf16 %v1969, %v2417
        %v2482 = vmul.bf16 %v1970, %v2418
        %v2483 = vmul.bf16 %v1971, %v2419
        %v2484 = vmul.bf16 %v1972, %v2420
        %v2485 = vmul.bf16 %v1973, %v2421
        %v2486 = vmul.bf16 %v1974, %v2422
        %v2487 = vmul.bf16 %v1975, %v2423
        %v2488 = vmul.bf16 %v1976, %v2424
        %v2489 = vmul.bf16 %v1977, %v2425
        %v2490 = vmul.bf16 %v1978, %v2426
        %v2491 = vmul.bf16 %v1979, %v2427
        %v2492 = vmul.bf16 %v1980, %v2428
        %v2493 = vmul.bf16 %v1981, %v2429
        %v2494 = vmul.bf16 %v1982, %v2430
        %v2495 = vmul.bf16 %v1983, %v2431
        %v2496 = vmul.bf16 %v1984, %v2432
        %v2497 = vmul.bf16 %v1985, %v2433
        %v2498 = vmul.bf16 %v1986, %v2434
        %v2499 = vmul.bf16 %v1987, %v2435
        %v2500 = vmul.bf16 %v1988, %v2436
        %v2501 = vmul.bf16 %v1989, %v2437
        %v2502 = vmul.bf16 %v1990, %v2438
        %v2503 = vmul.bf16 %v1991, %v2439
        %v2504 = vmul.bf16 %v1992, %v2440
        %v2505 = vmul.bf16 %v1993, %v2441
        %v2506 = vmul.bf16 %v1994, %v2442
        %v2507 = vmul.bf16 %v1995, %v2443
        %v2508 = vmul.bf16 %v1996, %v2444
        %v2509 = vmul.bf16 %v1997, %v2445
        %v2510 = vmul.bf16 %v1998, %v2446
        %v2511 = vmul.bf16 %v1999, %v2447
        %v2512 = vmul.bf16 %v2000, %v2448
        %v2513 = vmul.bf16 %v2001, %v2449
        %v2514 = vmul.bf16 %v2002, %v2450
        %v2515 = vmul.bf16 %v2003, %v2451
        %v2516 = vmul.bf16 %v2004, %v2452
        %v2517 = vmul.bf16 %v2005, %v2453
        %v2518 = vmul.bf16 %v2006, %v2454
        %v2519 = vmul.bf16 %v2007, %v2455
        %v2520 = vmul.bf16 %v2008, %v2456
        %v2521 = vmul.bf16 %v2009, %v2457
        %v2522 = vmul.bf16 %v2010, %v2458
        %v2523 = vmul.bf16 %v2011, %v2459
        %v2524 = vmul.bf16 %v2012, %v2460
        %v2525 = vmul.bf16 %v2013, %v2461
        %v2526 = vmul.bf16 %v2014, %v2462
        %v2527 = vmul.bf16 %v2015, %v2463
        %v2528 = vmul.bf16 %v2016, %v2464
        %v2529 = vmul.bf16 %v2017, %v2465
        %v2530 = vmul.bf16 %v2018, %v2466
        %v2531 = vmul.bf16 %v2019, %v2467
        %v2532 = vmul.bf16 %v2020, %v2468
        %v2533 = vmul.bf16 %v2021, %v2469
        %v2534 = vmul.bf16 %v2022, %v2470
        %v2535 = vmul.bf16 %v2023, %v2471
        %v2536 = vmul.bf16 %v2024, %v2472
        %v2537 = vmul.bf16 %v2025, %v2473
        %v2538 = vmul.bf16 %v2026, %v2474
        %v2539 = vmul.bf16 %v2027, %v2475
        %v2540 = vld [vmem:[#allocation8] sm:$0xf]
        %v2541 = vld [vmem:[#allocation8 + $0x4] sm:$0xf]
        %v2542 = vld [vmem:[#allocation8 + $0x8] sm:$0xf]
        %v2543 = vld [vmem:[#allocation8 + $0xc] sm:$0xf]
        %v2544 = vld [vmem:[#allocation8 + $0x10] sm:$0xf]
        %v2545 = vld [vmem:[#allocation8 + $0x14] sm:$0xf]
        %v2546 = vld [vmem:[#allocation8 + $0x18] sm:$0xf]
        %v2547 = vld [vmem:[#allocation8 + $0x1c] sm:$0xf]
        %v2548 = vld [vmem:[#allocation8 + $0x20] sm:$0xf]
        %v2549 = vld [vmem:[#allocation8 + $0x24] sm:$0xf]
        %v2550 = vld [vmem:[#allocation8 + $0x28] sm:$0xf]
        %v2551 = vld [vmem:[#allocation8 + $0x2c] sm:$0xf]
        %v2552 = vld [vmem:[#allocation8 + $0x30] sm:$0xf]
        %v2553 = vld [vmem:[#allocation8 + $0x34] sm:$0xf]
        %v2554 = vld [vmem:[#allocation8 + $0x38] sm:$0xf]
        %v2555 = vld [vmem:[#allocation8 + $0x3c] sm:$0xf]
        %v2556 = vld [vmem:[#allocation8 + $0x40] sm:$0xf]
        %v2557 = vld [vmem:[#allocation8 + $0x44] sm:$0xf]
        %v2558 = vld [vmem:[#allocation8 + $0x48] sm:$0xf]
        %v2559 = vld [vmem:[#allocation8 + $0x4c] sm:$0xf]
        %v2560 = vld [vmem:[#allocation8 + $0x50] sm:$0xf]
        %v2561 = vld [vmem:[#allocation8 + $0x54] sm:$0xf]
        %v2562 = vld [vmem:[#allocation8 + $0x58] sm:$0xf]
        %v2563 = vld [vmem:[#allocation8 + $0x5c] sm:$0xf]
        %v2564 = vld [vmem:[#allocation8 + $0x60] sm:$0xf]
        %v2565 = vld [vmem:[#allocation8 + $0x64] sm:$0xf]
        %v2566 = vld [vmem:[#allocation8 + $0x68] sm:$0xf]
        %v2567 = vld [vmem:[#allocation8 + $0x6c] sm:$0xf]
        %v2568 = vld [vmem:[#allocation8 + $0x70] sm:$0xf]
        %v2569 = vld [vmem:[#allocation8 + $0x74] sm:$0xf]
        %v2570 = vld [vmem:[#allocation8 + $0x78] sm:$0xf]
        %v2571 = vld [vmem:[#allocation8 + $0x7c] sm:$0xf]
        %v2572 = vld [vmem:[#allocation8 + $0x80] sm:$0xf]
        %v2573 = vld [vmem:[#allocation8 + $0x84] sm:$0xf]
        %v2574 = vld [vmem:[#allocation8 + $0x88] sm:$0xf]
        %v2575 = vld [vmem:[#allocation8 + $0x8c] sm:$0xf]
        %v2576 = vld [vmem:[#allocation8 + $0x90] sm:$0xf]
        %v2577 = vld [vmem:[#allocation8 + $0x94] sm:$0xf]
        %v2578 = vld [vmem:[#allocation8 + $0x98] sm:$0xf]
        %v2579 = vld [vmem:[#allocation8 + $0x9c] sm:$0xf]
        %v2580 = vld [vmem:[#allocation8 + $0xa0] sm:$0xf]
        %v2581 = vld [vmem:[#allocation8 + $0xa4] sm:$0xf]
        %v2582 = vld [vmem:[#allocation8 + $0xa8] sm:$0xf]
        %v2583 = vld [vmem:[#allocation8 + $0xac] sm:$0xf]
        %v2584 = vld [vmem:[#allocation8 + $0xb0] sm:$0xf]
        %v2585 = vld [vmem:[#allocation8 + $0xb4] sm:$0xf]
        %v2586 = vld [vmem:[#allocation8 + $0xb8] sm:$0xf]
        %v2587 = vld [vmem:[#allocation8 + $0xbc] sm:$0xf]
        %v2588 = vld [vmem:[#allocation8 + $0xc0] sm:$0xf]
        %v2589 = vld [vmem:[#allocation8 + $0xc4] sm:$0xf]
        %v2590 = vld [vmem:[#allocation8 + $0xc8] sm:$0xf]
        %v2591 = vld [vmem:[#allocation8 + $0xcc] sm:$0xf]
        %v2592 = vld [vmem:[#allocation8 + $0xd0] sm:$0xf]
        %v2593 = vld [vmem:[#allocation8 + $0xd4] sm:$0xf]
        %v2594 = vld [vmem:[#allocation8 + $0xd8] sm:$0xf]
        %v2595 = vld [vmem:[#allocation8 + $0xdc] sm:$0xf]
        %v2596 = vld [vmem:[#allocation8 + $0xe0] sm:$0xf]
        %v2597 = vld [vmem:[#allocation8 + $0xe4] sm:$0xf]
        %v2598 = vld [vmem:[#allocation8 + $0xe8] sm:$0xf]
        %v2599 = vld [vmem:[#allocation8 + $0xec] sm:$0xf]
        %v2600 = vld [vmem:[#allocation8 + $0xf0] sm:$0xf]
        %v2601 = vld [vmem:[#allocation8 + $0xf4] sm:$0xf]
        %v2602 = vld [vmem:[#allocation8 + $0xf8] sm:$0xf]
        %v2603 = vld [vmem:[#allocation8 + $0xfc] sm:$0xf]
        %v2604 = vld [vmem:[%s6] sm:$0x1]
        %v2606 = vlaneseq
        %v2607 = vshrl.u32 %v2606, 7
        %v2608 = vsub.s32 0, %v2607
        %v2609 = vrot.slane %v2604, %v2608
        %v2675 = vunpack.c.l.b16 %v2540
        %v2676 = vunpack.c.l.b16 %v2541
        %v2677 = vunpack.c.l.b16 %v2542
        %v2678 = vunpack.c.l.b16 %v2543
        %v2679 = vunpack.c.l.b16 %v2544
        %v2680 = vunpack.c.l.b16 %v2545
        %v2681 = vunpack.c.l.b16 %v2546
        %v2682 = vunpack.c.l.b16 %v2547
        %v2683 = vunpack.c.l.b16 %v2548
        %v2684 = vunpack.c.l.b16 %v2549
        %v2685 = vunpack.c.l.b16 %v2550
        %v2686 = vunpack.c.l.b16 %v2551
        %v2687 = vunpack.c.l.b16 %v2552
        %v2688 = vunpack.c.l.b16 %v2553
        %v2689 = vunpack.c.l.b16 %v2554
        %v2690 = vunpack.c.l.b16 %v2555
        %v2691 = vunpack.c.l.b16 %v2556
        %v2692 = vunpack.c.l.b16 %v2557
        %v2693 = vunpack.c.l.b16 %v2558
        %v2694 = vunpack.c.l.b16 %v2559
        %v2695 = vunpack.c.l.b16 %v2560
        %v2696 = vunpack.c.l.b16 %v2561
        %v2697 = vunpack.c.l.b16 %v2562
        %v2698 = vunpack.c.l.b16 %v2563
        %v2699 = vunpack.c.l.b16 %v2564
        %v2700 = vunpack.c.l.b16 %v2565
        %v2701 = vunpack.c.l.b16 %v2566
        %v2702 = vunpack.c.l.b16 %v2567
        %v2703 = vunpack.c.l.b16 %v2568
        %v2704 = vunpack.c.l.b16 %v2569
        %v2705 = vunpack.c.l.b16 %v2570
        %v2706 = vunpack.c.l.b16 %v2571
        %v2707 = vunpack.c.l.b16 %v2572
        %v2708 = vunpack.c.l.b16 %v2573
        %v2709 = vunpack.c.l.b16 %v2574
        %v2710 = vunpack.c.l.b16 %v2575
        %v2711 = vunpack.c.l.b16 %v2576
        %v2712 = vunpack.c.l.b16 %v2577
        %v2713 = vunpack.c.l.b16 %v2578
        %v2714 = vunpack.c.l.b16 %v2579
        %v2715 = vunpack.c.l.b16 %v2580
        %v2716 = vunpack.c.l.b16 %v2581
        %v2717 = vunpack.c.l.b16 %v2582
        %v2718 = vunpack.c.l.b16 %v2583
        %v2719 = vunpack.c.l.b16 %v2584
        %v2720 = vunpack.c.l.b16 %v2585
        %v2721 = vunpack.c.l.b16 %v2586
        %v2722 = vunpack.c.l.b16 %v2587
        %v2723 = vunpack.c.l.b16 %v2588
        %v2724 = vunpack.c.l.b16 %v2589
        %v2725 = vunpack.c.l.b16 %v2590
        %v2726 = vunpack.c.l.b16 %v2591
        %v2727 = vunpack.c.l.b16 %v2592
        %v2728 = vunpack.c.l.b16 %v2593
        %v2729 = vunpack.c.l.b16 %v2594
        %v2730 = vunpack.c.l.b16 %v2595
        %v2731 = vunpack.c.l.b16 %v2596
        %v2732 = vunpack.c.l.b16 %v2597
        %v2733 = vunpack.c.l.b16 %v2598
        %v2734 = vunpack.c.l.b16 %v2599
        %v2735 = vunpack.c.l.b16 %v2600
        %v2736 = vunpack.c.l.b16 %v2601
        %v2737 = vunpack.c.l.b16 %v2602
        %v2738 = vunpack.c.l.b16 %v2603
        %v2739 = vpack.c.b16 %v2676, %v2675
        %v2740 = vpack.c.b16 %v2678, %v2677
        %v2741 = vpack.c.b16 %v2680, %v2679
        %v2742 = vpack.c.b16 %v2682, %v2681
        %v2743 = vpack.c.b16 %v2684, %v2683
        %v2744 = vpack.c.b16 %v2686, %v2685
        %v2745 = vpack.c.b16 %v2688, %v2687
        %v2746 = vpack.c.b16 %v2690, %v2689
        %v2747 = vpack.c.b16 %v2692, %v2691
        %v2748 = vpack.c.b16 %v2694, %v2693
        %v2749 = vpack.c.b16 %v2696, %v2695
        %v2750 = vpack.c.b16 %v2698, %v2697
        %v2751 = vpack.c.b16 %v2700, %v2699
        %v2752 = vpack.c.b16 %v2702, %v2701
        %v2753 = vpack.c.b16 %v2704, %v2703
        %v2754 = vpack.c.b16 %v2706, %v2705
        %v2755 = vpack.c.b16 %v2708, %v2707
        %v2756 = vpack.c.b16 %v2710, %v2709
        %v2757 = vpack.c.b16 %v2712, %v2711
        %v2758 = vpack.c.b16 %v2714, %v2713
        %v2759 = vpack.c.b16 %v2716, %v2715
        %v2760 = vpack.c.b16 %v2718, %v2717
        %v2761 = vpack.c.b16 %v2720, %v2719
        %v2762 = vpack.c.b16 %v2722, %v2721
        %v2763 = vpack.c.b16 %v2724, %v2723
        %v2764 = vpack.c.b16 %v2726, %v2725
        %v2765 = vpack.c.b16 %v2728, %v2727
        %v2766 = vpack.c.b16 %v2730, %v2729
        %v2767 = vpack.c.b16 %v2732, %v2731
        %v2768 = vpack.c.b16 %v2734, %v2733
        %v2769 = vpack.c.b16 %v2736, %v2735
        %v2770 = vpack.c.b16 %v2738, %v2737
        %2803 = vmatprep.subr.bf16.mxu0 0
        %2804 = vmatpush1.bf16.msra.mxu0 %v2739
        %2805 = vmatprep.subr.bf16.mxu0 0
        %2806 = vmatpush1.bf16.msra.mxu0 %v2740
        %2807 = vmatprep.subr.bf16.mxu0 0
        %2808 = vmatpush1.bf16.msra.mxu0 %v2741
        %2809 = vmatprep.subr.bf16.mxu0 0
        %2810 = vmatpush1.bf16.msra.mxu0 %v2742
        %2811 = vmatprep.subr.bf16.mxu0 0
        %2812 = vmatpush1.bf16.msra.mxu0 %v2743
        %2813 = vmatprep.subr.bf16.mxu0 0
        %2814 = vmatpush1.bf16.msra.mxu0 %v2744
        %2815 = vmatprep.subr.bf16.mxu0 0
        %2816 = vmatpush1.bf16.msra.mxu0 %v2745
        %2817 = vmatprep.subr.bf16.mxu0 0
        %2818 = vmatpush1.bf16.msra.mxu0 %v2746
        %2819 = vmatprep.subr.bf16.mxu0 0
        %2820 = vmatpush1.bf16.msra.mxu0 %v2747
        %2821 = vmatprep.subr.bf16.mxu0 0
        %2822 = vmatpush1.bf16.msra.mxu0 %v2748
        %2823 = vmatprep.subr.bf16.mxu0 0
        %2824 = vmatpush1.bf16.msra.mxu0 %v2749
        %2825 = vmatprep.subr.bf16.mxu0 0
        %2826 = vmatpush1.bf16.msra.mxu0 %v2750
        %2827 = vmatprep.subr.bf16.mxu0 0
        %2828 = vmatpush1.bf16.msra.mxu0 %v2751
        %2829 = vmatprep.subr.bf16.mxu0 0
        %2830 = vmatpush1.bf16.msra.mxu0 %v2752
        %2831 = vmatprep.subr.bf16.mxu0 0
        %2832 = vmatpush1.bf16.msra.mxu0 %v2753
        %2833 = vmatprep.subr.bf16.mxu0 0
        %2834 = vmatpush1.bf16.msra.mxu0 %v2754
        %2835 = vmatprep.mubr.bf16.mxu0 %v2477
        %2836 = vmatmul.mubr.bf16.gmra.mrb[0].mxu0 %v2476
        %v2837 = vpop.f32.mrb[0].mxu0
        %v2838 = vadd.f32 %v2609, %v2837
        %v2839 = vpop.f32.mrb[0].mxu0
        %v2840 = vpop.f32.mrb[0].mxu0
        %v2841 = vadd.f32 %v2609, %v2840
        %v2842 = vpop.f32.mrb[0].mxu0
        %2843 = vmatprep.mubr.bf16.mxu0 %v2481
        %2844 = vmatmul.mubr.bf16.gmra.mrb[0].mxu0 %v2480
        %v2845 = vpop.f32.mrb[0].mxu0
        %v2846 = vadd.f32 %v2609, %v2845
        %v2847 = vpop.f32.mrb[0].mxu0
        %v2848 = vpop.f32.mrb[0].mxu0
        %v2849 = vadd.f32 %v2609, %v2848
        %v2850 = vpop.f32.mrb[0].mxu0
        %2851 = vmatprep.mubr.bf16.mxu0 %v2485
        %2852 = vmatmul.mubr.bf16.gmra.mrb[0].mxu0 %v2484
        %v2853 = vpop.f32.mrb[0].mxu0
        %v2854 = vadd.f32 %v2609, %v2853
        %v2855 = vpop.f32.mrb[0].mxu0
        %v2856 = vpop.f32.mrb[0].mxu0
        %v2857 = vadd.f32 %v2609, %v2856
        %v2858 = vpop.f32.mrb[0].mxu0
        %2859 = vmatprep.mubr.bf16.mxu0 %v2489
        %2860 = vmatmul.mubr.bf16.gmra.mrb[0].mxu0 %v2488
        %v2861 = vpop.f32.mrb[0].mxu0
        %v2862 = vadd.f32 %v2609, %v2861
        %v2863 = vpop.f32.mrb[0].mxu0
        %v2864 = vpop.f32.mrb[0].mxu0
        %v2865 = vadd.f32 %v2609, %v2864
        %v2866 = vpop.f32.mrb[0].mxu0
        %2867 = vmatprep.mubr.bf16.mxu0 %v2493
        %2868 = vmatmul.mubr.bf16.gmra.mrb[0].mxu0 %v2492
        %v2869 = vpop.f32.mrb[0].mxu0
        %v2870 = vadd.f32 %v2609, %v2869
        %v2871 = vpop.f32.mrb[0].mxu0
        %v2872 = vpop.f32.mrb[0].mxu0
        %v2873 = vadd.f32 %v2609, %v2872
        %v2874 = vpop.f32.mrb[0].mxu0
        %2875 = vmatprep.mubr.bf16.mxu0 %v2497
        %2876 = vmatmul.mubr.bf16.gmra.mrb[0].mxu0 %v2496
        %v2877 = vpop.f32.mrb[0].mxu0
        %v2878 = vadd.f32 %v2609, %v2877
        %v2879 = vpop.f32.mrb[0].mxu0
        %v2880 = vpop.f32.mrb[0].mxu0
        %v2881 = vadd.f32 %v2609, %v2880
        %v2882 = vpop.f32.mrb[0].mxu0
        %2883 = vmatprep.mubr.bf16.mxu0 %v2501
        %2884 = vmatmul.mubr.bf16.gmra.mrb[0].mxu0 %v2500
        %v2885 = vpop.f32.mrb[0].mxu0
        %v2886 = vadd.f32 %v2609, %v2885
        %v2887 = vpop.f32.mrb[0].mxu0
        %v2888 = vpop.f32.mrb[0].mxu0
        %v2889 = vadd.f32 %v2609, %v2888
        %v2890 = vpop.f32.mrb[0].mxu0
        %2891 = vmatprep.mubr.bf16.mxu0 %v2505
        %2892 = vmatmul.mubr.bf16.gmra.mrb[0].mxu0 %v2504
        %v2893 = vpop.f32.mrb[0].mxu0
        %v2894 = vadd.f32 %v2609, %v2893
        %v2895 = vpop.f32.mrb[0].mxu0
        %v2896 = vpop.f32.mrb[0].mxu0
        %v2897 = vadd.f32 %v2609, %v2896
        %v2898 = vpop.f32.mrb[0].mxu0
        %2899 = vmatprep.mubr.bf16.mxu0 %v2509
        %2900 = vmatmul.mubr.bf16.gmra.mrb[0].mxu0 %v2508
        %v2901 = vpop.f32.mrb[0].mxu0
        %v2902 = vadd.f32 %v2609, %v2901
        %v2903 = vpop.f32.mrb[0].mxu0
        %v2904 = vpop.f32.mrb[0].mxu0
        %v2905 = vadd.f32 %v2609, %v2904
        %v2906 = vpop.f32.mrb[0].mxu0
        %2907 = vmatprep.mubr.bf16.mxu0 %v2513
        %2908 = vmatmul.mubr.bf16.gmra.mrb[0].mxu0 %v2512
        %v2909 = vpop.f32.mrb[0].mxu0
        %v2910 = vadd.f32 %v2609, %v2909
        %v2911 = vpop.f32.mrb[0].mxu0
        %v2912 = vpop.f32.mrb[0].mxu0
        %v2913 = vadd.f32 %v2609, %v2912
        %v2914 = vpop.f32.mrb[0].mxu0
        %2915 = vmatprep.mubr.bf16.mxu0 %v2517
        %2916 = vmatmul.mubr.bf16.gmra.mrb[0].mxu0 %v2516
        %v2917 = vpop.f32.mrb[0].mxu0
        %v2918 = vadd.f32 %v2609, %v2917
        %v2919 = vpop.f32.mrb[0].mxu0
        %v2920 = vpop.f32.mrb[0].mxu0
        %v2921 = vadd.f32 %v2609, %v2920
        %v2922 = vpop.f32.mrb[0].mxu0
        %2923 = vmatprep.mubr.bf16.mxu0 %v2521
        %2924 = vmatmul.mubr.bf16.gmra.mrb[0].mxu0 %v2520
        %v2925 = vpop.f32.mrb[0].mxu0
        %v2926 = vadd.f32 %v2609, %v2925
        %v2927 = vpop.f32.mrb[0].mxu0
        %v2928 = vpop.f32.mrb[0].mxu0
        %v2929 = vadd.f32 %v2609, %v2928
        %v2930 = vpop.f32.mrb[0].mxu0
        %2931 = vmatprep.mubr.bf16.mxu0 %v2525
        %2932 = vmatmul.mubr.bf16.gmra.mrb[0].mxu0 %v2524
        %v2933 = vpop.f32.mrb[0].mxu0
        %v2934 = vadd.f32 %v2609, %v2933
        %v2935 = vpop.f32.mrb[0].mxu0
        %v2936 = vpop.f32.mrb[0].mxu0
        %v2937 = vadd.f32 %v2609, %v2936
        %v2938 = vpop.f32.mrb[0].mxu0
        %2939 = vmatprep.mubr.bf16.mxu0 %v2529
        %2940 = vmatmul.mubr.bf16.gmra.mrb[0].mxu0 %v2528
        %v2941 = vpop.f32.mrb[0].mxu0
        %v2942 = vadd.f32 %v2609, %v2941
        %v2943 = vpop.f32.mrb[0].mxu0
        %v2944 = vpop.f32.mrb[0].mxu0
        %v2945 = vadd.f32 %v2609, %v2944
        %v2946 = vpop.f32.mrb[0].mxu0
        %2947 = vmatprep.mubr.bf16.mxu0 %v2533
        %2948 = vmatmul.mubr.bf16.gmra.mrb[0].mxu0 %v2532
        %v2949 = vpop.f32.mrb[0].mxu0
        %v2950 = vadd.f32 %v2609, %v2949
        %v2951 = vpop.f32.mrb[0].mxu0
        %v2952 = vpop.f32.mrb[0].mxu0
        %v2953 = vadd.f32 %v2609, %v2952
        %v2954 = vpop.f32.mrb[0].mxu0
        %2955 = vmatprep.mubr.bf16.mxu0 %v2537
        %2956 = vmatmul.mubr.bf16.gmra.mrb[0].mxu0 %v2536
        %v2957 = vpop.f32.mrb[0].mxu0
        %v2958 = vadd.f32 %v2609, %v2957
        %v2959 = vpop.f32.mrb[0].mxu0
        %v2960 = vpop.f32.mrb[0].mxu0
        %v2961 = vadd.f32 %v2609, %v2960
        %v2962 = vpop.f32.mrb[0].mxu0
        %2963 = vdwg.mxu0
        %2964 = vmatprep.subr.bf16.mxu0 0
        %2965 = vmatpush1.bf16.msra.mxu0 %v2755
        %2966 = vmatprep.subr.bf16.mxu0 0
        %2967 = vmatpush1.bf16.msra.mxu0 %v2756
        %2968 = vmatprep.subr.bf16.mxu0 0
        %2969 = vmatpush1.bf16.msra.mxu0 %v2757
        %2970 = vmatprep.subr.bf16.mxu0 0
        %2971 = vmatpush1.bf16.msra.mxu0 %v2758
        %2972 = vmatprep.subr.bf16.mxu0 0
        %2973 = vmatpush1.bf16.msra.mxu0 %v2759
        %2974 = vmatprep.subr.bf16.mxu0 0
        %2975 = vmatpush1.bf16.msra.mxu0 %v2760
        %2976 = vmatprep.subr.bf16.mxu0 0
        %2977 = vmatpush1.bf16.msra.mxu0 %v2761
        %2978 = vmatprep.subr.bf16.mxu0 0
        %2979 = vmatpush1.bf16.msra.mxu0 %v2762
        %2980 = vmatprep.subr.bf16.mxu0 0
        %2981 = vmatpush1.bf16.msra.mxu0 %v2763
        %2982 = vmatprep.subr.bf16.mxu0 0
        %2983 = vmatpush1.bf16.msra.mxu0 %v2764
        %2984 = vmatprep.subr.bf16.mxu0 0
        %2985 = vmatpush1.bf16.msra.mxu0 %v2765
        %2986 = vmatprep.subr.bf16.mxu0 0
        %2987 = vmatpush1.bf16.msra.mxu0 %v2766
        %2988 = vmatprep.subr.bf16.mxu0 0
        %2989 = vmatpush1.bf16.msra.mxu0 %v2767
        %2990 = vmatprep.subr.bf16.mxu0 0
        %2991 = vmatpush1.bf16.msra.mxu0 %v2768
        %2992 = vmatprep.subr.bf16.mxu0 0
        %2993 = vmatpush1.bf16.msra.mxu0 %v2769
        %2994 = vmatprep.subr.bf16.mxu0 0
        %2995 = vmatpush1.bf16.msra.mxu0 %v2770
        %2996 = vmatprep.mubr.bf16.mxu0 %v2479
        %2997 = vmatmul.mubr.bf16.gmra.mrb[0].mxu0 %v2478
        %v2998 = vpop.f32.mrb[0].mxu0
        %v2999 = vadd.f32 %v2838, %v2998
        %v3000 = vpop.f32.mrb[0].mxu0
        %v3001 = vpop.f32.mrb[0].mxu0
        %v3002 = vadd.f32 %v2841, %v3001
        %v3003 = vpop.f32.mrb[0].mxu0
        %3004 = vmatprep.mubr.bf16.mxu0 %v2483
        %3005 = vmatmul.mubr.bf16.gmra.mrb[0].mxu0 %v2482
        %v3006 = vpop.f32.mrb[0].mxu0
        %v3007 = vadd.f32 %v2846, %v3006
        %v3008 = vpop.f32.mrb[0].mxu0
        %v3009 = vpop.f32.mrb[0].mxu0
        %v3010 = vadd.f32 %v2849, %v3009
        %v3011 = vpop.f32.mrb[0].mxu0
        %3012 = vmatprep.mubr.bf16.mxu0 %v2487
        %3013 = vmatmul.mubr.bf16.gmra.mrb[0].mxu0 %v2486
        %v3014 = vpop.f32.mrb[0].mxu0
        %v3015 = vadd.f32 %v2854, %v3014
        %v3016 = vpop.f32.mrb[0].mxu0
        %v3017 = vpop.f32.mrb[0].mxu0
        %v3018 = vadd.f32 %v2857, %v3017
        %v3019 = vpop.f32.mrb[0].mxu0
        %3020 = vmatprep.mubr.bf16.mxu0 %v2491
        %3021 = vmatmul.mubr.bf16.gmra.mrb[0].mxu0 %v2490
        %v3022 = vpop.f32.mrb[0].mxu0
        %v3023 = vadd.f32 %v2862, %v3022
        %v3024 = vpop.f32.mrb[0].mxu0
        %v3025 = vpop.f32.mrb[0].mxu0
        %v3026 = vadd.f32 %v2865, %v3025
        %v3027 = vpop.f32.mrb[0].mxu0
        %3028 = vmatprep.mubr.bf16.mxu0 %v2495
        %3029 = vmatmul.mubr.bf16.gmra.mrb[0].mxu0 %v2494
        %v3030 = vpop.f32.mrb[0].mxu0
        %v3031 = vadd.f32 %v2870, %v3030
        %v3032 = vpop.f32.mrb[0].mxu0
        %v3033 = vpop.f32.mrb[0].mxu0
        %v3034 = vadd.f32 %v2873, %v3033
        %v3035 = vpop.f32.mrb[0].mxu0
        %3036 = vmatprep.mubr.bf16.mxu0 %v2499
        %3037 = vmatmul.mubr.bf16.gmra.mrb[0].mxu0 %v2498
        %v3038 = vpop.f32.mrb[0].mxu0
        %v3039 = vadd.f32 %v2878, %v3038
        %v3040 = vpop.f32.mrb[0].mxu0
        %v3041 = vpop.f32.mrb[0].mxu0
        %v3042 = vadd.f32 %v2881, %v3041
        %v3043 = vpop.f32.mrb[0].mxu0
        %3044 = vmatprep.mubr.bf16.mxu0 %v2503
        %3045 = vmatmul.mubr.bf16.gmra.mrb[0].mxu0 %v2502
        %v3046 = vpop.f32.mrb[0].mxu0
        %v3047 = vadd.f32 %v2886, %v3046
        %v3048 = vpop.f32.mrb[0].mxu0
        %v3049 = vpop.f32.mrb[0].mxu0
        %v3050 = vadd.f32 %v2889, %v3049
        %v3051 = vpop.f32.mrb[0].mxu0
        %3052 = vmatprep.mubr.bf16.mxu0 %v2507
        %3053 = vmatmul.mubr.bf16.gmra.mrb[0].mxu0 %v2506
        %v3054 = vpop.f32.mrb[0].mxu0
        %v3055 = vadd.f32 %v2894, %v3054
        %v3056 = vpop.f32.mrb[0].mxu0
        %v3057 = vpop.f32.mrb[0].mxu0
        %v3058 = vadd.f32 %v2897, %v3057
        %v3059 = vpop.f32.mrb[0].mxu0
        %3060 = vmatprep.mubr.bf16.mxu0 %v2511
        %3061 = vmatmul.mubr.bf16.gmra.mrb[0].mxu0 %v2510
        %v3062 = vpop.f32.mrb[0].mxu0
        %v3063 = vadd.f32 %v2902, %v3062
        %v3064 = vpop.f32.mrb[0].mxu0
        %v3065 = vpop.f32.mrb[0].mxu0
        %v3066 = vadd.f32 %v2905, %v3065
        %v3067 = vpop.f32.mrb[0].mxu0
        %3068 = vmatprep.mubr.bf16.mxu0 %v2515
        %3069 = vmatmul.mubr.bf16.gmra.mrb[0].mxu0 %v2514
        %v3070 = vpop.f32.mrb[0].mxu0
        %v3071 = vadd.f32 %v2910, %v3070
        %v3072 = vpop.f32.mrb[0].mxu0
        %v3073 = vpop.f32.mrb[0].mxu0
        %v3074 = vadd.f32 %v2913, %v3073
        %v3075 = vpop.f32.mrb[0].mxu0
        %3076 = vmatprep.mubr.bf16.mxu0 %v2519
        %3077 = vmatmul.mubr.bf16.gmra.mrb[0].mxu0 %v2518
        %v3078 = vpop.f32.mrb[0].mxu0
        %v3079 = vadd.f32 %v2918, %v3078
        %v3080 = vpop.f32.mrb[0].mxu0
        %v3081 = vpop.f32.mrb[0].mxu0
        %v3082 = vadd.f32 %v2921, %v3081
        %v3083 = vpop.f32.mrb[0].mxu0
        %3084 = vmatprep.mubr.bf16.mxu0 %v2523
        %3085 = vmatmul.mubr.bf16.gmra.mrb[0].mxu0 %v2522
        %v3086 = vpop.f32.mrb[0].mxu0
        %v3087 = vadd.f32 %v2926, %v3086
        %v3088 = vpop.f32.mrb[0].mxu0
        %v3089 = vpop.f32.mrb[0].mxu0
        %v3090 = vadd.f32 %v2929, %v3089
        %v3091 = vpop.f32.mrb[0].mxu0
        %3092 = vmatprep.mubr.bf16.mxu0 %v2527
        %3093 = vmatmul.mubr.bf16.gmra.mrb[0].mxu0 %v2526
        %v3094 = vpop.f32.mrb[0].mxu0
        %v3095 = vadd.f32 %v2934, %v3094
        %v3096 = vpop.f32.mrb[0].mxu0
        %v3097 = vpop.f32.mrb[0].mxu0
        %v3098 = vadd.f32 %v2937, %v3097
        %v3099 = vpop.f32.mrb[0].mxu0
        %3100 = vmatprep.mubr.bf16.mxu0 %v2531
        %3101 = vmatmul.mubr.bf16.gmra.mrb[0].mxu0 %v2530
        %v3102 = vpop.f32.mrb[0].mxu0
        %v3103 = vadd.f32 %v2942, %v3102
        %v3104 = vpop.f32.mrb[0].mxu0
        %v3105 = vpop.f32.mrb[0].mxu0
        %v3106 = vadd.f32 %v2945, %v3105
        %v3107 = vpop.f32.mrb[0].mxu0
        %3108 = vmatprep.mubr.bf16.mxu0 %v2535
        %3109 = vmatmul.mubr.bf16.gmra.mrb[0].mxu0 %v2534
        %v3110 = vpop.f32.mrb[0].mxu0
        %v3111 = vadd.f32 %v2950, %v3110
        %v3112 = vpop.f32.mrb[0].mxu0
        %v3113 = vpop.f32.mrb[0].mxu0
        %v3114 = vadd.f32 %v2953, %v3113
        %v3115 = vpop.f32.mrb[0].mxu0
        %3116 = vmatprep.mubr.bf16.mxu0 %v2539
        %3117 = vmatmul.mubr.bf16.gmra.mrb[0].mxu0 %v2538
        %v3118 = vpop.f32.mrb[0].mxu0
        %v3119 = vadd.f32 %v2958, %v3118
        %v3120 = vpop.f32.mrb[0].mxu0
        %v3121 = vpop.f32.mrb[0].mxu0
        %v3122 = vadd.f32 %v2961, %v3121
        %v3123 = vpop.f32.mrb[0].mxu0
        %3124 = vdwg.mxu0
        %3125 = vst [vmem:[%s339] sm:$0xff] %v2999
        %3126 = vst [vmem:[%s339 + $0x8] sm:$0xff] %v3002
        %3127 = vst [vmem:[%s339 + $0x10] sm:$0xff] %v3007
        %3128 = vst [vmem:[%s339 + $0x18] sm:$0xff] %v3010
        %3129 = vst [vmem:[%s339 + $0x20] sm:$0xff] %v3015
        %3130 = vst [vmem:[%s339 + $0x28] sm:$0xff] %v3018
        %3131 = vst [vmem:[%s339 + $0x30] sm:$0xff] %v3023
        %3132 = vst [vmem:[%s339 + $0x38] sm:$0xff] %v3026
        %3133 = vst [vmem:[%s339 + $0x40] sm:$0xff] %v3031
        %3134 = vst [vmem:[%s339 + $0x48] sm:$0xff] %v3034
        %3135 = vst [vmem:[%s339 + $0x50] sm:$0xff] %v3039
        %3136 = vst [vmem:[%s339 + $0x58] sm:$0xff] %v3042
        %3137 = vst [vmem:[%s339 + $0x60] sm:$0xff] %v3047
        %3138 = vst [vmem:[%s339 + $0x68] sm:$0xff] %v3050
        %3139 = vst [vmem:[%s339 + $0x70] sm:$0xff] %v3055
        %3140 = vst [vmem:[%s339 + $0x78] sm:$0xff] %v3058
        %3141 = vst [vmem:[%s339 + $0x80] sm:$0xff] %v3063
        %3142 = vst [vmem:[%s339 + $0x88] sm:$0xff] %v3066
        %3143 = vst [vmem:[%s339 + $0x90] sm:$0xff] %v3071
        %3144 = vst [vmem:[%s339 + $0x98] sm:$0xff] %v3074
        %3145 = vst [vmem:[%s339 + $0xa0] sm:$0xff] %v3079
        %3146 = vst [vmem:[%s339 + $0xa8] sm:$0xff] %v3082
        %3147 = vst [vmem:[%s339 + $0xb0] sm:$0xff] %v3087
        %3148 = vst [vmem:[%s339 + $0xb8] sm:$0xff] %v3090
        %3149 = vst [vmem:[%s339 + $0xc0] sm:$0xff] %v3095
        %3150 = vst [vmem:[%s339 + $0xc8] sm:$0xff] %v3098
        %3151 = vst [vmem:[%s339 + $0xd0] sm:$0xff] %v3103
        %3152 = vst [vmem:[%s339 + $0xd8] sm:$0xff] %v3106
        %3153 = vst [vmem:[%s339 + $0xe0] sm:$0xff] %v3111
        %3154 = vst [vmem:[%s339 + $0xe8] sm:$0xff] %v3114
        %3155 = vst [vmem:[%s339 + $0xf0] sm:$0xff] %v3119
        %3156 = vst [vmem:[%s339 + $0xf8] sm:$0xff] %v3122
        %s3157 = sand.u32 %s186, 1
        %s3158 = scalar_lea.sflag [#allocation4], %s3157
        %s3159 = sand.u32 %s186, 1
        %s3160 = smul.addr %s3159, 256
        %s3161 = scalar_lea.vmem [#allocation10], %s3160
        // Predicated region
        $region65: #{tpu_custom_call.1} parent=47 // pred_check
          %p3162 = pneg %p196
        $region66: #{tpu_custom_call.1} parent=47 // pred_check_branch
          %3164 = sbr.rel (%p3162) target = $region68
        $region67: #{tpu_custom_call.1} parent=47 // pred_region
          %s3165 = smul.u32 32, %s26
          %s3167 = ssub.s32 4096, 4096
          %3168 = vsyncadd %s3158, %s3167
          %s3169 = smul.addr %s3165, 128
          %s3170 = scalar_lea.hbm %s7, %s3169
          %s3171 = sshll.u32 %s3161, 4
          %s3172 = int_to_ptr.vmem [resolvable:$true] %s3171
          %3177 = dma.vmem_to_hbm [thread:$0]  %s3172, 4096, %s3170, %s3158, 128, 128, 8
        $region68: #{tpu_custom_call.1} parent=47 // pred_fallthru
          _
      $region48: #{tpu_custom_call.1} parent=5 // pred_fallthru
        _
      %p3178 = scmp.le.s32.totalorder 2, %s21
      // Predicated region
      $region69: #{tpu_custom_call.1} parent=5 // pred_check
        %p3179 = pneg %p3178
      $region70: #{tpu_custom_call.1} parent=5 // pred_check_branch
        %3181 = sbr.rel (%p3179) target = $region72
      $region71: #{tpu_custom_call.1} parent=5 // pred_region
        %s3182 = ssub.s32 %s21, 2
        // Predicated region
        $region73: #{tpu_custom_call.1} parent=71 // pred_check
          %p3183 = pneg %p202
        $region74: #{tpu_custom_call.1} parent=71 // pred_check_branch
          %3185 = sbr.rel (%p3183) target = $region76
        $region75: #{tpu_custom_call.1} parent=71 // pred_region
          %s3186 = sand.u32 %s187, 1
          %s3187 = scalar_lea.sflag [#allocation4], %s3186
          %s3188 = sand.u32 %s187, 1
          %s3189 = smul.addr %s3188, 256
          %s3190 = scalar_lea.vmem [#allocation10], %s3189
          %3191 = dma.done %s3187, 4096
        $region76: #{tpu_custom_call.1} parent=71 // pred_fallthru
          _
      $region72: #{tpu_custom_call.1} parent=5 // pred_fallthru
        _
    $region6: #{tpu_custom_call.1} parent=1 // loop_footer
      %s25 = sadd.s32 1, %s21
    $region7: #{tpu_custom_call.1} parent=1 // loop_footer_branch
      %20 = sbr.rel target = $region3
    $region8: #{tpu_custom_call.1} parent=1 // loop_exit
      _
    %3192 = vsyncpa [#allocation3], 1
    %s3193 = scalar_lea.sflag [#allocation3], 1
    %3194 = vsyncpa %s3193, 1
    %3195 = vsyncpa [#allocation6], 1
    %3196 = vsyncpa [#allocation9], 1
    %3197 = vsyncpa [#allocation4], 1
    %s3198 = scalar_lea.sflag [#allocation4], 1
    %3199 = vsyncpa %s3198, 1

</llo_original>
